<compile_context>
chip_gen: v7x
topology: tpu7x:2x2x1
jax: 0.10.0
libtpu: 0.0.40
codegen_flags: <defaults>
</compile_context>

<pallas_src>
import functools

import jax
import jax.numpy as jnp
from jax.experimental import pallas as pl
from jax.experimental.pallas import tpu as pltpu


def decoder_layer_kernel(xf_ref, cf_ref,
                         wq_s_ref, bq_s_ref, wkv_s_ref, bkv_s_ref, wo_s_ref, bo_s_ref,
                         wq_c_ref, bq_c_ref, wkv_c_ref, bkv_c_ref, wo_c_ref, bo_c_ref,
                         g1_ref, be1_ref, g2_ref, be2_ref, g3_ref, be3_ref,
                         w1_ref, bb1_ref, w2_ref, bb2_ref,
                         o_ref,
                         ks_ref, vs_ref, kc_ref, vc_ref,
                         *, num_heads, causal_self, activation, eps,
                         ffn_chunk, approx_recip):
    """One (batch, query-tile) grid step: the whole decoder layer for tq tokens."""
    tq, D = o_ref.shape                      # output tile (batch dim squeezed)
    N = xf_ref.shape[0]                      # target sequence length
    Hd = D // num_heads
    scale = Hd ** -0.5
    cdt = ks_ref.dtype                       # MXU operand dtype (input or bf16 knob)
    q_idx = pl.program_id(1)
    q_start = pl.multiple_of(q_idx * tq, tq)

    # ---- K/V caches: projected ONCE per batch element (first query tile). ----
    @pl.when(q_idx == 0)
    def _():
        def project_kv(src_ref, wkv_ref, bkv_ref, k_ref, v_ref):
            kv = (jnp.dot(src_ref[...].astype(cdt), wkv_ref[...],
                          preferred_element_type=jnp.float32) + bkv_ref[0]).astype(cdt)
            for h in range(num_heads):       # once per batch: head-major layout
                k_ref[h] = kv[:, h * Hd:(h + 1) * Hd]
                v_ref[h] = kv[:, D + h * Hd:D + (h + 1) * Hd]
        project_kv(xf_ref, wkv_s_ref, bkv_s_ref, ks_ref, vs_ref)
        project_kv(cf_ref, wkv_c_ref, bkv_c_ref, kc_ref, vc_ref)

    # Query tile sliced from the resident full-x block (no separate DMA stream).
    xq_nat = xf_ref[pl.ds(q_start, tq), :]
    xq = xq_nat.astype(cdt)

    def attention(q_in, k_ref, v_ref, wq_ref, bq_ref, wo_ref, bo_ref, causal):
        """Head-batched multi-head attention for the query tile -> (tq, D) f32."""
        Nk = k_ref.shape[1]
        q = jnp.dot(q_in, wq_ref[...], preferred_element_type=jnp.float32) + bq_ref[0]
        q = (q * scale).astype(cdt)
        # (H, tq, Hd) operand once; batched matmuls + one softmax over all heads.
        qh = jnp.stack([q[:, h * Hd:(h + 1) * Hd] for h in range(num_heads)], axis=0)
        kh = k_ref[...]                                         # (H, Nk, Hd)
        vh = v_ref[...]
        s = jnp.einsum('hqd,hkd->hqk', qh, kh,
                       preferred_element_type=jnp.float32)      # (H, tq, Nk)
        if causal:
            qpos = jax.lax.broadcasted_iota(jnp.int32, (tq, Nk), 0) + q_start
            kpos = jax.lax.broadcasted_iota(jnp.int32, (tq, Nk), 1)
            s = jnp.where((kpos <= qpos)[None, :, :], s, jnp.float32(-1e30))
        m = jnp.max(s, axis=-1, keepdims=True)
        e = jnp.exp(s - m)
        p = e * pl.reciprocal(jnp.sum(e, axis=-1, keepdims=True), approx=approx_recip)
        o = jnp.einsum('hqk,hkd->hqd', p.astype(cdt), vh,
                       preferred_element_type=jnp.float32)      # (H, tq, Hd)
        # Single lane-dense (tq, D) block -> one full-width output projection.
        o2 = jnp.concatenate([o[h] for h in range(num_heads)], axis=-1)
        return jnp.dot(o2.astype(cdt), wo_ref[...],
                       preferred_element_type=jnp.float32) + bo_ref[0]

    def layernorm(h, g_ref, b_ref):
        mu = jnp.mean(h, axis=-1, keepdims=True)
        c = h - mu
        var = jnp.mean(c * c, axis=-1, keepdims=True)
        return c * jax.lax.rsqrt(var + eps) * g_ref[0] + b_ref[0]

    def act(z):
        if activation == "relu":
            return jnp.maximum(z, 0.0)
        # TODO(synk): exact-erf GELU parity with torch.nn.functional.gelu.
        return jax.nn.gelu(z, approximate=True)

    # x = norm1(x + self_attention(x, x, x))
    sa = attention(xq, ks_ref, vs_ref, wq_s_ref, bq_s_ref, wo_s_ref, bo_s_ref,
                   causal_self)
    h1 = layernorm(xq_nat.astype(jnp.float32) + sa, g1_ref, be1_ref)

    # x = norm2(x + cross_attention(x, cross, cross))
    ca = attention(h1.astype(cdt), kc_ref, vc_ref, wq_c_ref, bq_c_ref,
                   wo_c_ref, bo_c_ref, False)
    h2 = layernorm(h1 + ca, g2_ref, be2_ref)

    # y = conv2(act(conv1(x)))  (1x1 convs == linears over the feature dim),
    # chunked over d_ff so the (tq, d_ff) intermediate never fully materializes.
    h2c = h2.astype(cdt)
    d_ff = w1_ref.shape[1]
    ffn = jnp.zeros((tq, D), jnp.float32) + bb2_ref[0]
    for c0 in range(0, d_ff, ffn_chunk):
        z = (jnp.dot(h2c, w1_ref[:, c0:c0 + ffn_chunk],
                     preferred_element_type=jnp.float32)
             + bb1_ref[0, c0:c0 + ffn_chunk])
        ffn = ffn + jnp.dot(act(z).astype(cdt), w2_ref[c0:c0 + ffn_chunk, :],
                            preferred_element_type=jnp.float32)

    # return norm3(x + y)
    out = layernorm(h2 + ffn, g3_ref, be3_ref)
    o_ref[...] = out.astype(o_ref.dtype)


def decoder_layer_forward(x, cross, params, *, num_heads, causal_self=True,
                          activation="relu", eps=1e-5, approx_recip=False,
                          mxu_dtype=None):
    """x: (B, L, d_model), cross: (B, S, d_model) -> (B, L, d_model)."""
    (wq_s, bq_s, wkv_s, bkv_s, wo_s, bo_s,
     wq_c, bq_c, wkv_c, bkv_c, wo_c, bo_c,
     g1, be1, g2, be2, g3, be3,
     w1, bb1, w2, bb2) = params
    B, N, D = x.shape
    S = cross.shape[1]
    d_ff = w1.shape[1]
    assert D % num_heads == 0
    Hd = D // num_heads
    cdt = jnp.dtype(mxu_dtype) if mxu_dtype is not None else x.dtype

    kind = jax.devices()[0].device_kind.lower()

    # Query-tile size: 256 on v6e/v7x (128 on v5e) when it divides N; otherwise
    # one tile covers the sequence (small-shape path used by the driver below).
    max_tq = 128 if "v5" in kind else 256
    if N % max_tq == 0 and N > max_tq:
        tq = max_tq
    elif N % 128 == 0 and N > 128:
        tq = 128
    else:
        tq = N   # TODO(synk): cdiv + masked ragged last tile for large, non-128-multiple N
    n_qt = N // tq

    ffn_chunk = 512 if (d_ff > 1024 and d_ff % 512 == 0) else d_ff

    def row(v):                               # 1-D params as (1, dim) tiles
        return v.reshape(1, -1)

    def wspec(shape):                         # constant-index, single-buffered
        return pl.BlockSpec(shape, lambda b, q: (0,) * len(shape),
                            pipeline_mode=pl.Buffered(1))

    def seq_spec(n):                          # full sequence block, per-batch index
        return pl.BlockSpec((None, n, D), lambda b, q: (b, 0, 0),
                            pipeline_mode=pl.Buffered(1))

    kernel = functools.partial(decoder_layer_kernel, num_heads=num_heads,
                               causal_self=causal_self, activation=activation,
                               eps=eps, ffn_chunk=ffn_chunk,
                               approx_recip=approx_recip)

    # --- VMEM budget (weights + seq blocks single-buffered, KV caches, temps). ---
    in_bytes = x.dtype.itemsize
    c_bytes = jnp.dtype(cdt).itemsize
    param_bytes = sum(int(p.size) * p.dtype.itemsize for p in params)
    hd_pad = ((Hd + 127) // 128) * 128
    kv_cache_bytes = 2 * num_heads * (N + S) * hd_pad * c_bytes
    live = (param_bytes
            + (N + S) * D * in_bytes
            + 2 * tq * D * in_bytes
            + kv_cache_bytes
            + 4 * (3 * num_heads * tq * max(N, S)
                   + 2 * tq * max(ffn_chunk, D)
                   + 6 * tq * D))
    vmem_cap = (56 << 20) if "v7" in kind else (100 << 20)
    vmem_limit = int(min(vmem_cap, max(32 << 20, int(1.5 * live))))

    # --- Advisory cost estimate (KV projections counted once per batch). ---
    flops = 2 * B * (
        N * D * D + N * D * 2 * D + 2 * N * N * D + N * D * D        # self-attn
        + N * D * D + S * D * 2 * D + 2 * N * S * D + N * D * D      # cross-attn
        + N * D * d_ff + N * d_ff * D)                                # FFN
    transcendentals = B * num_heads * N * (N + S)
    bytes_accessed = B * (2 * N * D + S * D) * in_bytes + param_bytes

    return pl.pallas_call(
        kernel,
        out_shape=jax.ShapeDtypeStruct((B, N, D), x.dtype),
        grid=(B, n_qt),
        in_specs=[
            seq_spec(N),                                   # x (queries + self K/V)
            seq_spec(S),                                   # cross (cross K/V)
            wspec((D, D)), wspec((1, D)),                  # self-attn Wq, bq
            wspec((D, 2 * D)), wspec((1, 2 * D)),          # self-attn Wkv (fused), bkv
            wspec((D, D)), wspec((1, D)),                  # self-attn out proj
            wspec((D, D)), wspec((1, D)),                  # cross-attn Wq, bq
            wspec((D, 2 * D)), wspec((1, 2 * D)),          # cross-attn Wkv (fused), bkv
            wspec((D, D)), wspec((1, D)),                  # cross-attn out proj
            wspec((1, D)), wspec((1, D)),                  # norm1 gamma/beta
            wspec((1, D)), wspec((1, D)),                  # norm2 gamma/beta
            wspec((1, D)), wspec((1, D)),                  # norm3 gamma/beta
            wspec((D, d_ff)), wspec((1, d_ff)),            # conv1 (1x1) weight/bias
            wspec((d_ff, D)), wspec((1, D)),               # conv2 (1x1) weight/bias
        ],
        out_specs=pl.BlockSpec((None, tq, D), lambda b, q: (b, q, 0)),
        scratch_shapes=[pltpu.VMEM((num_heads, N, Hd), cdt),   # self K cache
                        pltpu.VMEM((num_heads, N, Hd), cdt),   # self V cache
                        pltpu.VMEM((num_heads, S, Hd), cdt),   # cross K cache
                        pltpu.VMEM((num_heads, S, Hd), cdt)],  # cross V cache
        compiler_params=pltpu.CompilerParams(
            dimension_semantics=("parallel", "arbitrary"),
            vmem_limit_bytes=vmem_limit),
        cost_estimate=pl.CostEstimate(flops=int(flops),
                                      transcendentals=int(transcendentals),
                                      bytes_accessed=int(bytes_accessed)),
    )(x, cross,
      wq_s, row(bq_s), wkv_s, row(bkv_s), wo_s, row(bo_s),
      wq_c, row(bq_c), wkv_c, row(bkv_c), wo_c, row(bo_c),
      row(g1), row(be1), row(g2), row(be2), row(g3), row(be3),
      w1, row(bb1), w2, row(bb2))


def decoder_layer_reference(x, cross, params, *, num_heads, causal_self=True,
                            activation="relu", eps=1e-5):
    """Pure-JAX reference mirroring the PyTorch forward (inference mode)."""
    (wq_s, bq_s, wkv_s, bkv_s, wo_s, bo_s,
     wq_c, bq_c, wkv_c, bkv_c, wo_c, bo_c,
     g1, be1, g2, be2, g3, be3,
     w1, bb1, w2, bb2) = params
    D = x.shape[-1]
    Hd = D // num_heads

    def mha(q_in, kv_in, wq, bq, wkv, bkv, wo, bo, causal):
        B, Nq, _ = q_in.shape
        Nk = kv_in.shape[1]
        q = q_in @ wq + bq
        kv = kv_in @ wkv + bkv
        k, v = kv[..., :D], kv[..., D:]
        qh = q.reshape(B, Nq, num_heads, Hd).transpose(0, 2, 1, 3) * Hd ** -0.5
        kh = k.reshape(B, Nk, num_heads, Hd).transpose(0, 2, 1, 3)
        vh = v.reshape(B, Nk, num_heads, Hd).transpose(0, 2, 1, 3)
        s = qh @ kh.transpose(0, 1, 3, 2)
        if causal:
            keep = jnp.tril(jnp.ones((Nq, Nk), bool))
            s = jnp.where(keep, s, -1e30)
        p = jax.nn.softmax(s, axis=-1)
        o = (p @ vh).transpose(0, 2, 1, 3).reshape(B, Nq, D)
        return o @ wo + bo

    def ln(h, g, b):
        mu = h.mean(-1, keepdims=True)
        c = h - mu
        var = (c * c).mean(-1, keepdims=True)
        return c * jax.lax.rsqrt(var + eps) * g + b

    h = ln(x + mha(x, x, wq_s, bq_s, wkv_s, bkv_s, wo_s, bo_s, causal_self), g1, be1)
    h = ln(h + mha(h, cross, wq_c, bq_c, wkv_c, bkv_c, wo_c, bo_c, False), g2, be2)
    z = h @ w1 + bb1
    z = jnp.maximum(z, 0.0) if activation == "relu" else jax.nn.gelu(z)
    y = z @ w2 + bb2
    return ln(h + y, g3, be3)


def init_params(key, d_model, d_ff):
    """Deterministic synthetic parameters matching the module's layer shapes."""
    ks = jax.random.split(key, 26)

    def lin(ka, kb, din, dout):
        w = jax.random.normal(ka, (din, dout), jnp.float32) / jnp.sqrt(din)
        b = jax.random.normal(kb, (dout,), jnp.float32) * 0.1
        return w, b

    # Self-attention (AttentionLayer): q/k/v/out projections, k & v fused.
    wq_s, bq_s = lin(ks[0], ks[1], d_model, d_model)
    wk_s, bk_s = lin(ks[2], ks[3], d_model, d_model)
    wv_s, bv_s = lin(ks[4], ks[5], d_model, d_model)
    wkv_s = jnp.concatenate([wk_s, wv_s], axis=1)
    bkv_s = jnp.concatenate([bk_s, bv_s])
    wo_s, bo_s = lin(ks[6], ks[7], d_model, d_model)
    # Cross-attention.
    wq_c, bq_c = lin(ks[8], ks[9], d_model, d_model)
    wk_c, bk_c = lin(ks[10], ks[11], d_model, d_model)
    wv_c, bv_c = lin(ks[12], ks[13], d_model, d_model)
    wkv_c = jnp.concatenate([wk_c, wv_c], axis=1)
    bkv_c = jnp.concatenate([bk_c, bv_c])
    wo_c, bo_c = lin(ks[14], ks[15], d_model, d_model)
    # LayerNorms (non-trivial gamma/beta so the test is meaningful).
    g1 = 1.0 + 0.1 * jax.random.normal(ks[16], (d_model,), jnp.float32)
    be1 = 0.1 * jax.random.normal(ks[17], (d_model,), jnp.float32)
    g2 = 1.0 + 0.1 * jax.random.normal(ks[18], (d_model,), jnp.float32)
    be2 = 0.1 * jax.random.normal(ks[19], (d_model,), jnp.float32)
    g3 = 1.0 + 0.1 * jax.random.normal(ks[20], (d_model,), jnp.float32)
    be3 = 0.1 * jax.random.normal(ks[21], (d_model,), jnp.float32)
    # FFN: conv1/conv2 with kernel_size=1 (== linear over the feature dim).
    w1, bb1 = lin(ks[22], ks[23], d_model, d_ff)
    w2, bb2 = lin(ks[24], ks[25], d_ff, d_model)
    return (wq_s, bq_s, wkv_s, bkv_s, wo_s, bo_s,
            wq_c, bq_c, wkv_c, bkv_c, wo_c, bo_c,
            g1, be1, g2, be2, g3, be3,
            w1, bb1, w2, bb2)


if __name__ == "__main__":
    # x: (batch, target_len, d_model), cross: (batch, source_len, d_model).
    B, L, S, d_model, n_heads = 2, 16, 32, 32, 4
    d_ff = 4 * d_model

    key = jax.random.PRNGKey(0)
    kx, kc, kp = jax.random.split(key, 3)
    x = jax.random.normal(kx, (B, L, d_model), jnp.float32)
    cross = jax.random.normal(kc, (B, S, d_model), jnp.float32)
    params = init_params(kp, d_model, d_ff)

    ok = True
    for causal in (True, False):   # typical decoder uses causal self-attention
        out = decoder_layer_forward(x, cross, params, num_heads=n_heads,
                                    causal_self=causal)
        out = jax.block_until_ready(out)
        ref = decoder_layer_reference(x, cross, params, num_heads=n_heads,
                                      causal_self=causal)
        ok = ok and bool(jnp.allclose(out, ref, atol=1e-4, rtol=1e-4))
        assert out.shape == (B, L, d_model)

    print("KERNEL_OK" if ok else "MISMATCH")
</pallas_src>

<mosaic_0001>
module attributes {stable_mosaic.version = 11 : i64} {
  func.func @decoder_layer_kernel(%arg0: i32, %arg1: i32, %arg2: memref<1x16x32xf32, #tpu.memory_space<vmem>>, %arg3: memref<1x32x32xf32, #tpu.memory_space<vmem>>, %arg4: memref<32x32xf32, #tpu.memory_space<vmem>>, %arg5: memref<1x32xf32, #tpu.memory_space<vmem>>, %arg6: memref<32x64xf32, #tpu.memory_space<vmem>>, %arg7: memref<1x64xf32, #tpu.memory_space<vmem>>, %arg8: memref<32x32xf32, #tpu.memory_space<vmem>>, %arg9: memref<1x32xf32, #tpu.memory_space<vmem>>, %arg10: memref<32x32xf32, #tpu.memory_space<vmem>>, %arg11: memref<1x32xf32, #tpu.memory_space<vmem>>, %arg12: memref<32x64xf32, #tpu.memory_space<vmem>>, %arg13: memref<1x64xf32, #tpu.memory_space<vmem>>, %arg14: memref<32x32xf32, #tpu.memory_space<vmem>>, %arg15: memref<1x32xf32, #tpu.memory_space<vmem>>, %arg16: memref<1x32xf32, #tpu.memory_space<vmem>>, %arg17: memref<1x32xf32, #tpu.memory_space<vmem>>, %arg18: memref<1x32xf32, #tpu.memory_space<vmem>>, %arg19: memref<1x32xf32, #tpu.memory_space<vmem>>, %arg20: memref<1x32xf32, #tpu.memory_space<vmem>>, %arg21: memref<1x32xf32, #tpu.memory_space<vmem>>, %arg22: memref<32x128xf32, #tpu.memory_space<vmem>>, %arg23: memref<1x128xf32, #tpu.memory_space<vmem>>, %arg24: memref<128x32xf32, #tpu.memory_space<vmem>>, %arg25: memref<1x32xf32, #tpu.memory_space<vmem>>, %arg26: memref<1x16x32xf32, #tpu.memory_space<vmem>>, %arg27: memref<4x16x8xf32, #tpu.memory_space<vmem>>, %arg28: memref<4x16x8xf32, #tpu.memory_space<vmem>>, %arg29: memref<4x32x8xf32, #tpu.memory_space<vmem>>, %arg30: memref<4x32x8xf32, #tpu.memory_space<vmem>>) attributes {dimension_semantics = [#tpu.dimension_semantics<parallel>, #tpu.dimension_semantics<arbitrary>], iteration_bounds = array<i64: 2, 1>, scalar_prefetch = 0 : i64, scratch_operands = 4 : i64, tpu.core_type = #tpu.core_type<tc>, window_params = [{pipeline_mode = #tpu.pipeline_mode<synchronous>, transform_indices = @transform_0, window_bounds = array<i64: 1, 16, 32>}, {pipeline_mode = #tpu.pipeline_mode<synchronous>, transform_indices = @transform_1, window_bounds = array<i64: 1, 32, 32>}, {pipeline_mode = #tpu.pipeline_mode<synchronous>, transform_indices = @transform_2, window_bounds = array<i64: 32, 32>}, {pipeline_mode = #tpu.pipeline_mode<synchronous>, transform_indices = @transform_3, window_bounds = array<i64: 1, 32>}, {pipeline_mode = #tpu.pipeline_mode<synchronous>, transform_indices = @transform_4, window_bounds = array<i64: 32, 64>}, {pipeline_mode = #tpu.pipeline_mode<synchronous>, transform_indices = @transform_5, window_bounds = array<i64: 1, 64>}, {pipeline_mode = #tpu.pipeline_mode<synchronous>, transform_indices = @transform_6, window_bounds = array<i64: 32, 32>}, {pipeline_mode = #tpu.pipeline_mode<synchronous>, transform_indices = @transform_7, window_bounds = array<i64: 1, 32>}, {pipeline_mode = #tpu.pipeline_mode<synchronous>, transform_indices = @transform_8, window_bounds = array<i64: 32, 32>}, {pipeline_mode = #tpu.pipeline_mode<synchronous>, transform_indices = @transform_9, window_bounds = array<i64: 1, 32>}, {pipeline_mode = #tpu.pipeline_mode<synchronous>, transform_indices = @transform_10, window_bounds = array<i64: 32, 64>}, {pipeline_mode = #tpu.pipeline_mode<synchronous>, transform_indices = @transform_11, window_bounds = array<i64: 1, 64>}, {pipeline_mode = #tpu.pipeline_mode<synchronous>, transform_indices = @transform_12, window_bounds = array<i64: 32, 32>}, {pipeline_mode = #tpu.pipeline_mode<synchronous>, transform_indices = @transform_13, window_bounds = array<i64: 1, 32>}, {pipeline_mode = #tpu.pipeline_mode<synchronous>, transform_indices = @transform_14, window_bounds = array<i64: 1, 32>}, {pipeline_mode = #tpu.pipeline_mode<synchronous>, transform_indices = @transform_15, window_bounds = array<i64: 1, 32>}, {pipeline_mode = #tpu.pipeline_mode<synchronous>, transform_indices = @transform_16, window_bounds = array<i64: 1, 32>}, {pipeline_mode = #tpu.pipeline_mode<synchronous>, transform_indices = @transform_17, window_bounds = array<i64: 1, 32>}, {pipeline_mode = #tpu.pipeline_mode<synchronous>, transform_indices = @transform_18, window_bounds = array<i64: 1, 32>}, {pipeline_mode = #tpu.pipeline_mode<synchronous>, transform_indices = @transform_19, window_bounds = array<i64: 1, 32>}, {pipeline_mode = #tpu.pipeline_mode<synchronous>, transform_indices = @transform_20, window_bounds = array<i64: 32, 128>}, {pipeline_mode = #tpu.pipeline_mode<synchronous>, transform_indices = @transform_21, window_bounds = array<i64: 1, 128>}, {pipeline_mode = #tpu.pipeline_mode<synchronous>, transform_indices = @transform_22, window_bounds = array<i64: 128, 32>}, {pipeline_mode = #tpu.pipeline_mode<synchronous>, transform_indices = @transform_23, window_bounds = array<i64: 1, 32>}, {transform_indices = @transform_24, window_bounds = array<i64: 1, 16, 32>}]} {
    %c16_i32 = arith.constant 16 : i32
    %0 = arith.muli %arg1, %c16_i32 : i32
    %1 = tpu.assume_multiple %0, 16 : i32
    %c0_i32 = arith.constant 0 : i32
    %2 = arith.cmpi eq, %arg1, %c0_i32 : i32
    %3 = arith.extui %2 : i1 to i32
    %c0_i32_0 = arith.constant 0 : i32
    %4 = arith.cmpi ne, %3, %c0_i32_0 : i32
    scf.if %4 {
      %c0_86 = arith.constant 0 : index
      %c0_87 = arith.constant 0 : index
      %c0_88 = arith.constant 0 : index
      %216 = vector.load %arg2[%c0_86, %c0_87, %c0_88] : memref<1x16x32xf32, #tpu.memory_space<vmem>>, vector<1x16x32xf32>
      %217 = vector.shape_cast %216 : vector<1x16x32xf32> to vector<16x32xf32>
      %c0_89 = arith.constant 0 : index
      %c0_90 = arith.constant 0 : index
      %218 = vector.load %arg6[%c0_89, %c0_90] : memref<32x64xf32, #tpu.memory_space<vmem>>, vector<32x64xf32>
      %cst_91 = arith.constant dense<0.000000e+00> : vector<16x64xf32>
      %219 = tpu.matmul %217, %218, %cst_91 {dimension_numbers = #tpu.dot_dimension_numbers<[1], [0], [0], [1], [0, 0, 1, 1], [], []>} : vector<16x32xf32>, vector<32x64xf32>, vector<16x64xf32> -> vector<16x64xf32>
      %c0_92 = arith.constant 0 : index
      %c0_93 = arith.constant 0 : index
      %220 = vector.load %arg7[%c0_92, %c0_93] : memref<1x64xf32, #tpu.memory_space<vmem>>, vector<1x64xf32>
      %221 = vector.shape_cast %220 : vector<1x64xf32> to vector<64xf32>
      %222 = vector.shape_cast %221 : vector<64xf32> to vector<1x64xf32>
      %223 = vector.broadcast %222 : vector<1x64xf32> to vector<16x64xf32>
      %224 = arith.addf %219, %223 : vector<16x64xf32>
      %225 = vector.extract_strided_slice %224 {offsets = [0, 0], sizes = [16, 8], strides = [1, 1]} : vector<16x64xf32> to vector<16x8xf32>
      %c0_94 = arith.constant 0 : index
      %c0_95 = arith.constant 0 : index
      %c0_96 = arith.constant 0 : index
      %226 = vector.load %arg27[%c0_94, %c0_95, %c0_96] : memref<4x16x8xf32, #tpu.memory_space<vmem>>, vector<1x16x8xf32>
      %227 = vector.shape_cast %226 : vector<1x16x8xf32> to vector<16x8xf32>
      %228 = vector.shape_cast %225 : vector<16x8xf32> to vector<1x16x8xf32>
      tpu.vector_store %arg27[%c0_94, %c0_95, %c0_96], %228 {strides = array<i32>} : memref<4x16x8xf32, #tpu.memory_space<vmem>>, vector<1x16x8xf32>,
      %229 = vector.extract_strided_slice %224 {offsets = [0, 32], sizes = [16, 8], strides = [1, 1]} : vector<16x64xf32> to vector<16x8xf32>
      %c0_97 = arith.constant 0 : index
      %c0_98 = arith.constant 0 : index
      %c0_99 = arith.constant 0 : index
      %230 = vector.load %arg28[%c0_97, %c0_98, %c0_99] : memref<4x16x8xf32, #tpu.memory_space<vmem>>, vector<1x16x8xf32>
      %231 = vector.shape_cast %230 : vector<1x16x8xf32> to vector<16x8xf32>
      %232 = vector.shape_cast %229 : vector<16x8xf32> to vector<1x16x8xf32>
      tpu.vector_store %arg28[%c0_97, %c0_98, %c0_99], %232 {strides = array<i32>} : memref<4x16x8xf32, #tpu.memory_space<vmem>>, vector<1x16x8xf32>,
      %233 = vector.extract_strided_slice %224 {offsets = [0, 8], sizes = [16, 8], strides = [1, 1]} : vector<16x64xf32> to vector<16x8xf32>
      %c1 = arith.constant 1 : index
      %c0_100 = arith.constant 0 : index
      %c0_101 = arith.constant 0 : index
      %234 = vector.load %arg27[%c1, %c0_100, %c0_101] : memref<4x16x8xf32, #tpu.memory_space<vmem>>, vector<1x16x8xf32>
      %235 = vector.shape_cast %234 : vector<1x16x8xf32> to vector<16x8xf32>
      %236 = vector.shape_cast %233 : vector<16x8xf32> to vector<1x16x8xf32>
      tpu.vector_store %arg27[%c1, %c0_100, %c0_101], %236 {strides = array<i32>} : memref<4x16x8xf32, #tpu.memory_space<vmem>>, vector<1x16x8xf32>,
      %237 = vector.extract_strided_slice %224 {offsets = [0, 40], sizes = [16, 8], strides = [1, 1]} : vector<16x64xf32> to vector<16x8xf32>
      %c1_102 = arith.constant 1 : index
      %c0_103 = arith.constant 0 : index
      %c0_104 = arith.constant 0 : index
      %238 = vector.load %arg28[%c1_102, %c0_103, %c0_104] : memref<4x16x8xf32, #tpu.memory_space<vmem>>, vector<1x16x8xf32>
      %239 = vector.shape_cast %238 : vector<1x16x8xf32> to vector<16x8xf32>
      %240 = vector.shape_cast %237 : vector<16x8xf32> to vector<1x16x8xf32>
      tpu.vector_store %arg28[%c1_102, %c0_103, %c0_104], %240 {strides = array<i32>} : memref<4x16x8xf32, #tpu.memory_space<vmem>>, vector<1x16x8xf32>,
      %241 = vector.extract_strided_slice %224 {offsets = [0, 16], sizes = [16, 8], strides = [1, 1]} : vector<16x64xf32> to vector<16x8xf32>
      %c2 = arith.constant 2 : index
      %c0_105 = arith.constant 0 : index
      %c0_106 = arith.constant 0 : index
      %242 = vector.load %arg27[%c2, %c0_105, %c0_106] : memref<4x16x8xf32, #tpu.memory_space<vmem>>, vector<1x16x8xf32>
      %243 = vector.shape_cast %242 : vector<1x16x8xf32> to vector<16x8xf32>
      %244 = vector.shape_cast %241 : vector<16x8xf32> to vector<1x16x8xf32>
      tpu.vector_store %arg27[%c2, %c0_105, %c0_106], %244 {strides = array<i32>} : memref<4x16x8xf32, #tpu.memory_space<vmem>>, vector<1x16x8xf32>,
      %245 = vector.extract_strided_slice %224 {offsets = [0, 48], sizes = [16, 8], strides = [1, 1]} : vector<16x64xf32> to vector<16x8xf32>
      %c2_107 = arith.constant 2 : index
      %c0_108 = arith.constant 0 : index
      %c0_109 = arith.constant 0 : index
      %246 = vector.load %arg28[%c2_107, %c0_108, %c0_109] : memref<4x16x8xf32, #tpu.memory_space<vmem>>, vector<1x16x8xf32>
      %247 = vector.shape_cast %246 : vector<1x16x8xf32> to vector<16x8xf32>
      %248 = vector.shape_cast %245 : vector<16x8xf32> to vector<1x16x8xf32>
      tpu.vector_store %arg28[%c2_107, %c0_108, %c0_109], %248 {strides = array<i32>} : memref<4x16x8xf32, #tpu.memory_space<vmem>>, vector<1x16x8xf32>,
      %249 = vector.extract_strided_slice %224 {offsets = [0, 24], sizes = [16, 8], strides = [1, 1]} : vector<16x64xf32> to vector<16x8xf32>
      %c3 = arith.constant 3 : index
      %c0_110 = arith.constant 0 : index
      %c0_111 = arith.constant 0 : index
      %250 = vector.load %arg27[%c3, %c0_110, %c0_111] : memref<4x16x8xf32, #tpu.memory_space<vmem>>, vector<1x16x8xf32>
      %251 = vector.shape_cast %250 : vector<1x16x8xf32> to vector<16x8xf32>
      %252 = vector.shape_cast %249 : vector<16x8xf32> to vector<1x16x8xf32>
      tpu.vector_store %arg27[%c3, %c0_110, %c0_111], %252 {strides = array<i32>} : memref<4x16x8xf32, #tpu.memory_space<vmem>>, vector<1x16x8xf32>,
      %253 = vector.extract_strided_slice %224 {offsets = [0, 56], sizes = [16, 8], strides = [1, 1]} : vector<16x64xf32> to vector<16x8xf32>
      %c3_112 = arith.constant 3 : index
      %c0_113 = arith.constant 0 : index
      %c0_114 = arith.constant 0 : index
      %254 = vector.load %arg28[%c3_112, %c0_113, %c0_114] : memref<4x16x8xf32, #tpu.memory_space<vmem>>, vector<1x16x8xf32>
      %255 = vector.shape_cast %254 : vector<1x16x8xf32> to vector<16x8xf32>
      %256 = vector.shape_cast %253 : vector<16x8xf32> to vector<1x16x8xf32>
      tpu.vector_store %arg28[%c3_112, %c0_113, %c0_114], %256 {strides = array<i32>} : memref<4x16x8xf32, #tpu.memory_space<vmem>>, vector<1x16x8xf32>,
      %c0_115 = arith.constant 0 : index
      %c0_116 = arith.constant 0 : index
      %c0_117 = arith.constant 0 : index
      %257 = vector.load %arg3[%c0_115, %c0_116, %c0_117] : memref<1x32x32xf32, #tpu.memory_space<vmem>>, vector<1x32x32xf32>
      %258 = vector.shape_cast %257 : vector<1x32x32xf32> to vector<32x32xf32>
      %c0_118 = arith.constant 0 : index
      %c0_119 = arith.constant 0 : index
      %259 = vector.load %arg12[%c0_118, %c0_119] : memref<32x64xf32, #tpu.memory_space<vmem>>, vector<32x64xf32>
      %cst_120 = arith.constant dense<0.000000e+00> : vector<32x64xf32>
      %260 = tpu.matmul %258, %259, %cst_120 {dimension_numbers = #tpu.dot_dimension_numbers<[1], [0], [0], [1], [0, 0, 1, 1], [], []>} : vector<32x32xf32>, vector<32x64xf32>, vector<32x64xf32> -> vector<32x64xf32>
      %c0_121 = arith.constant 0 : index
      %c0_122 = arith.constant 0 : index
      %261 = vector.load %arg13[%c0_121, %c0_122] : memref<1x64xf32, #tpu.memory_space<vmem>>, vector<1x64xf32>
      %262 = vector.shape_cast %261 : vector<1x64xf32> to vector<64xf32>
      %263 = vector.shape_cast %262 : vector<64xf32> to vector<1x64xf32>
      %264 = vector.broadcast %263 : vector<1x64xf32> to vector<32x64xf32>
      %265 = arith.addf %260, %264 : vector<32x64xf32>
      %266 = vector.extract_strided_slice %265 {offsets = [0, 0], sizes = [32, 8], strides = [1, 1]} : vector<32x64xf32> to vector<32x8xf32>
      %c0_123 = arith.constant 0 : index
      %c0_124 = arith.constant 0 : index
      %c0_125 = arith.constant 0 : index
      %267 = vector.load %arg29[%c0_123, %c0_124, %c0_125] : memref<4x32x8xf32, #tpu.memory_space<vmem>>, vector<1x32x8xf32>
      %268 = vector.shape_cast %267 : vector<1x32x8xf32> to vector<32x8xf32>
      %269 = vector.shape_cast %266 : vector<32x8xf32> to vector<1x32x8xf32>
      tpu.vector_store %arg29[%c0_123, %c0_124, %c0_125], %269 {strides = array<i32>} : memref<4x32x8xf32, #tpu.memory_space<vmem>>, vector<1x32x8xf32>,
      %270 = vector.extract_strided_slice %265 {offsets = [0, 32], sizes = [32, 8], strides = [1, 1]} : vector<32x64xf32> to vector<32x8xf32>
      %c0_126 = arith.constant 0 : index
      %c0_127 = arith.constant 0 : index
      %c0_128 = arith.constant 0 : index
      %271 = vector.load %arg30[%c0_126, %c0_127, %c0_128] : memref<4x32x8xf32, #tpu.memory_space<vmem>>, vector<1x32x8xf32>
      %272 = vector.shape_cast %271 : vector<1x32x8xf32> to vector<32x8xf32>
      %273 = vector.shape_cast %270 : vector<32x8xf32> to vector<1x32x8xf32>
      tpu.vector_store %arg30[%c0_126, %c0_127, %c0_128], %273 {strides = array<i32>} : memref<4x32x8xf32, #tpu.memory_space<vmem>>, vector<1x32x8xf32>,
      %274 = vector.extract_strided_slice %265 {offsets = [0, 8], sizes = [32, 8], strides = [1, 1]} : vector<32x64xf32> to vector<32x8xf32>
      %c1_129 = arith.constant 1 : index
      %c0_130 = arith.constant 0 : index
      %c0_131 = arith.constant 0 : index
      %275 = vector.load %arg29[%c1_129, %c0_130, %c0_131] : memref<4x32x8xf32, #tpu.memory_space<vmem>>, vector<1x32x8xf32>
      %276 = vector.shape_cast %275 : vector<1x32x8xf32> to vector<32x8xf32>
      %277 = vector.shape_cast %274 : vector<32x8xf32> to vector<1x32x8xf32>
      tpu.vector_store %arg29[%c1_129, %c0_130, %c0_131], %277 {strides = array<i32>} : memref<4x32x8xf32, #tpu.memory_space<vmem>>, vector<1x32x8xf32>,
      %278 = vector.extract_strided_slice %265 {offsets = [0, 40], sizes = [32, 8], strides = [1, 1]} : vector<32x64xf32> to vector<32x8xf32>
      %c1_132 = arith.constant 1 : index
      %c0_133 = arith.constant 0 : index
      %c0_134 = arith.constant 0 : index
      %279 = vector.load %arg30[%c1_132, %c0_133, %c0_134] : memref<4x32x8xf32, #tpu.memory_space<vmem>>, vector<1x32x8xf32>
      %280 = vector.shape_cast %279 : vector<1x32x8xf32> to vector<32x8xf32>
      %281 = vector.shape_cast %278 : vector<32x8xf32> to vector<1x32x8xf32>
      tpu.vector_store %arg30[%c1_132, %c0_133, %c0_134], %281 {strides = array<i32>} : memref<4x32x8xf32, #tpu.memory_space<vmem>>, vector<1x32x8xf32>,
      %282 = vector.extract_strided_slice %265 {offsets = [0, 16], sizes = [32, 8], strides = [1, 1]} : vector<32x64xf32> to vector<32x8xf32>
      %c2_135 = arith.constant 2 : index
      %c0_136 = arith.constant 0 : index
      %c0_137 = arith.constant 0 : index
      %283 = vector.load %arg29[%c2_135, %c0_136, %c0_137] : memref<4x32x8xf32, #tpu.memory_space<vmem>>, vector<1x32x8xf32>
      %284 = vector.shape_cast %283 : vector<1x32x8xf32> to vector<32x8xf32>
      %285 = vector.shape_cast %282 : vector<32x8xf32> to vector<1x32x8xf32>
      tpu.vector_store %arg29[%c2_135, %c0_136, %c0_137], %285 {strides = array<i32>} : memref<4x32x8xf32, #tpu.memory_space<vmem>>, vector<1x32x8xf32>,
      %286 = vector.extract_strided_slice %265 {offsets = [0, 48], sizes = [32, 8], strides = [1, 1]} : vector<32x64xf32> to vector<32x8xf32>
      %c2_138 = arith.constant 2 : index
      %c0_139 = arith.constant 0 : index
      %c0_140 = arith.constant 0 : index
      %287 = vector.load %arg30[%c2_138, %c0_139, %c0_140] : memref<4x32x8xf32, #tpu.memory_space<vmem>>, vector<1x32x8xf32>
      %288 = vector.shape_cast %287 : vector<1x32x8xf32> to vector<32x8xf32>
      %289 = vector.shape_cast %286 : vector<32x8xf32> to vector<1x32x8xf32>
      tpu.vector_store %arg30[%c2_138, %c0_139, %c0_140], %289 {strides = array<i32>} : memref<4x32x8xf32, #tpu.memory_space<vmem>>, vector<1x32x8xf32>,
      %290 = vector.extract_strided_slice %265 {offsets = [0, 24], sizes = [32, 8], strides = [1, 1]} : vector<32x64xf32> to vector<32x8xf32>
      %c3_141 = arith.constant 3 : index
      %c0_142 = arith.constant 0 : index
      %c0_143 = arith.constant 0 : index
      %291 = vector.load %arg29[%c3_141, %c0_142, %c0_143] : memref<4x32x8xf32, #tpu.memory_space<vmem>>, vector<1x32x8xf32>
      %292 = vector.shape_cast %291 : vector<1x32x8xf32> to vector<32x8xf32>
      %293 = vector.shape_cast %290 : vector<32x8xf32> to vector<1x32x8xf32>
      tpu.vector_store %arg29[%c3_141, %c0_142, %c0_143], %293 {strides = array<i32>} : memref<4x32x8xf32, #tpu.memory_space<vmem>>, vector<1x32x8xf32>,
      %294 = vector.extract_strided_slice %265 {offsets = [0, 56], sizes = [32, 8], strides = [1, 1]} : vector<32x64xf32> to vector<32x8xf32>
      %c3_144 = arith.constant 3 : index
      %c0_145 = arith.constant 0 : index
      %c0_146 = arith.constant 0 : index
      %295 = vector.load %arg30[%c3_144, %c0_145, %c0_146] : memref<4x32x8xf32, #tpu.memory_space<vmem>>, vector<1x32x8xf32>
      %296 = vector.shape_cast %295 : vector<1x32x8xf32> to vector<32x8xf32>
      %297 = vector.shape_cast %294 : vector<32x8xf32> to vector<1x32x8xf32>
      tpu.vector_store %arg30[%c3_144, %c0_145, %c0_146], %297 {strides = array<i32>} : memref<4x32x8xf32, #tpu.memory_space<vmem>>, vector<1x32x8xf32>,
    } else {
    }
    %c0 = arith.constant 0 : index
    %5 = arith.index_cast %1 : i32 to index
    %c0_1 = arith.constant 0 : index
    %6 = vector.load %arg2[%c0, %5, %c0_1] : memref<1x16x32xf32, #tpu.memory_space<vmem>>, vector<1x16x32xf32>
    %7 = vector.shape_cast %6 : vector<1x16x32xf32> to vector<16x32xf32>
    %c0_2 = arith.constant 0 : index
    %c0_3 = arith.constant 0 : index
    %8 = vector.load %arg4[%c0_2, %c0_3] : memref<32x32xf32, #tpu.memory_space<vmem>>, vector<32x32xf32>
    %cst = arith.constant dense<0.000000e+00> : vector<16x32xf32>
    %9 = tpu.matmul %7, %8, %cst {dimension_numbers = #tpu.dot_dimension_numbers<[1], [0], [0], [1], [0, 0, 1, 1], [], []>} : vector<16x32xf32>, vector<32x32xf32>, vector<16x32xf32> -> vector<16x32xf32>
    %c0_4 = arith.constant 0 : index
    %c0_5 = arith.constant 0 : index
    %10 = vector.load %arg5[%c0_4, %c0_5] : memref<1x32xf32, #tpu.memory_space<vmem>>, vector<1x32xf32>
    %11 = vector.shape_cast %10 : vector<1x32xf32> to vector<32xf32>
    %12 = vector.shape_cast %11 : vector<32xf32> to vector<1x32xf32>
    %13 = vector.broadcast %12 : vector<1x32xf32> to vector<16x32xf32>
    %14 = arith.addf %9, %13 : vector<16x32xf32>
    %cst_6 = arith.constant 0.353553385 : f32
    %15 = vector.broadcast %cst_6 : f32 to vector<16x32xf32>
    %16 = arith.mulf %14, %15 : vector<16x32xf32>
    %17 = vector.extract_strided_slice %16 {offsets = [0, 0], sizes = [16, 8], strides = [1, 1]} : vector<16x32xf32> to vector<16x8xf32>
    %18 = vector.extract_strided_slice %16 {offsets = [0, 8], sizes = [16, 8], strides = [1, 1]} : vector<16x32xf32> to vector<16x8xf32>
    %19 = vector.extract_strided_slice %16 {offsets = [0, 16], sizes = [16, 8], strides = [1, 1]} : vector<16x32xf32> to vector<16x8xf32>
    %20 = vector.extract_strided_slice %16 {offsets = [0, 24], sizes = [16, 8], strides = [1, 1]} : vector<16x32xf32> to vector<16x8xf32>
    %21 = vector.shape_cast %17 : vector<16x8xf32> to vector<1x16x8xf32>
    %22 = vector.shape_cast %18 : vector<16x8xf32> to vector<1x16x8xf32>
    %23 = vector.shape_cast %19 : vector<16x8xf32> to vector<1x16x8xf32>
    %24 = vector.shape_cast %20 : vector<16x8xf32> to vector<1x16x8xf32>
    %25 = tpu.concatenate %21, %22, %23, %24 in 0 : vector<1x16x8xf32>, vector<1x16x8xf32>, vector<1x16x8xf32>, vector<1x16x8xf32> -> vector<4x16x8xf32>
    %c0_7 = arith.constant 0 : index
    %c0_8 = arith.constant 0 : index
    %c0_9 = arith.constant 0 : index
    %26 = vector.load %arg27[%c0_7, %c0_8, %c0_9] : memref<4x16x8xf32, #tpu.memory_space<vmem>>, vector<4x16x8xf32>
    %c0_10 = arith.constant 0 : index
    %c0_11 = arith.constant 0 : index
    %c0_12 = arith.constant 0 : index
    %27 = vector.load %arg28[%c0_10, %c0_11, %c0_12] : memref<4x16x8xf32, #tpu.memory_space<vmem>>, vector<4x16x8xf32>
    "tpu.trace_start"() <{level = 10 : i32, message = "hqd,hkd->hqk"}> : () -> ()
    %cst_13 = arith.constant dense<0.000000e+00> : vector<4x16x16xf32>
    %28 = tpu.matmul %25, %26, %cst_13 {dimension_numbers = #tpu.dot_dimension_numbers<[2], [2], [1], [1], [0, 0, 0, 1, 1, 1], [0], [0]>} : vector<4x16x8xf32>, vector<4x16x8xf32>, vector<4x16x16xf32> -> vector<4x16x16xf32>
    "tpu.trace_stop"() : () -> ()
    %29 = tpu.iota {dimensions = array<i32: 0>} : vector<16x16xi32>
    %30 = vector.broadcast %1 : i32 to vector<16x16xi32>
    %31 = arith.addi %29, %30 : vector<16x16xi32>
    %32 = tpu.iota {dimensions = array<i32: 1>} : vector<16x16xi32>
    %33 = arith.cmpi sle, %32, %31 : vector<16x16xi32>
    %34 = vector.shape_cast %33 : vector<16x16xi1> to vector<1x16x16xi1>
    %cst_14 = arith.constant -1.000000e+30 : f32
    %35 = vector.shape_cast %34 : vector<1x16x16xi1> to vector<1x16x16xi1>
    %36 = vector.broadcast %35 : vector<1x16x16xi1> to vector<4x16x16xi1>
    %37 = vector.broadcast %cst_14 : f32 to vector<4x16x16xf32>
    %38 = arith.select %36, %28, %37 : vector<4x16x16xi1>, vector<4x16x16xf32>
    %cst_15 = arith.constant dense<0xFF800000> : vector<4x16xf32>
    %39 = vector.multi_reduction <maximumf>, %38, %cst_15 [2] : vector<4x16x16xf32> to vector<4x16xf32>
    %40 = vector.shape_cast %39 : vector<4x16xf32> to vector<4x16x1xf32>
    %41 = vector.broadcast %40 : vector<4x16x1xf32> to vector<4x16x16xf32>
    %42 = arith.subf %38, %41 : vector<4x16x16xf32>
    %43 = math.exp %42 : vector<4x16x16xf32>
    %cst_16 = arith.constant dense<0.000000e+00> : vector<4x16xf32>
    %44 = vector.multi_reduction <add>, %43, %cst_16 [2] : vector<4x16x16xf32> to vector<4x16xf32>
    %45 = vector.shape_cast %44 : vector<4x16xf32> to vector<4x16x1xf32>
    %46 = tpu.reciprocal %45 : vector<4x16x1xf32> -> vector<4x16x1xf32>
    %47 = vector.broadcast %46 : vector<4x16x1xf32> to vector<4x16x16xf32>
    %48 = arith.mulf %43, %47 : vector<4x16x16xf32>
    "tpu.trace_start"() <{level = 10 : i32, message = "hqk,hkd->hqd"}> : () -> ()
    %cst_17 = arith.constant dense<0.000000e+00> : vector<4x16x8xf32>
    %49 = tpu.matmul %48, %27, %cst_17 {dimension_numbers = #tpu.dot_dimension_numbers<[2], [1], [1], [2], [0, 0, 0, 1, 1, 2], [0], [0]>} : vector<4x16x16xf32>, vector<4x16x8xf32>, vector<4x16x8xf32> -> vector<4x16x8xf32>
    "tpu.trace_stop"() : () -> ()
    %50 = vector.extract_strided_slice %49 {offsets = [0, 0, 0], sizes = [1, 16, 8], strides = [1, 1, 1]} : vector<4x16x8xf32> to vector<1x16x8xf32>
    %51 = vector.shape_cast %50 : vector<1x16x8xf32> to vector<16x8xf32>
    %52 = vector.extract_strided_slice %49 {offsets = [1, 0, 0], sizes = [1, 16, 8], strides = [1, 1, 1]} : vector<4x16x8xf32> to vector<1x16x8xf32>
    %53 = vector.shape_cast %52 : vector<1x16x8xf32> to vector<16x8xf32>
    %54 = vector.extract_strided_slice %49 {offsets = [2, 0, 0], sizes = [1, 16, 8], strides = [1, 1, 1]} : vector<4x16x8xf32> to vector<1x16x8xf32>
    %55 = vector.shape_cast %54 : vector<1x16x8xf32> to vector<16x8xf32>
    %56 = vector.extract_strided_slice %49 {offsets = [3, 0, 0], sizes = [1, 16, 8], strides = [1, 1, 1]} : vector<4x16x8xf32> to vector<1x16x8xf32>
    %57 = vector.shape_cast %56 : vector<1x16x8xf32> to vector<16x8xf32>
    %58 = tpu.concatenate %51, %53, %55, %57 in 1 : vector<16x8xf32>, vector<16x8xf32>, vector<16x8xf32>, vector<16x8xf32> -> vector<16x32xf32>
    %c0_18 = arith.constant 0 : index
    %c0_19 = arith.constant 0 : index
    %59 = vector.load %arg8[%c0_18, %c0_19] : memref<32x32xf32, #tpu.memory_space<vmem>>, vector<32x32xf32>
    %cst_20 = arith.constant dense<0.000000e+00> : vector<16x32xf32>
    %60 = tpu.matmul %58, %59, %cst_20 {dimension_numbers = #tpu.dot_dimension_numbers<[1], [0], [0], [1], [0, 0, 1, 1], [], []>} : vector<16x32xf32>, vector<32x32xf32>, vector<16x32xf32> -> vector<16x32xf32>
    %c0_21 = arith.constant 0 : index
    %c0_22 = arith.constant 0 : index
    %61 = vector.load %arg9[%c0_21, %c0_22] : memref<1x32xf32, #tpu.memory_space<vmem>>, vector<1x32xf32>
    %62 = vector.shape_cast %61 : vector<1x32xf32> to vector<32xf32>
    %63 = vector.shape_cast %62 : vector<32xf32> to vector<1x32xf32>
    %64 = vector.broadcast %63 : vector<1x32xf32> to vector<16x32xf32>
    %65 = arith.addf %60, %64 : vector<16x32xf32>
    %66 = arith.addf %7, %65 : vector<16x32xf32>
    %cst_23 = arith.constant dense<0.000000e+00> : vector<16xf32>
    %67 = vector.multi_reduction <add>, %66, %cst_23 [1] : vector<16x32xf32> to vector<16xf32>
    %68 = vector.shape_cast %67 : vector<16xf32> to vector<16x1xf32>
    %cst_24 = arith.constant 3.200000e+01 : f32
    %69 = vector.broadcast %cst_24 : f32 to vector<16x1xf32>
    %70 = arith.divf %68, %69 : vector<16x1xf32>
    %71 = vector.broadcast %70 : vector<16x1xf32> to vector<16x32xf32>
    %72 = arith.subf %66, %71 : vector<16x32xf32>
    %73 = arith.mulf %72, %72 : vector<16x32xf32>
    %cst_25 = arith.constant dense<0.000000e+00> : vector<16xf32>
    %74 = vector.multi_reduction <add>, %73, %cst_25 [1] : vector<16x32xf32> to vector<16xf32>
    %75 = vector.shape_cast %74 : vector<16xf32> to vector<16x1xf32>
    %cst_26 = arith.constant 3.200000e+01 : f32
    %76 = vector.broadcast %cst_26 : f32 to vector<16x1xf32>
    %77 = arith.divf %75, %76 : vector<16x1xf32>
    %cst_27 = arith.constant 9.99999974E-6 : f32
    %78 = vector.broadcast %cst_27 : f32 to vector<16x1xf32>
    %79 = arith.addf %77, %78 : vector<16x1xf32>
    %80 = math.rsqrt %79 : vector<16x1xf32>
    %81 = vector.broadcast %80 : vector<16x1xf32> to vector<16x32xf32>
    %82 = arith.mulf %72, %81 : vector<16x32xf32>
    %c0_28 = arith.constant 0 : index
    %c0_29 = arith.constant 0 : index
    %83 = vector.load %arg16[%c0_28, %c0_29] : memref<1x32xf32, #tpu.memory_space<vmem>>, vector<1x32xf32>
    %84 = vector.shape_cast %83 : vector<1x32xf32> to vector<32xf32>
    %85 = vector.shape_cast %84 : vector<32xf32> to vector<1x32xf32>
    %86 = vector.broadcast %85 : vector<1x32xf32> to vector<16x32xf32>
    %87 = arith.mulf %82, %86 : vector<16x32xf32>
    %c0_30 = arith.constant 0 : index
    %c0_31 = arith.constant 0 : index
    %88 = vector.load %arg17[%c0_30, %c0_31] : memref<1x32xf32, #tpu.memory_space<vmem>>, vector<1x32xf32>
    %89 = vector.shape_cast %88 : vector<1x32xf32> to vector<32xf32>
    %90 = vector.shape_cast %89 : vector<32xf32> to vector<1x32xf32>
    %91 = vector.broadcast %90 : vector<1x32xf32> to vector<16x32xf32>
    %92 = arith.addf %87, %91 : vector<16x32xf32>
    %c0_32 = arith.constant 0 : index
    %c0_33 = arith.constant 0 : index
    %93 = vector.load %arg10[%c0_32, %c0_33] : memref<32x32xf32, #tpu.memory_space<vmem>>, vector<32x32xf32>
    %cst_34 = arith.constant dense<0.000000e+00> : vector<16x32xf32>
    %94 = tpu.matmul %92, %93, %cst_34 {dimension_numbers = #tpu.dot_dimension_numbers<[1], [0], [0], [1], [0, 0, 1, 1], [], []>} : vector<16x32xf32>, vector<32x32xf32>, vector<16x32xf32> -> vector<16x32xf32>
    %c0_35 = arith.constant 0 : index
    %c0_36 = arith.constant 0 : index
    %95 = vector.load %arg11[%c0_35, %c0_36] : memref<1x32xf32, #tpu.memory_space<vmem>>, vector<1x32xf32>
    %96 = vector.shape_cast %95 : vector<1x32xf32> to vector<32xf32>
    %97 = vector.shape_cast %96 : vector<32xf32> to vector<1x32xf32>
    %98 = vector.broadcast %97 : vector<1x32xf32> to vector<16x32xf32>
    %99 = arith.addf %94, %98 : vector<16x32xf32>
    %cst_37 = arith.constant 0.353553385 : f32
    %100 = vector.broadcast %cst_37 : f32 to vector<16x32xf32>
    %101 = arith.mulf %99, %100 : vector<16x32xf32>
    %102 = vector.extract_strided_slice %101 {offsets = [0, 0], sizes = [16, 8], strides = [1, 1]} : vector<16x32xf32> to vector<16x8xf32>
    %103 = vector.extract_strided_slice %101 {offsets = [0, 8], sizes = [16, 8], strides = [1, 1]} : vector<16x32xf32> to vector<16x8xf32>
    %104 = vector.extract_strided_slice %101 {offsets = [0, 16], sizes = [16, 8], strides = [1, 1]} : vector<16x32xf32> to vector<16x8xf32>
    %105 = vector.extract_strided_slice %101 {offsets = [0, 24], sizes = [16, 8], strides = [1, 1]} : vector<16x32xf32> to vector<16x8xf32>
    %106 = vector.shape_cast %102 : vector<16x8xf32> to vector<1x16x8xf32>
    %107 = vector.shape_cast %103 : vector<16x8xf32> to vector<1x16x8xf32>
    %108 = vector.shape_cast %104 : vector<16x8xf32> to vector<1x16x8xf32>
    %109 = vector.shape_cast %105 : vector<16x8xf32> to vector<1x16x8xf32>
    %110 = tpu.concatenate %106, %107, %108, %109 in 0 : vector<1x16x8xf32>, vector<1x16x8xf32>, vector<1x16x8xf32>, vector<1x16x8xf32> -> vector<4x16x8xf32>
    %c0_38 = arith.constant 0 : index
    %c0_39 = arith.constant 0 : index
    %c0_40 = arith.constant 0 : index
    %111 = vector.load %arg29[%c0_38, %c0_39, %c0_40] : memref<4x32x8xf32, #tpu.memory_space<vmem>>, vector<4x32x8xf32>
    %c0_41 = arith.constant 0 : index
    %c0_42 = arith.constant 0 : index
    %c0_43 = arith.constant 0 : index
    %112 = vector.load %arg30[%c0_41, %c0_42, %c0_43] : memref<4x32x8xf32, #tpu.memory_space<vmem>>, vector<4x32x8xf32>
    "tpu.trace_start"() <{level = 10 : i32, message = "hqd,hkd->hqk"}> : () -> ()
    %cst_44 = arith.constant dense<0.000000e+00> : vector<4x16x32xf32>
    %113 = tpu.matmul %110, %111, %cst_44 {dimension_numbers = #tpu.dot_dimension_numbers<[2], [2], [1], [1], [0, 0, 0, 1, 1, 1], [0], [0]>} : vector<4x16x8xf32>, vector<4x32x8xf32>, vector<4x16x32xf32> -> vector<4x16x32xf32>
    "tpu.trace_stop"() : () -> ()
    %cst_45 = arith.constant dense<0xFF800000> : vector<4x16xf32>
    %114 = vector.multi_reduction <maximumf>, %113, %cst_45 [2] : vector<4x16x32xf32> to vector<4x16xf32>
    %115 = vector.shape_cast %114 : vector<4x16xf32> to vector<4x16x1xf32>
    %116 = vector.broadcast %115 : vector<4x16x1xf32> to vector<4x16x32xf32>
    %117 = arith.subf %113, %116 : vector<4x16x32xf32>
    %118 = math.exp %117 : vector<4x16x32xf32>
    %cst_46 = arith.constant dense<0.000000e+00> : vector<4x16xf32>
    %119 = vector.multi_reduction <add>, %118, %cst_46 [2] : vector<4x16x32xf32> to vector<4x16xf32>
    %120 = vector.shape_cast %119 : vector<4x16xf32> to vector<4x16x1xf32>
    %121 = tpu.reciprocal %120 : vector<4x16x1xf32> -> vector<4x16x1xf32>
    %122 = vector.broadcast %121 : vector<4x16x1xf32> to vector<4x16x32xf32>
    %123 = arith.mulf %118, %122 : vector<4x16x32xf32>
    "tpu.trace_start"() <{level = 10 : i32, message = "hqk,hkd->hqd"}> : () -> ()
    %cst_47 = arith.constant dense<0.000000e+00> : vector<4x16x8xf32>
    %124 = tpu.matmul %123, %112, %cst_47 {dimension_numbers = #tpu.dot_dimension_numbers<[2], [1], [1], [2], [0, 0, 0, 1, 1, 2], [0], [0]>} : vector<4x16x32xf32>, vector<4x32x8xf32>, vector<4x16x8xf32> -> vector<4x16x8xf32>
    "tpu.trace_stop"() : () -> ()
    %125 = vector.extract_strided_slice %124 {offsets = [0, 0, 0], sizes = [1, 16, 8], strides = [1, 1, 1]} : vector<4x16x8xf32> to vector<1x16x8xf32>
    %126 = vector.shape_cast %125 : vector<1x16x8xf32> to vector<16x8xf32>
    %127 = vector.extract_strided_slice %124 {offsets = [1, 0, 0], sizes = [1, 16, 8], strides = [1, 1, 1]} : vector<4x16x8xf32> to vector<1x16x8xf32>
    %128 = vector.shape_cast %127 : vector<1x16x8xf32> to vector<16x8xf32>
    %129 = vector.extract_strided_slice %124 {offsets = [2, 0, 0], sizes = [1, 16, 8], strides = [1, 1, 1]} : vector<4x16x8xf32> to vector<1x16x8xf32>
    %130 = vector.shape_cast %129 : vector<1x16x8xf32> to vector<16x8xf32>
    %131 = vector.extract_strided_slice %124 {offsets = [3, 0, 0], sizes = [1, 16, 8], strides = [1, 1, 1]} : vector<4x16x8xf32> to vector<1x16x8xf32>
    %132 = vector.shape_cast %131 : vector<1x16x8xf32> to vector<16x8xf32>
    %133 = tpu.concatenate %126, %128, %130, %132 in 1 : vector<16x8xf32>, vector<16x8xf32>, vector<16x8xf32>, vector<16x8xf32> -> vector<16x32xf32>
    %c0_48 = arith.constant 0 : index
    %c0_49 = arith.constant 0 : index
    %134 = vector.load %arg14[%c0_48, %c0_49] : memref<32x32xf32, #tpu.memory_space<vmem>>, vector<32x32xf32>
    %cst_50 = arith.constant dense<0.000000e+00> : vector<16x32xf32>
    %135 = tpu.matmul %133, %134, %cst_50 {dimension_numbers = #tpu.dot_dimension_numbers<[1], [0], [0], [1], [0, 0, 1, 1], [], []>} : vector<16x32xf32>, vector<32x32xf32>, vector<16x32xf32> -> vector<16x32xf32>
    %c0_51 = arith.constant 0 : index
    %c0_52 = arith.constant 0 : index
    %136 = vector.load %arg15[%c0_51, %c0_52] : memref<1x32xf32, #tpu.memory_space<vmem>>, vector<1x32xf32>
    %137 = vector.shape_cast %136 : vector<1x32xf32> to vector<32xf32>
    %138 = vector.shape_cast %137 : vector<32xf32> to vector<1x32xf32>
    %139 = vector.broadcast %138 : vector<1x32xf32> to vector<16x32xf32>
    %140 = arith.addf %135, %139 : vector<16x32xf32>
    %141 = arith.addf %92, %140 : vector<16x32xf32>
    %cst_53 = arith.constant dense<0.000000e+00> : vector<16xf32>
    %142 = vector.multi_reduction <add>, %141, %cst_53 [1] : vector<16x32xf32> to vector<16xf32>
    %143 = vector.shape_cast %142 : vector<16xf32> to vector<16x1xf32>
    %cst_54 = arith.constant 3.200000e+01 : f32
    %144 = vector.broadcast %cst_54 : f32 to vector<16x1xf32>
    %145 = arith.divf %143, %144 : vector<16x1xf32>
    %146 = vector.broadcast %145 : vector<16x1xf32> to vector<16x32xf32>
    %147 = arith.subf %141, %146 : vector<16x32xf32>
    %148 = arith.mulf %147, %147 : vector<16x32xf32>
    %cst_55 = arith.constant dense<0.000000e+00> : vector<16xf32>
    %149 = vector.multi_reduction <add>, %148, %cst_55 [1] : vector<16x32xf32> to vector<16xf32>
    %150 = vector.shape_cast %149 : vector<16xf32> to vector<16x1xf32>
    %cst_56 = arith.constant 3.200000e+01 : f32
    %151 = vector.broadcast %cst_56 : f32 to vector<16x1xf32>
    %152 = arith.divf %150, %151 : vector<16x1xf32>
    %cst_57 = arith.constant 9.99999974E-6 : f32
    %153 = vector.broadcast %cst_57 : f32 to vector<16x1xf32>
    %154 = arith.addf %152, %153 : vector<16x1xf32>
    %155 = math.rsqrt %154 : vector<16x1xf32>
    %156 = vector.broadcast %155 : vector<16x1xf32> to vector<16x32xf32>
    %157 = arith.mulf %147, %156 : vector<16x32xf32>
    %c0_58 = arith.constant 0 : index
    %c0_59 = arith.constant 0 : index
    %158 = vector.load %arg18[%c0_58, %c0_59] : memref<1x32xf32, #tpu.memory_space<vmem>>, vector<1x32xf32>
    %159 = vector.shape_cast %158 : vector<1x32xf32> to vector<32xf32>
    %160 = vector.shape_cast %159 : vector<32xf32> to vector<1x32xf32>
    %161 = vector.broadcast %160 : vector<1x32xf32> to vector<16x32xf32>
    %162 = arith.mulf %157, %161 : vector<16x32xf32>
    %c0_60 = arith.constant 0 : index
    %c0_61 = arith.constant 0 : index
    %163 = vector.load %arg19[%c0_60, %c0_61] : memref<1x32xf32, #tpu.memory_space<vmem>>, vector<1x32xf32>
    %164 = vector.shape_cast %163 : vector<1x32xf32> to vector<32xf32>
    %165 = vector.shape_cast %164 : vector<32xf32> to vector<1x32xf32>
    %166 = vector.broadcast %165 : vector<1x32xf32> to vector<16x32xf32>
    %167 = arith.addf %162, %166 : vector<16x32xf32>
    %cst_62 = arith.constant 0.000000e+00 : f32
    %168 = vector.broadcast %cst_62 : f32 to vector<16x32xf32>
    %c0_63 = arith.constant 0 : index
    %c0_64 = arith.constant 0 : index
    %169 = vector.load %arg25[%c0_63, %c0_64] : memref<1x32xf32, #tpu.memory_space<vmem>>, vector<1x32xf32>
    %170 = vector.shape_cast %169 : vector<1x32xf32> to vector<32xf32>
    %171 = vector.shape_cast %170 : vector<32xf32> to vector<1x32xf32>
    %172 = vector.broadcast %171 : vector<1x32xf32> to vector<16x32xf32>
    %173 = arith.addf %168, %172 : vector<16x32xf32>
    %c0_65 = arith.constant 0 : index
    %c0_66 = arith.constant 0 : index
    %174 = vector.load %arg22[%c0_65, %c0_66] : memref<32x128xf32, #tpu.memory_space<vmem>>, vector<32x128xf32>
    %cst_67 = arith.constant dense<0.000000e+00> : vector<16x128xf32>
    %175 = tpu.matmul %167, %174, %cst_67 {dimension_numbers = #tpu.dot_dimension_numbers<[1], [0], [0], [1], [0, 0, 1, 1], [], []>} : vector<16x32xf32>, vector<32x128xf32>, vector<16x128xf32> -> vector<16x128xf32>
    %c0_68 = arith.constant 0 : index
    %c0_69 = arith.constant 0 : index
    %176 = vector.load %arg23[%c0_68, %c0_69] : memref<1x128xf32, #tpu.memory_space<vmem>>, vector<1x128xf32>
    %177 = vector.shape_cast %176 : vector<1x128xf32> to vector<128xf32>
    %178 = vector.shape_cast %177 : vector<128xf32> to vector<1x128xf32>
    %179 = vector.broadcast %178 : vector<1x128xf32> to vector<16x128xf32>
    %180 = arith.addf %175, %179 : vector<16x128xf32>
    %cst_70 = arith.constant 0.000000e+00 : f32
    %181 = vector.broadcast %cst_70 : f32 to vector<16x128xf32>
    %182 = arith.maximumf %180, %181 : vector<16x128xf32>
    %c0_71 = arith.constant 0 : index
    %c0_72 = arith.constant 0 : index
    %183 = vector.load %arg24[%c0_71, %c0_72] : memref<128x32xf32, #tpu.memory_space<vmem>>, vector<128x32xf32>
    %cst_73 = arith.constant dense<0.000000e+00> : vector<16x32xf32>
    %184 = tpu.matmul %182, %183, %cst_73 {dimension_numbers = #tpu.dot_dimension_numbers<[1], [0], [0], [1], [0, 0, 1, 1], [], []>} : vector<16x128xf32>, vector<128x32xf32>, vector<16x32xf32> -> vector<16x32xf32>
    %185 = arith.addf %173, %184 : vector<16x32xf32>
    %186 = arith.addf %167, %185 : vector<16x32xf32>
    %cst_74 = arith.constant dense<0.000000e+00> : vector<16xf32>
    %187 = vector.multi_reduction <add>, %186, %cst_74 [1] : vector<16x32xf32> to vector<16xf32>
    %188 = vector.shape_cast %187 : vector<16xf32> to vector<16x1xf32>
    %cst_75 = arith.constant 3.200000e+01 : f32
    %189 = vector.broadcast %cst_75 : f32 to vector<16x1xf32>
    %190 = arith.divf %188, %189 : vector<16x1xf32>
    %191 = vector.broadcast %190 : vector<16x1xf32> to vector<16x32xf32>
    %192 = arith.subf %186, %191 : vector<16x32xf32>
    %193 = arith.mulf %192, %192 : vector<16x32xf32>
    %cst_76 = arith.constant dense<0.000000e+00> : vector<16xf32>
    %194 = vector.multi_reduction <add>, %193, %cst_76 [1] : vector<16x32xf32> to vector<16xf32>
    %195 = vector.shape_cast %194 : vector<16xf32> to vector<16x1xf32>
    %cst_77 = arith.constant 3.200000e+01 : f32
    %196 = vector.broadcast %cst_77 : f32 to vector<16x1xf32>
    %197 = arith.divf %195, %196 : vector<16x1xf32>
    %cst_78 = arith.constant 9.99999974E-6 : f32
    %198 = vector.broadcast %cst_78 : f32 to vector<16x1xf32>
    %199 = arith.addf %197, %198 : vector<16x1xf32>
    %200 = math.rsqrt %199 : vector<16x1xf32>
    %201 = vector.broadcast %200 : vector<16x1xf32> to vector<16x32xf32>
    %202 = arith.mulf %192, %201 : vector<16x32xf32>
    %c0_79 = arith.constant 0 : index
    %c0_80 = arith.constant 0 : index
    %203 = vector.load %arg20[%c0_79, %c0_80] : memref<1x32xf32, #tpu.memory_space<vmem>>, vector<1x32xf32>
    %204 = vector.shape_cast %203 : vector<1x32xf32> to vector<32xf32>
    %205 = vector.shape_cast %204 : vector<32xf32> to vector<1x32xf32>
    %206 = vector.broadcast %205 : vector<1x32xf32> to vector<16x32xf32>
    %207 = arith.mulf %202, %206 : vector<16x32xf32>
    %c0_81 = arith.constant 0 : index
    %c0_82 = arith.constant 0 : index
    %208 = vector.load %arg21[%c0_81, %c0_82] : memref<1x32xf32, #tpu.memory_space<vmem>>, vector<1x32xf32>
    %209 = vector.shape_cast %208 : vector<1x32xf32> to vector<32xf32>
    %210 = vector.shape_cast %209 : vector<32xf32> to vector<1x32xf32>
    %211 = vector.broadcast %210 : vector<1x32xf32> to vector<16x32xf32>
    %212 = arith.addf %207, %211 : vector<16x32xf32>
    %c0_83 = arith.constant 0 : index
    %c0_84 = arith.constant 0 : index
    %c0_85 = arith.constant 0 : index
    %213 = vector.load %arg26[%c0_83, %c0_84, %c0_85] : memref<1x16x32xf32, #tpu.memory_space<vmem>>, vector<1x16x32xf32>
    %214 = vector.shape_cast %213 : vector<1x16x32xf32> to vector<16x32xf32>
    %215 = vector.shape_cast %212 : vector<16x32xf32> to vector<1x16x32xf32>
    tpu.vector_store %arg26[%c0_83, %c0_84, %c0_85], %215 {strides = array<i32>} : memref<1x16x32xf32, #tpu.memory_space<vmem>>, vector<1x16x32xf32>,
    return
  }
  func.func @transform_0(%arg0: i32, %arg1: i32) -> (i32, i32, i32) {
    %c0_i32 = arith.constant 0 : i32
    %c0_i32_0 = arith.constant 0 : i32
    %c0_i32_1 = arith.constant 0 : i32
    return %arg0, %c0_i32, %c0_i32_0 : i32, i32, i32
  }
  func.func @transform_1(%arg0: i32, %arg1: i32) -> (i32, i32, i32) {
    %c0_i32 = arith.constant 0 : i32
    %c0_i32_0 = arith.constant 0 : i32
    %c0_i32_1 = arith.constant 0 : i32
    return %arg0, %c0_i32, %c0_i32_0 : i32, i32, i32
  }
  func.func @transform_2(%arg0: i32, %arg1: i32) -> (i32, i32) {
    %c0_i32 = arith.constant 0 : i32
    %c0_i32_0 = arith.constant 0 : i32
    %c0_i32_1 = arith.constant 0 : i32
    return %c0_i32, %c0_i32_0 : i32, i32
  }
  func.func @transform_3(%arg0: i32, %arg1: i32) -> (i32, i32) {
    %c0_i32 = arith.constant 0 : i32
    %c0_i32_0 = arith.constant 0 : i32
    %c0_i32_1 = arith.constant 0 : i32
    return %c0_i32, %c0_i32_0 : i32, i32
  }
  func.func @transform_4(%arg0: i32, %arg1: i32) -> (i32, i32) {
    %c0_i32 = arith.constant 0 : i32
    %c0_i32_0 = arith.constant 0 : i32
    %c0_i32_1 = arith.constant 0 : i32
    return %c0_i32, %c0_i32_0 : i32, i32
  }
  func.func @transform_5(%arg0: i32, %arg1: i32) -> (i32, i32) {
    %c0_i32 = arith.constant 0 : i32
    %c0_i32_0 = arith.constant 0 : i32
    %c0_i32_1 = arith.constant 0 : i32
    return %c0_i32, %c0_i32_0 : i32, i32
  }
  func.func @transform_6(%arg0: i32, %arg1: i32) -> (i32, i32) {
    %c0_i32 = arith.constant 0 : i32
    %c0_i32_0 = arith.constant 0 : i32
    %c0_i32_1 = arith.constant 0 : i32
    return %c0_i32, %c0_i32_0 : i32, i32
  }
  func.func @transform_7(%arg0: i32, %arg1: i32) -> (i32, i32) {
    %c0_i32 = arith.constant 0 : i32
    %c0_i32_0 = arith.constant 0 : i32
    %c0_i32_1 = arith.constant 0 : i32
    return %c0_i32, %c0_i32_0 : i32, i32
  }
  func.func @transform_8(%arg0: i32, %arg1: i32) -> (i32, i32) {
    %c0_i32 = arith.constant 0 : i32
    %c0_i32_0 = arith.constant 0 : i32
    %c0_i32_1 = arith.constant 0 : i32
    return %c0_i32, %c0_i32_0 : i32, i32
  }
  func.func @transform_9(%arg0: i32, %arg1: i32) -> (i32, i32) {
    %c0_i32 = arith.constant 0 : i32
    %c0_i32_0 = arith.constant 0 : i32
    %c0_i32_1 = arith.constant 0 : i32
    return %c0_i32, %c0_i32_0 : i32, i32
  }
  func.func @transform_10(%arg0: i32, %arg1: i32) -> (i32, i32) {
    %c0_i32 = arith.constant 0 : i32
    %c0_i32_0 = arith.constant 0 : i32
    %c0_i32_1 = arith.constant 0 : i32
    return %c0_i32, %c0_i32_0 : i32, i32
  }
  func.func @transform_11(%arg0: i32, %arg1: i32) -> (i32, i32) {
    %c0_i32 = arith.constant 0 : i32
    %c0_i32_0 = arith.constant 0 : i32
    %c0_i32_1 = arith.constant 0 : i32
    return %c0_i32, %c0_i32_0 : i32, i32
  }
  func.func @transform_12(%arg0: i32, %arg1: i32) -> (i32, i32) {
    %c0_i32 = arith.constant 0 : i32
    %c0_i32_0 = arith.constant 0 : i32
    %c0_i32_1 = arith.constant 0 : i32
    return %c0_i32, %c0_i32_0 : i32, i32
  }
  func.func @transform_13(%arg0: i32, %arg1: i32) -> (i32, i32) {
    %c0_i32 = arith.constant 0 : i32
    %c0_i32_0 = arith.constant 0 : i32
    %c0_i32_1 = arith.constant 0 : i32
    return %c0_i32, %c0_i32_0 : i32, i32
  }
  func.func @transform_14(%arg0: i32, %arg1: i32) -> (i32, i32) {
    %c0_i32 = arith.constant 0 : i32
    %c0_i32_0 = arith.constant 0 : i32
    %c0_i32_1 = arith.constant 0 : i32
    return %c0_i32, %c0_i32_0 : i32, i32
  }
  func.func @transform_15(%arg0: i32, %arg1: i32) -> (i32, i32) {
    %c0_i32 = arith.constant 0 : i32
    %c0_i32_0 = arith.constant 0 : i32
    %c0_i32_1 = arith.constant 0 : i32
    return %c0_i32, %c0_i32_0 : i32, i32
  }
  func.func @transform_16(%arg0: i32, %arg1: i32) -> (i32, i32) {
    %c0_i32 = arith.constant 0 : i32
    %c0_i32_0 = arith.constant 0 : i32
    %c0_i32_1 = arith.constant 0 : i32
    return %c0_i32, %c0_i32_0 : i32, i32
  }
  func.func @transform_17(%arg0: i32, %arg1: i32) -> (i32, i32) {
    %c0_i32 = arith.constant 0 : i32
    %c0_i32_0 = arith.constant 0 : i32
    %c0_i32_1 = arith.constant 0 : i32
    return %c0_i32, %c0_i32_0 : i32, i32
  }
  func.func @transform_18(%arg0: i32, %arg1: i32) -> (i32, i32) {
    %c0_i32 = arith.constant 0 : i32
    %c0_i32_0 = arith.constant 0 : i32
    %c0_i32_1 = arith.constant 0 : i32
    return %c0_i32, %c0_i32_0 : i32, i32
  }
  func.func @transform_19(%arg0: i32, %arg1: i32) -> (i32, i32) {
    %c0_i32 = arith.constant 0 : i32
    %c0_i32_0 = arith.constant 0 : i32
    %c0_i32_1 = arith.constant 0 : i32
    return %c0_i32, %c0_i32_0 : i32, i32
  }
  func.func @transform_20(%arg0: i32, %arg1: i32) -> (i32, i32) {
    %c0_i32 = arith.constant 0 : i32
    %c0_i32_0 = arith.constant 0 : i32
    %c0_i32_1 = arith.constant 0 : i32
    return %c0_i32, %c0_i32_0 : i32, i32
  }
  func.func @transform_21(%arg0: i32, %arg1: i32) -> (i32, i32) {
    %c0_i32 = arith.constant 0 : i32
    %c0_i32_0 = arith.constant 0 : i32
    %c0_i32_1 = arith.constant 0 : i32
    return %c0_i32, %c0_i32_0 : i32, i32
  }
  func.func @transform_22(%arg0: i32, %arg1: i32) -> (i32, i32) {
    %c0_i32 = arith.constant 0 : i32
    %c0_i32_0 = arith.constant 0 : i32
    %c0_i32_1 = arith.constant 0 : i32
    return %c0_i32, %c0_i32_0 : i32, i32
  }
  func.func @transform_23(%arg0: i32, %arg1: i32) -> (i32, i32) {
    %c0_i32 = arith.constant 0 : i32
    %c0_i32_0 = arith.constant 0 : i32
    %c0_i32_1 = arith.constant 0 : i32
    return %c0_i32, %c0_i32_0 : i32, i32
  }
  func.func @transform_24(%arg0: i32, %arg1: i32) -> (i32, i32, i32) {
    %c0_i32 = arith.constant 0 : i32
    %c0_i32_0 = arith.constant 0 : i32
    return %arg0, %arg1, %c0_i32 : i32, i32, i32
  }
}

</mosaic_0001>

<llo_original>
// kernel: tpu_custom_call.1
$region0: #{tpu_custom_call.1}
  #allocation0 [shape = 'u32[]', space=smem, size = 0x4, offset = 0x4, fixed_abs, tag = 'smem constant byte address 0x4 - core index']
  #allocation1 [shape = 'u32[144,128]{1,0:T(1,128)}', space=vmem, size = 0x12000, scoped, tag = 'internal scratch']
  #allocation2 [shape = 'f32[4,16,8]{2,1,0:T(8,128)}', space=vmem, size = 0x8000, scoped, tag = 'scratch operand']
  #allocation3 [shape = 'f32[4,16,8]{2,1,0:T(8,128)}', space=vmem, size = 0x8000, scoped, tag = 'scratch operand']
  #allocation4 [shape = 'f32[4,32,8]{2,1,0:T(8,128)}', space=vmem, size = 0x10000, scoped, tag = 'scratch operand']
  #allocation5 [shape = 'f32[4,32,8]{2,1,0:T(8,128)}', space=vmem, size = 0x10000, scoped, tag = 'scratch operand']
  %s0 = inlined_call_operand.vmem [shape: f32[2,16,32], index: 0, kind: input, shape index: {}]
  %s1 = inlined_call_operand.vmem [shape: f32[2,32,32], index: 1, kind: input, shape index: {}]
  %s2 = inlined_call_operand.vmem [shape: f32[32,32], index: 2, kind: input, shape index: {}]
  %s3 = inlined_call_operand.hbm [shape: f32[1,32], index: 3, kind: input, shape index: {}]
  %s4 = inlined_call_operand.vmem [shape: f32[32,64], index: 4, kind: input, shape index: {}]
  %s5 = inlined_call_operand.hbm [shape: f32[1,64], index: 5, kind: input, shape index: {}]
  %s6 = inlined_call_operand.hbm [shape: f32[32,32], index: 6, kind: input, shape index: {}]
  %s7 = inlined_call_operand.hbm [shape: f32[1,32], index: 7, kind: input, shape index: {}]
  %s8 = inlined_call_operand.hbm [shape: f32[32,32], index: 8, kind: input, shape index: {}]
  %s9 = inlined_call_operand.hbm [shape: f32[1,32], index: 9, kind: input, shape index: {}]
  %s10 = inlined_call_operand.vmem [shape: f32[32,64], index: 10, kind: input, shape index: {}]
  %s11 = inlined_call_operand.hbm [shape: f32[1,64], index: 11, kind: input, shape index: {}]
  %s12 = inlined_call_operand.hbm [shape: f32[32,32], index: 12, kind: input, shape index: {}]
  %s13 = inlined_call_operand.hbm [shape: f32[1,32], index: 13, kind: input, shape index: {}]
  %s14 = inlined_call_operand.hbm [shape: f32[1,32], index: 14, kind: input, shape index: {}]
  %s15 = inlined_call_operand.hbm [shape: f32[1,32], index: 15, kind: input, shape index: {}]
  %s16 = inlined_call_operand.hbm [shape: f32[1,32], index: 16, kind: input, shape index: {}]
  %s17 = inlined_call_operand.hbm [shape: f32[1,32], index: 17, kind: input, shape index: {}]
  %s18 = inlined_call_operand.vmem [shape: f32[1,32], index: 18, kind: input, shape index: {}]
  %s19 = inlined_call_operand.vmem [shape: f32[1,32], index: 19, kind: input, shape index: {}]
  %s20 = inlined_call_operand.hbm [shape: f32[32,128], index: 20, kind: input, shape index: {}]
  %s21 = inlined_call_operand.vmem [shape: f32[1,128], index: 21, kind: input, shape index: {}]
  %s22 = inlined_call_operand.vmem [shape: f32[128,32], index: 22, kind: input, shape index: {}]
  %s23 = inlined_call_operand.vmem [shape: f32[1,32], index: 23, kind: input, shape index: {}]
  %s24 = inlined_call_operand.hbm [shape: f32[2,16,32], index: 24, kind: output, shape index: {}]
  %s25 = sld [smem:[#allocation0]]
  $region189: #{tpu_custom_call.1} parent=0
    _
  %s27 = ssub.s32 1, %s25
  %s28 = scalar_select 0, %s27, %s25
  $region1: #{tpu_custom_call.1} parent=0
    #allocation6 [shape = 'u8[512]{0}', space=vmem, size = 0x400, scoped, tag = 'input window, operand 3, single buffered']
    #allocation7 [shape = 's32[2]{0}', space=sflag, size = 0x8, scoped, tag = 'scoped memory for tpu_custom_call.1']
    #allocation8 [shape = 's32[2]{0}', space=sflag, size = 0x8, scoped, tag = 'scoped memory for tpu_custom_call.1']
    #allocation9 [shape = 'u8[512]{0}', space=vmem, size = 0x400, scoped, tag = 'input window, operand 5, single buffered']
    #allocation10 [shape = 's32[1]{0}', space=sflag, size = 0x4, scoped, tag = 'scoped memory for tpu_custom_call.1']
    #allocation11 [shape = 'u8[16384]{0}', space=vmem, size = 0x4000, scoped, tag = 'input window, operand 6, single buffered']
    #allocation12 [shape = 'u8[512]{0}', space=vmem, size = 0x400, scoped, tag = 'input window, operand 7, single buffered']
    #allocation13 [shape = 's32[1]{0}', space=sflag, size = 0x4, scoped, tag = 'scoped memory for tpu_custom_call.1']
    #allocation14 [shape = 'u8[16384]{0}', space=vmem, size = 0x4000, scoped, tag = 'input window, operand 8, single buffered']
    #allocation15 [shape = 'u8[512]{0}', space=vmem, size = 0x400, scoped, tag = 'input window, operand 9, single buffered']
    #allocation16 [shape = 's32[1]{0}', space=sflag, size = 0x4, scoped, tag = 'scoped memory for tpu_custom_call.1']
    #allocation17 [shape = 'u8[512]{0}', space=vmem, size = 0x400, scoped, tag = 'input window, operand 11, single buffered']
    #allocation18 [shape = 'u8[16384]{0}', space=vmem, size = 0x4000, scoped, tag = 'input window, operand 12, single buffered']
    #allocation19 [shape = 's32[1]{0}', space=sflag, size = 0x4, scoped, tag = 'scoped memory for tpu_custom_call.1']
    #allocation20 [shape = 'u8[512]{0}', space=vmem, size = 0x400, scoped, tag = 'input window, operand 13, single buffered']
    #allocation21 [shape = 'u8[512]{0}', space=vmem, size = 0x400, scoped, tag = 'input window, operand 14, single buffered']
    #allocation22 [shape = 's32[1]{0}', space=sflag, size = 0x4, scoped, tag = 'scoped memory for tpu_custom_call.1']
    #allocation23 [shape = 'u8[512]{0}', space=vmem, size = 0x400, scoped, tag = 'input window, operand 15, single buffered']
    #allocation24 [shape = 'u8[512]{0}', space=vmem, size = 0x400, scoped, tag = 'input window, operand 16, single buffered']
    #allocation25 [shape = 's32[1]{0}', space=sflag, size = 0x4, scoped, tag = 'scoped memory for tpu_custom_call.1']
    #allocation26 [shape = 'u8[512]{0}', space=vmem, size = 0x400, scoped, tag = 'input window, operand 17, single buffered']
    #allocation27 [shape = 'u8[16384]{0}', space=vmem, size = 0x4000, scoped, tag = 'input window, operand 20, single buffered']
    #allocation28 [shape = 's32[1]{0}', space=sflag, size = 0x4, scoped, tag = 'scoped memory for tpu_custom_call.1']
    #allocation29 [shape = 'u8[16384]{0}', space=vmem, size = 0x4000, scoped, tag = 'output window, operand 0']
    %29 = vsyncpa [#allocation7], 0
    %30 = vsyncpa [#allocation10], 0
    %31 = vsyncpa [#allocation13], 0
    %32 = vsyncpa [#allocation16], 0
    %33 = vsyncpa [#allocation19], 0
    %34 = vsyncpa [#allocation22], 0
    %35 = vsyncpa [#allocation25], 0
    %36 = vsyncpa [#allocation28], 0
    %37 = vsyncpa [#allocation8], 0
    %s38 = scalar_lea.sflag [#allocation8], 1
    %39 = vsyncpa %s38, 0
    loop: start=0, step=1, limit=4
    $region2: #{tpu_custom_call.1} parent=1 // loop_pre_header
      _
    $region3: #{tpu_custom_call.1} parent=1 // loop_header
      %s41 = sphi 0, %s45
      %p42 = scmp.ge.s32.totalorder %s41, 4
      %s48 = sphi 0, %s60
      %s49 = sphi 0, %s56
      %s50 = sphi 0, %s48
      %s51 = sphi 0, %s49
      %s52 = sphi 0, %s50
      %s53 = sphi 0, %s51
      %s63 = sphi 0, %s65
      %s66 = sphi 0, %s63
      %s67 = sphi 0, %s66
      %s83 = sphi 0, %s67
      %s89 = sphi 0, %s91
      %s92 = sphi 0, %s89
      %s93 = sphi 0, %s92
      %s109 = sphi 0, %s93
      %s113 = sphi 0, %s113
      %s115 = sphi 0, %s113
      %s116 = sphi 0, %s115
      %s130 = sphi 0, %s116
      %s134 = sphi 0, %s134
      %s136 = sphi 0, %s134
      %s137 = sphi 0, %s136
      %s151 = sphi 0, %s137
      %s155 = sphi 0, %s155
      %s157 = sphi 0, %s155
      %s158 = sphi 0, %s157
      %s172 = sphi 0, %s158
      %s176 = sphi 0, %s176
      %s178 = sphi 0, %s176
      %s179 = sphi 0, %s178
      %s193 = sphi 0, %s179
      %s197 = sphi 0, %s197
      %s199 = sphi 0, %s197
      %s200 = sphi 0, %s199
      %s214 = sphi 0, %s200
      %s218 = sphi 0, %s218
      %s220 = sphi 0, %s218
      %s221 = sphi 0, %s220
      %s235 = sphi 0, %s221
      %s239 = sphi 0, %s239
      %s241 = sphi 0, %s239
      %s242 = sphi 0, %s241
      %s256 = sphi 0, %s242
      %s260 = sphi 0, %s260
      %s262 = sphi 0, %s260
      %s263 = sphi 0, %s262
      %s277 = sphi 0, %s263
      %s281 = sphi 0, %s281
      %s283 = sphi 0, %s281
      %s284 = sphi 0, %s283
      %s298 = sphi 0, %s284
      %s302 = sphi 0, %s302
      %s304 = sphi 0, %s302
      %s305 = sphi 0, %s304
      %s319 = sphi 0, %s305
      %s323 = sphi 0, %s323
      %s325 = sphi 0, %s323
      %s326 = sphi 0, %s325
      %s340 = sphi 0, %s326
      %s344 = sphi 0, %s344
      %s346 = sphi 0, %s344
      %s347 = sphi 0, %s346
      %s361 = sphi 0, %s347
      %s365 = sphi 0, %s365
      %s367 = sphi 0, %s365
      %s368 = sphi 0, %s367
      %s382 = sphi 0, %s368
      %s386 = sphi 0, %s386
      %s388 = sphi 0, %s386
      %s389 = sphi 0, %s388
      %s403 = sphi 0, %s389
      %s407 = sphi 0, %s407
      %s409 = sphi 0, %s407
      %s410 = sphi 0, %s409
      %s424 = sphi 0, %s410
      %s428 = sphi 0, %s428
      %s430 = sphi 0, %s428
      %s431 = sphi 0, %s430
      %s445 = sphi 0, %s431
      %s449 = sphi 0, %s449
      %s451 = sphi 0, %s449
      %s452 = sphi 0, %s451
      %s466 = sphi 0, %s452
      %s470 = sphi 0, %s470
      %s472 = sphi 0, %s470
      %s473 = sphi 0, %s472
      %s487 = sphi 0, %s473
      %s491 = sphi 0, %s491
      %s493 = sphi 0, %s491
      %s494 = sphi 0, %s493
      %s508 = sphi 0, %s494
      %s512 = sphi 0, %s512
      %s514 = sphi 0, %s512
      %s515 = sphi 0, %s514
      %s529 = sphi 0, %s515
      %s533 = sphi 0, %s533
      %s535 = sphi 0, %s533
      %s536 = sphi 0, %s535
      %s550 = sphi 0, %s536
      %s554 = sphi 0, %s554
      %s556 = sphi 0, %s554
      %s557 = sphi 0, %s556
      %s571 = sphi 0, %s557
      %s579 = sphi 0, %s581
      %s582 = sphi 0, %s579
      %s583 = sphi 0, %s582
      %s599 = sphi 0, %s583
    $region4: #{tpu_custom_call.1} parent=1 // loop_header_branch
      %44 = sbr.rel (%p42) target = $region8
    $region5: #{tpu_custom_call.1} parent=1 // loop_body
      %s46 = ssub.s32 %s41, 1
      %s47 = ssub.s32 %s41, 2
      %s54 = sadd.s32 1, %s49
      %p55 = scmp.ge.s32.totalorder %s54, 1
      %s56 = scalar_select %p55, 0, %s54
      %s57 = sadd.s32 1, %s48
      %s58 = scalar_select %p55, %s57, %s48
      %p59 = scmp.ge.s32.totalorder %s58, 2
      %s60 = scalar_select %p59, 0, %s58
      %s61 = ssub.s32 %s48, %s60
      %p62 = scmp.eq.s32.totalorder %s61, 0
      %s64 = sadd.s32 %s63, 1
      %s65 = scalar_select %p62, %s63, %s64
      %p68 = pneg %p62
      %p69 = scmp.eq.s32.totalorder %s41, 1
      %p70 = por %p68, %p69
      %p71 = scmp.ne.s32.totalorder %s63, %s66
      %p72 = scmp.eq.s32.totalorder %s41, 0
      %p73 = por %p71, %p72
      %p74 = scmp.ne.s32.totalorder %s63, %s66
      %p75 = scmp.eq.s32.totalorder %s46, 1
      %p76 = por %p74, %p75
      %p77 = scmp.ne.s32.totalorder %s66, %s67
      %p78 = scmp.eq.s32.totalorder %s46, 0
      %p79 = por %p77, %p78
      %p80 = scmp.ne.s32.totalorder %s66, %s67
      %p81 = scmp.eq.s32.totalorder %s47, 1
      %p82 = por %p80, %p81
      %p84 = scmp.ne.s32.totalorder %s67, %s83
      %p85 = scmp.eq.s32.totalorder %s47, 0
      %p86 = por %p84, %p85
      %s87 = ssub.s32 %s48, %s60
      %p88 = scmp.eq.s32.totalorder %s87, 0
      %s90 = sadd.s32 %s89, 1
      %s91 = scalar_select %p88, %s89, %s90
      %p94 = pneg %p88
      %p95 = scmp.eq.s32.totalorder %s41, 1
      %p96 = por %p94, %p95
      %p97 = scmp.ne.s32.totalorder %s89, %s92
      %p98 = scmp.eq.s32.totalorder %s41, 0
      %p99 = por %p97, %p98
      %p100 = scmp.ne.s32.totalorder %s89, %s92
      %p101 = scmp.eq.s32.totalorder %s46, 1
      %p102 = por %p100, %p101
      %p103 = scmp.ne.s32.totalorder %s92, %s93
      %p104 = scmp.eq.s32.totalorder %s46, 0
      %p105 = por %p103, %p104
      %p106 = scmp.ne.s32.totalorder %s92, %s93
      %p107 = scmp.eq.s32.totalorder %s47, 1
      %p108 = por %p106, %p107
      %p110 = scmp.ne.s32.totalorder %s93, %s109
      %p111 = scmp.eq.s32.totalorder %s47, 0
      %p112 = por %p110, %p111
      %s114 = sadd.s32 %s113, 1
      %p117 = scmp.eq.s32.totalorder %s41, 1
      %p118 = scmp.ne.s32.totalorder %s113, %s115
      %p119 = scmp.eq.s32.totalorder %s41, 0
      %p120 = por %p118, %p119
      %p121 = scmp.ne.s32.totalorder %s113, %s115
      %p122 = scmp.eq.s32.totalorder %s46, 1
      %p123 = por %p121, %p122
      %p124 = scmp.ne.s32.totalorder %s115, %s116
      %p125 = scmp.eq.s32.totalorder %s46, 0
      %p126 = por %p124, %p125
      %p127 = scmp.ne.s32.totalorder %s115, %s116
      %p128 = scmp.eq.s32.totalorder %s47, 1
      %p129 = por %p127, %p128
      %p131 = scmp.ne.s32.totalorder %s116, %s130
      %p132 = scmp.eq.s32.totalorder %s47, 0
      %p133 = por %p131, %p132
      %s135 = sadd.s32 %s134, 1
      %p138 = scmp.eq.s32.totalorder %s41, 1
      %p139 = scmp.ne.s32.totalorder %s134, %s136
      %p140 = scmp.eq.s32.totalorder %s41, 0
      %p141 = por %p139, %p140
      %p142 = scmp.ne.s32.totalorder %s134, %s136
      %p143 = scmp.eq.s32.totalorder %s46, 1
      %p144 = por %p142, %p143
      %p145 = scmp.ne.s32.totalorder %s136, %s137
      %p146 = scmp.eq.s32.totalorder %s46, 0
      %p147 = por %p145, %p146
      %p148 = scmp.ne.s32.totalorder %s136, %s137
      %p149 = scmp.eq.s32.totalorder %s47, 1
      %p150 = por %p148, %p149
      %p152 = scmp.ne.s32.totalorder %s137, %s151
      %p153 = scmp.eq.s32.totalorder %s47, 0
      %p154 = por %p152, %p153
      %s156 = sadd.s32 %s155, 1
      %p159 = scmp.eq.s32.totalorder %s41, 1
      %p160 = scmp.ne.s32.totalorder %s155, %s157
      %p161 = scmp.eq.s32.totalorder %s41, 0
      %p162 = por %p160, %p161
      %p163 = scmp.ne.s32.totalorder %s155, %s157
      %p164 = scmp.eq.s32.totalorder %s46, 1
      %p165 = por %p163, %p164
      %p166 = scmp.ne.s32.totalorder %s157, %s158
      %p167 = scmp.eq.s32.totalorder %s46, 0
      %p168 = por %p166, %p167
      %p169 = scmp.ne.s32.totalorder %s157, %s158
      %p170 = scmp.eq.s32.totalorder %s47, 1
      %p171 = por %p169, %p170
      %p173 = scmp.ne.s32.totalorder %s158, %s172
      %p174 = scmp.eq.s32.totalorder %s47, 0
      %p175 = por %p173, %p174
      %s177 = sadd.s32 %s176, 1
      %p180 = scmp.eq.s32.totalorder %s41, 1
      %p181 = scmp.ne.s32.totalorder %s176, %s178
      %p182 = scmp.eq.s32.totalorder %s41, 0
      %p183 = por %p181, %p182
      %p184 = scmp.ne.s32.totalorder %s176, %s178
      %p185 = scmp.eq.s32.totalorder %s46, 1
      %p186 = por %p184, %p185
      %p187 = scmp.ne.s32.totalorder %s178, %s179
      %p188 = scmp.eq.s32.totalorder %s46, 0
      %p189 = por %p187, %p188
      %p190 = scmp.ne.s32.totalorder %s178, %s179
      %p191 = scmp.eq.s32.totalorder %s47, 1
      %p192 = por %p190, %p191
      %p194 = scmp.ne.s32.totalorder %s179, %s193
      %p195 = scmp.eq.s32.totalorder %s47, 0
      %p196 = por %p194, %p195
      %s198 = sadd.s32 %s197, 1
      %p201 = scmp.eq.s32.totalorder %s41, 1
      %p202 = scmp.ne.s32.totalorder %s197, %s199
      %p203 = scmp.eq.s32.totalorder %s41, 0
      %p204 = por %p202, %p203
      %p205 = scmp.ne.s32.totalorder %s197, %s199
      %p206 = scmp.eq.s32.totalorder %s46, 1
      %p207 = por %p205, %p206
      %p208 = scmp.ne.s32.totalorder %s199, %s200
      %p209 = scmp.eq.s32.totalorder %s46, 0
      %p210 = por %p208, %p209
      %p211 = scmp.ne.s32.totalorder %s199, %s200
      %p212 = scmp.eq.s32.totalorder %s47, 1
      %p213 = por %p211, %p212
      %p215 = scmp.ne.s32.totalorder %s200, %s214
      %p216 = scmp.eq.s32.totalorder %s47, 0
      %p217 = por %p215, %p216
      %s219 = sadd.s32 %s218, 1
      %p222 = scmp.eq.s32.totalorder %s41, 1
      %p223 = scmp.ne.s32.totalorder %s218, %s220
      %p224 = scmp.eq.s32.totalorder %s41, 0
      %p225 = por %p223, %p224
      %p226 = scmp.ne.s32.totalorder %s218, %s220
      %p227 = scmp.eq.s32.totalorder %s46, 1
      %p228 = por %p226, %p227
      %p229 = scmp.ne.s32.totalorder %s220, %s221
      %p230 = scmp.eq.s32.totalorder %s46, 0
      %p231 = por %p229, %p230
      %p232 = scmp.ne.s32.totalorder %s220, %s221
      %p233 = scmp.eq.s32.totalorder %s47, 1
      %p234 = por %p232, %p233
      %p236 = scmp.ne.s32.totalorder %s221, %s235
      %p237 = scmp.eq.s32.totalorder %s47, 0
      %p238 = por %p236, %p237
      %s240 = sadd.s32 %s239, 1
      %p243 = scmp.eq.s32.totalorder %s41, 1
      %p244 = scmp.ne.s32.totalorder %s239, %s241
      %p245 = scmp.eq.s32.totalorder %s41, 0
      %p246 = por %p244, %p245
      %p247 = scmp.ne.s32.totalorder %s239, %s241
      %p248 = scmp.eq.s32.totalorder %s46, 1
      %p249 = por %p247, %p248
      %p250 = scmp.ne.s32.totalorder %s241, %s242
      %p251 = scmp.eq.s32.totalorder %s46, 0
      %p252 = por %p250, %p251
      %p253 = scmp.ne.s32.totalorder %s241, %s242
      %p254 = scmp.eq.s32.totalorder %s47, 1
      %p255 = por %p253, %p254
      %p257 = scmp.ne.s32.totalorder %s242, %s256
      %p258 = scmp.eq.s32.totalorder %s47, 0
      %p259 = por %p257, %p258
      %s261 = sadd.s32 %s260, 1
      %p264 = scmp.eq.s32.totalorder %s41, 1
      %p265 = scmp.ne.s32.totalorder %s260, %s262
      %p266 = scmp.eq.s32.totalorder %s41, 0
      %p267 = por %p265, %p266
      %p268 = scmp.ne.s32.totalorder %s260, %s262
      %p269 = scmp.eq.s32.totalorder %s46, 1
      %p270 = por %p268, %p269
      %p271 = scmp.ne.s32.totalorder %s262, %s263
      %p272 = scmp.eq.s32.totalorder %s46, 0
      %p273 = por %p271, %p272
      %p274 = scmp.ne.s32.totalorder %s262, %s263
      %p275 = scmp.eq.s32.totalorder %s47, 1
      %p276 = por %p274, %p275
      %p278 = scmp.ne.s32.totalorder %s263, %s277
      %p279 = scmp.eq.s32.totalorder %s47, 0
      %p280 = por %p278, %p279
      %s282 = sadd.s32 %s281, 1
      %p285 = scmp.eq.s32.totalorder %s41, 1
      %p286 = scmp.ne.s32.totalorder %s281, %s283
      %p287 = scmp.eq.s32.totalorder %s41, 0
      %p288 = por %p286, %p287
      %p289 = scmp.ne.s32.totalorder %s281, %s283
      %p290 = scmp.eq.s32.totalorder %s46, 1
      %p291 = por %p289, %p290
      %p292 = scmp.ne.s32.totalorder %s283, %s284
      %p293 = scmp.eq.s32.totalorder %s46, 0
      %p294 = por %p292, %p293
      %p295 = scmp.ne.s32.totalorder %s283, %s284
      %p296 = scmp.eq.s32.totalorder %s47, 1
      %p297 = por %p295, %p296
      %p299 = scmp.ne.s32.totalorder %s284, %s298
      %p300 = scmp.eq.s32.totalorder %s47, 0
      %p301 = por %p299, %p300
      %s303 = sadd.s32 %s302, 1
      %p306 = scmp.eq.s32.totalorder %s41, 1
      %p307 = scmp.ne.s32.totalorder %s302, %s304
      %p308 = scmp.eq.s32.totalorder %s41, 0
      %p309 = por %p307, %p308
      %p310 = scmp.ne.s32.totalorder %s302, %s304
      %p311 = scmp.eq.s32.totalorder %s46, 1
      %p312 = por %p310, %p311
      %p313 = scmp.ne.s32.totalorder %s304, %s305
      %p314 = scmp.eq.s32.totalorder %s46, 0
      %p315 = por %p313, %p314
      %p316 = scmp.ne.s32.totalorder %s304, %s305
      %p317 = scmp.eq.s32.totalorder %s47, 1
      %p318 = por %p316, %p317
      %p320 = scmp.ne.s32.totalorder %s305, %s319
      %p321 = scmp.eq.s32.totalorder %s47, 0
      %p322 = por %p320, %p321
      %s324 = sadd.s32 %s323, 1
      %p327 = scmp.eq.s32.totalorder %s41, 1
      %p328 = scmp.ne.s32.totalorder %s323, %s325
      %p329 = scmp.eq.s32.totalorder %s41, 0
      %p330 = por %p328, %p329
      %p331 = scmp.ne.s32.totalorder %s323, %s325
      %p332 = scmp.eq.s32.totalorder %s46, 1
      %p333 = por %p331, %p332
      %p334 = scmp.ne.s32.totalorder %s325, %s326
      %p335 = scmp.eq.s32.totalorder %s46, 0
      %p336 = por %p334, %p335
      %p337 = scmp.ne.s32.totalorder %s325, %s326
      %p338 = scmp.eq.s32.totalorder %s47, 1
      %p339 = por %p337, %p338
      %p341 = scmp.ne.s32.totalorder %s326, %s340
      %p342 = scmp.eq.s32.totalorder %s47, 0
      %p343 = por %p341, %p342
      %s345 = sadd.s32 %s344, 1
      %p348 = scmp.eq.s32.totalorder %s41, 1
      %p349 = scmp.ne.s32.totalorder %s344, %s346
      %p350 = scmp.eq.s32.totalorder %s41, 0
      %p351 = por %p349, %p350
      %p352 = scmp.ne.s32.totalorder %s344, %s346
      %p353 = scmp.eq.s32.totalorder %s46, 1
      %p354 = por %p352, %p353
      %p355 = scmp.ne.s32.totalorder %s346, %s347
      %p356 = scmp.eq.s32.totalorder %s46, 0
      %p357 = por %p355, %p356
      %p358 = scmp.ne.s32.totalorder %s346, %s347
      %p359 = scmp.eq.s32.totalorder %s47, 1
      %p360 = por %p358, %p359
      %p362 = scmp.ne.s32.totalorder %s347, %s361
      %p363 = scmp.eq.s32.totalorder %s47, 0
      %p364 = por %p362, %p363
      %s366 = sadd.s32 %s365, 1
      %p369 = scmp.eq.s32.totalorder %s41, 1
      %p370 = scmp.ne.s32.totalorder %s365, %s367
      %p371 = scmp.eq.s32.totalorder %s41, 0
      %p372 = por %p370, %p371
      %p373 = scmp.ne.s32.totalorder %s365, %s367
      %p374 = scmp.eq.s32.totalorder %s46, 1
      %p375 = por %p373, %p374
      %p376 = scmp.ne.s32.totalorder %s367, %s368
      %p377 = scmp.eq.s32.totalorder %s46, 0
      %p378 = por %p376, %p377
      %p379 = scmp.ne.s32.totalorder %s367, %s368
      %p380 = scmp.eq.s32.totalorder %s47, 1
      %p381 = por %p379, %p380
      %p383 = scmp.ne.s32.totalorder %s368, %s382
      %p384 = scmp.eq.s32.totalorder %s47, 0
      %p385 = por %p383, %p384
      %s387 = sadd.s32 %s386, 1
      %p390 = scmp.eq.s32.totalorder %s41, 1
      %p391 = scmp.ne.s32.totalorder %s386, %s388
      %p392 = scmp.eq.s32.totalorder %s41, 0
      %p393 = por %p391, %p392
      %p394 = scmp.ne.s32.totalorder %s386, %s388
      %p395 = scmp.eq.s32.totalorder %s46, 1
      %p396 = por %p394, %p395
      %p397 = scmp.ne.s32.totalorder %s388, %s389
      %p398 = scmp.eq.s32.totalorder %s46, 0
      %p399 = por %p397, %p398
      %p400 = scmp.ne.s32.totalorder %s388, %s389
      %p401 = scmp.eq.s32.totalorder %s47, 1
      %p402 = por %p400, %p401
      %p404 = scmp.ne.s32.totalorder %s389, %s403
      %p405 = scmp.eq.s32.totalorder %s47, 0
      %p406 = por %p404, %p405
      %s408 = sadd.s32 %s407, 1
      %p411 = scmp.eq.s32.totalorder %s41, 1
      %p412 = scmp.ne.s32.totalorder %s407, %s409
      %p413 = scmp.eq.s32.totalorder %s41, 0
      %p414 = por %p412, %p413
      %p415 = scmp.ne.s32.totalorder %s407, %s409
      %p416 = scmp.eq.s32.totalorder %s46, 1
      %p417 = por %p415, %p416
      %p418 = scmp.ne.s32.totalorder %s409, %s410
      %p419 = scmp.eq.s32.totalorder %s46, 0
      %p420 = por %p418, %p419
      %p421 = scmp.ne.s32.totalorder %s409, %s410
      %p422 = scmp.eq.s32.totalorder %s47, 1
      %p423 = por %p421, %p422
      %p425 = scmp.ne.s32.totalorder %s410, %s424
      %p426 = scmp.eq.s32.totalorder %s47, 0
      %p427 = por %p425, %p426
      %s429 = sadd.s32 %s428, 1
      %p432 = scmp.eq.s32.totalorder %s41, 1
      %p433 = scmp.ne.s32.totalorder %s428, %s430
      %p434 = scmp.eq.s32.totalorder %s41, 0
      %p435 = por %p433, %p434
      %p436 = scmp.ne.s32.totalorder %s428, %s430
      %p437 = scmp.eq.s32.totalorder %s46, 1
      %p438 = por %p436, %p437
      %p439 = scmp.ne.s32.totalorder %s430, %s431
      %p440 = scmp.eq.s32.totalorder %s46, 0
      %p441 = por %p439, %p440
      %p442 = scmp.ne.s32.totalorder %s430, %s431
      %p443 = scmp.eq.s32.totalorder %s47, 1
      %p444 = por %p442, %p443
      %p446 = scmp.ne.s32.totalorder %s431, %s445
      %p447 = scmp.eq.s32.totalorder %s47, 0
      %p448 = por %p446, %p447
      %s450 = sadd.s32 %s449, 1
      %p453 = scmp.eq.s32.totalorder %s41, 1
      %p454 = scmp.ne.s32.totalorder %s449, %s451
      %p455 = scmp.eq.s32.totalorder %s41, 0
      %p456 = por %p454, %p455
      %p457 = scmp.ne.s32.totalorder %s449, %s451
      %p458 = scmp.eq.s32.totalorder %s46, 1
      %p459 = por %p457, %p458
      %p460 = scmp.ne.s32.totalorder %s451, %s452
      %p461 = scmp.eq.s32.totalorder %s46, 0
      %p462 = por %p460, %p461
      %p463 = scmp.ne.s32.totalorder %s451, %s452
      %p464 = scmp.eq.s32.totalorder %s47, 1
      %p465 = por %p463, %p464
      %p467 = scmp.ne.s32.totalorder %s452, %s466
      %p468 = scmp.eq.s32.totalorder %s47, 0
      %p469 = por %p467, %p468
      %s471 = sadd.s32 %s470, 1
      %p474 = scmp.eq.s32.totalorder %s41, 1
      %p475 = scmp.ne.s32.totalorder %s470, %s472
      %p476 = scmp.eq.s32.totalorder %s41, 0
      %p477 = por %p475, %p476
      %p478 = scmp.ne.s32.totalorder %s470, %s472
      %p479 = scmp.eq.s32.totalorder %s46, 1
      %p480 = por %p478, %p479
      %p481 = scmp.ne.s32.totalorder %s472, %s473
      %p482 = scmp.eq.s32.totalorder %s46, 0
      %p483 = por %p481, %p482
      %p484 = scmp.ne.s32.totalorder %s472, %s473
      %p485 = scmp.eq.s32.totalorder %s47, 1
      %p486 = por %p484, %p485
      %p488 = scmp.ne.s32.totalorder %s473, %s487
      %p489 = scmp.eq.s32.totalorder %s47, 0
      %p490 = por %p488, %p489
      %s492 = sadd.s32 %s491, 1
      %p495 = scmp.eq.s32.totalorder %s41, 1
      %p496 = scmp.ne.s32.totalorder %s491, %s493
      %p497 = scmp.eq.s32.totalorder %s41, 0
      %p498 = por %p496, %p497
      %p499 = scmp.ne.s32.totalorder %s491, %s493
      %p500 = scmp.eq.s32.totalorder %s46, 1
      %p501 = por %p499, %p500
      %p502 = scmp.ne.s32.totalorder %s493, %s494
      %p503 = scmp.eq.s32.totalorder %s46, 0
      %p504 = por %p502, %p503
      %p505 = scmp.ne.s32.totalorder %s493, %s494
      %p506 = scmp.eq.s32.totalorder %s47, 1
      %p507 = por %p505, %p506
      %p509 = scmp.ne.s32.totalorder %s494, %s508
      %p510 = scmp.eq.s32.totalorder %s47, 0
      %p511 = por %p509, %p510
      %s513 = sadd.s32 %s512, 1
      %p516 = scmp.eq.s32.totalorder %s41, 1
      %p517 = scmp.ne.s32.totalorder %s512, %s514
      %p518 = scmp.eq.s32.totalorder %s41, 0
      %p519 = por %p517, %p518
      %p520 = scmp.ne.s32.totalorder %s512, %s514
      %p521 = scmp.eq.s32.totalorder %s46, 1
      %p522 = por %p520, %p521
      %p523 = scmp.ne.s32.totalorder %s514, %s515
      %p524 = scmp.eq.s32.totalorder %s46, 0
      %p525 = por %p523, %p524
      %p526 = scmp.ne.s32.totalorder %s514, %s515
      %p527 = scmp.eq.s32.totalorder %s47, 1
      %p528 = por %p526, %p527
      %p530 = scmp.ne.s32.totalorder %s515, %s529
      %p531 = scmp.eq.s32.totalorder %s47, 0
      %p532 = por %p530, %p531
      %s534 = sadd.s32 %s533, 1
      %p537 = scmp.eq.s32.totalorder %s41, 1
      %p538 = scmp.ne.s32.totalorder %s533, %s535
      %p539 = scmp.eq.s32.totalorder %s41, 0
      %p540 = por %p538, %p539
      %p541 = scmp.ne.s32.totalorder %s533, %s535
      %p542 = scmp.eq.s32.totalorder %s46, 1
      %p543 = por %p541, %p542
      %p544 = scmp.ne.s32.totalorder %s535, %s536
      %p545 = scmp.eq.s32.totalorder %s46, 0
      %p546 = por %p544, %p545
      %p547 = scmp.ne.s32.totalorder %s535, %s536
      %p548 = scmp.eq.s32.totalorder %s47, 1
      %p549 = por %p547, %p548
      %p551 = scmp.ne.s32.totalorder %s536, %s550
      %p552 = scmp.eq.s32.totalorder %s47, 0
      %p553 = por %p551, %p552
      %s555 = sadd.s32 %s554, 1
      %p558 = scmp.eq.s32.totalorder %s41, 1
      %p559 = scmp.ne.s32.totalorder %s554, %s556
      %p560 = scmp.eq.s32.totalorder %s41, 0
      %p561 = por %p559, %p560
      %p562 = scmp.ne.s32.totalorder %s554, %s556
      %p563 = scmp.eq.s32.totalorder %s46, 1
      %p564 = por %p562, %p563
      %p565 = scmp.ne.s32.totalorder %s556, %s557
      %p566 = scmp.eq.s32.totalorder %s46, 0
      %p567 = por %p565, %p566
      %p568 = scmp.ne.s32.totalorder %s556, %s557
      %p569 = scmp.eq.s32.totalorder %s47, 1
      %p570 = por %p568, %p569
      %p572 = scmp.ne.s32.totalorder %s557, %s571
      %p573 = scmp.eq.s32.totalorder %s47, 0
      %p574 = por %p572, %p573
      %s575 = ssub.s32 %s48, %s60
      %s576 = ssub.s32 %s49, %s56
      %s577 = sor.u32 %s575, %s576
      %p578 = scmp.eq.s32.totalorder %s577, 0
      %s580 = sadd.s32 %s579, 1
      %s581 = scalar_select %p578, %s579, %s580
      %p584 = pneg %p578
      %p585 = scmp.eq.s32.totalorder %s41, 1
      %p586 = por %p584, %p585
      %p587 = scmp.ne.s32.totalorder %s579, %s582
      %p588 = scmp.eq.s32.totalorder %s41, 0
      %p589 = por %p587, %p588
      %p590 = scmp.ne.s32.totalorder %s579, %s582
      %p591 = scmp.eq.s32.totalorder %s46, 1
      %p592 = por %p590, %p591
      %p593 = scmp.ne.s32.totalorder %s582, %s583
      %p594 = scmp.eq.s32.totalorder %s46, 0
      %p595 = por %p593, %p594
      %p596 = scmp.ne.s32.totalorder %s582, %s583
      %p597 = scmp.eq.s32.totalorder %s47, 1
      %p598 = por %p596, %p597
      %p600 = scmp.ne.s32.totalorder %s583, %s599
      %p601 = scmp.eq.s32.totalorder %s47, 0
      %p602 = por %p600, %p601
      %p603 = scmp.le.s32.totalorder 1, %s41
      %p604 = scmp.lt.s32.totalorder %s41, 3
      %p605 = pnand %p603, %p604
      %p606 = pneg %p605
      // Predicated region
      $region9: #{tpu_custom_call.1} parent=5 // pred_check
        _
      $region10: #{tpu_custom_call.1} parent=5 // pred_check_branch
        %608 = sbr.rel (%p605) target = $region12
      $region11: #{tpu_custom_call.1} parent=5 // pred_region
        %s609 = ssub.s32 %s41, 1
        // Predicated region
        $region13: #{tpu_custom_call.1} parent=11 // pred_check
          %p610 = pneg %p79
        $region14: #{tpu_custom_call.1} parent=11 // pred_check_branch
          %612 = sbr.rel (%p610) target = $region16
        $region15: #{tpu_custom_call.1} parent=11 // pred_region
          %p613 = scmp.lt.s32.totalorder %s50, 1
          %s614 = scalar_select %p613, %s50, 1
          %s615 = smul.addr %s614, 2
          %s616 = smul.addr %s615, 8
          %s617 = scalar_lea.vmem %s0, %s616
        $region16: #{tpu_custom_call.1} parent=11 // pred_fallthru
          _
        // Predicated region
        $region17: #{tpu_custom_call.1} parent=11 // pred_check
          %p618 = pneg %p105
        $region18: #{tpu_custom_call.1} parent=11 // pred_check_branch
          %620 = sbr.rel (%p618) target = $region20
        $region19: #{tpu_custom_call.1} parent=11 // pred_region
          %p621 = scmp.lt.s32.totalorder %s50, 1
          %s622 = scalar_select %p621, %s50, 1
          %s623 = smul.addr %s622, 4
          %s624 = smul.addr %s623, 8
          %s625 = scalar_lea.vmem %s1, %s624
        $region20: #{tpu_custom_call.1} parent=11 // pred_fallthru
          _
        // Predicated region
        $region21: #{tpu_custom_call.1} parent=11 // pred_check
          %p626 = pneg %p126
        $region22: #{tpu_custom_call.1} parent=11 // pred_check_branch
          %628 = sbr.rel (%p626) target = $region24
        $region23: #{tpu_custom_call.1} parent=11 // pred_region
          _
        $region24: #{tpu_custom_call.1} parent=11 // pred_fallthru
          _
        // Predicated region
        $region25: #{tpu_custom_call.1} parent=11 // pred_check
          %p629 = pneg %p147
        $region26: #{tpu_custom_call.1} parent=11 // pred_check_branch
          %631 = sbr.rel (%p629) target = $region28
        $region27: #{tpu_custom_call.1} parent=11 // pred_region
          %s633 = ssub.s32 16, 16
          %634 = vsyncadd [#allocation7], %s633
          %s636 = sshll.u32 [#allocation6], 4
          %s637 = int_to_ptr.vmem [resolvable:$true] %s636
          %639 = dma.hbm_to_vmem [thread:$0]  %s3, 16, %s637, [#allocation7]
        $region28: #{tpu_custom_call.1} parent=11 // pred_fallthru
          _
        // Predicated region
        $region29: #{tpu_custom_call.1} parent=11 // pred_check
          %p640 = pneg %p168
        $region30: #{tpu_custom_call.1} parent=11 // pred_check_branch
          %642 = sbr.rel (%p640) target = $region32
        $region31: #{tpu_custom_call.1} parent=11 // pred_region
          _
        $region32: #{tpu_custom_call.1} parent=11 // pred_fallthru
          _
        // Predicated region
        $region33: #{tpu_custom_call.1} parent=11 // pred_check
          %p643 = pneg %p189
        $region34: #{tpu_custom_call.1} parent=11 // pred_check_branch
          %645 = sbr.rel (%p643) target = $region36
        $region35: #{tpu_custom_call.1} parent=11 // pred_region
          %s647 = ssub.s32 16, 16
          %648 = vsyncadd [#allocation10], %s647
          %s650 = sshll.u32 [#allocation9], 4
          %s651 = int_to_ptr.vmem [resolvable:$true] %s650
          %653 = dma.hbm_to_vmem [thread:$0]  %s5, 16, %s651, [#allocation10]
        $region36: #{tpu_custom_call.1} parent=11 // pred_fallthru
          _
        // Predicated region
        $region37: #{tpu_custom_call.1} parent=11 // pred_check
          %p654 = pneg %p210
        $region38: #{tpu_custom_call.1} parent=11 // pred_check_branch
          %656 = sbr.rel (%p654) target = $region40
        $region39: #{tpu_custom_call.1} parent=11 // pred_region
          %s658 = ssub.s32 512, 512
          %659 = vsyncadd [#allocation10], %s658
          %s660 = sshll.u32 [#allocation11], 4
          %s661 = int_to_ptr.vmem [resolvable:$true] %s660
          %666 = dma.hbm_to_vmem [thread:$0]  %s6, 512, %s661, [#allocation10], 128, 128, 8
        $region40: #{tpu_custom_call.1} parent=11 // pred_fallthru
          _
        // Predicated region
        $region41: #{tpu_custom_call.1} parent=11 // pred_check
          %p667 = pneg %p231
        $region42: #{tpu_custom_call.1} parent=11 // pred_check_branch
          %669 = sbr.rel (%p667) target = $region44
        $region43: #{tpu_custom_call.1} parent=11 // pred_region
          %s671 = ssub.s32 16, 16
          %672 = vsyncadd [#allocation13], %s671
          %s674 = sshll.u32 [#allocation12], 4
          %s675 = int_to_ptr.vmem [resolvable:$true] %s674
          %677 = dma.hbm_to_vmem [thread:$0]  %s7, 16, %s675, [#allocation13]
        $region44: #{tpu_custom_call.1} parent=11 // pred_fallthru
          _
        // Predicated region
        $region45: #{tpu_custom_call.1} parent=11 // pred_check
          %p678 = pneg %p252
        $region46: #{tpu_custom_call.1} parent=11 // pred_check_branch
          %680 = sbr.rel (%p678) target = $region48
        $region47: #{tpu_custom_call.1} parent=11 // pred_region
          %s682 = ssub.s32 512, 512
          %683 = vsyncadd [#allocation13], %s682
          %s684 = sshll.u32 [#allocation14], 4
          %s685 = int_to_ptr.vmem [resolvable:$true] %s684
          %690 = dma.hbm_to_vmem [thread:$0]  %s8, 512, %s685, [#allocation13], 128, 128, 8
        $region48: #{tpu_custom_call.1} parent=11 // pred_fallthru
          _
        // Predicated region
        $region49: #{tpu_custom_call.1} parent=11 // pred_check
          %p691 = pneg %p273
        $region50: #{tpu_custom_call.1} parent=11 // pred_check_branch
          %693 = sbr.rel (%p691) target = $region52
        $region51: #{tpu_custom_call.1} parent=11 // pred_region
          %s695 = ssub.s32 16, 16
          %696 = vsyncadd [#allocation16], %s695
          %s698 = sshll.u32 [#allocation15], 4
          %s699 = int_to_ptr.vmem [resolvable:$true] %s698
          %701 = dma.hbm_to_vmem [thread:$0]  %s9, 16, %s699, [#allocation16]
        $region52: #{tpu_custom_call.1} parent=11 // pred_fallthru
          _
        // Predicated region
        $region53: #{tpu_custom_call.1} parent=11 // pred_check
          %p702 = pneg %p294
        $region54: #{tpu_custom_call.1} parent=11 // pred_check_branch
          %704 = sbr.rel (%p702) target = $region56
        $region55: #{tpu_custom_call.1} parent=11 // pred_region
          _
        $region56: #{tpu_custom_call.1} parent=11 // pred_fallthru
          _
        // Predicated region
        $region57: #{tpu_custom_call.1} parent=11 // pred_check
          %p705 = pneg %p315
        $region58: #{tpu_custom_call.1} parent=11 // pred_check_branch
          %707 = sbr.rel (%p705) target = $region60
        $region59: #{tpu_custom_call.1} parent=11 // pred_region
          %s709 = ssub.s32 16, 16
          %710 = vsyncadd [#allocation16], %s709
          %s712 = sshll.u32 [#allocation17], 4
          %s713 = int_to_ptr.vmem [resolvable:$true] %s712
          %715 = dma.hbm_to_vmem [thread:$0]  %s11, 16, %s713, [#allocation16]
        $region60: #{tpu_custom_call.1} parent=11 // pred_fallthru
          _
        // Predicated region
        $region61: #{tpu_custom_call.1} parent=11 // pred_check
          %p716 = pneg %p336
        $region62: #{tpu_custom_call.1} parent=11 // pred_check_branch
          %718 = sbr.rel (%p716) target = $region64
        $region63: #{tpu_custom_call.1} parent=11 // pred_region
          %s720 = ssub.s32 512, 512
          %721 = vsyncadd [#allocation19], %s720
          %s722 = sshll.u32 [#allocation18], 4
          %s723 = int_to_ptr.vmem [resolvable:$true] %s722
          %728 = dma.hbm_to_vmem [thread:$0]  %s12, 512, %s723, [#allocation19], 128, 128, 8
        $region64: #{tpu_custom_call.1} parent=11 // pred_fallthru
          _
        // Predicated region
        $region65: #{tpu_custom_call.1} parent=11 // pred_check
          %p729 = pneg %p357
        $region66: #{tpu_custom_call.1} parent=11 // pred_check_branch
          %731 = sbr.rel (%p729) target = $region68
        $region67: #{tpu_custom_call.1} parent=11 // pred_region
          %s733 = ssub.s32 16, 16
          %734 = vsyncadd [#allocation19], %s733
          %s736 = sshll.u32 [#allocation20], 4
          %s737 = int_to_ptr.vmem [resolvable:$true] %s736
          %739 = dma.hbm_to_vmem [thread:$0]  %s13, 16, %s737, [#allocation19]
        $region68: #{tpu_custom_call.1} parent=11 // pred_fallthru
          _
        // Predicated region
        $region69: #{tpu_custom_call.1} parent=11 // pred_check
          %p740 = pneg %p378
        $region70: #{tpu_custom_call.1} parent=11 // pred_check_branch
          %742 = sbr.rel (%p740) target = $region72
        $region71: #{tpu_custom_call.1} parent=11 // pred_region
          %s744 = ssub.s32 16, 16
          %745 = vsyncadd [#allocation22], %s744
          %s747 = sshll.u32 [#allocation21], 4
          %s748 = int_to_ptr.vmem [resolvable:$true] %s747
          %750 = dma.hbm_to_vmem [thread:$0]  %s14, 16, %s748, [#allocation22]
        $region72: #{tpu_custom_call.1} parent=11 // pred_fallthru
          _
        // Predicated region
        $region73: #{tpu_custom_call.1} parent=11 // pred_check
          %p751 = pneg %p399
        $region74: #{tpu_custom_call.1} parent=11 // pred_check_branch
          %753 = sbr.rel (%p751) target = $region76
        $region75: #{tpu_custom_call.1} parent=11 // pred_region
          %s755 = ssub.s32 16, 16
          %756 = vsyncadd [#allocation22], %s755
          %s758 = sshll.u32 [#allocation23], 4
          %s759 = int_to_ptr.vmem [resolvable:$true] %s758
          %761 = dma.hbm_to_vmem [thread:$0]  %s15, 16, %s759, [#allocation22]
        $region76: #{tpu_custom_call.1} parent=11 // pred_fallthru
          _
        // Predicated region
        $region77: #{tpu_custom_call.1} parent=11 // pred_check
          %p762 = pneg %p420
        $region78: #{tpu_custom_call.1} parent=11 // pred_check_branch
          %764 = sbr.rel (%p762) target = $region80
        $region79: #{tpu_custom_call.1} parent=11 // pred_region
          %s766 = ssub.s32 16, 16
          %767 = vsyncadd [#allocation25], %s766
          %s769 = sshll.u32 [#allocation24], 4
          %s770 = int_to_ptr.vmem [resolvable:$true] %s769
          %772 = dma.hbm_to_vmem [thread:$0]  %s16, 16, %s770, [#allocation25]
        $region80: #{tpu_custom_call.1} parent=11 // pred_fallthru
          _
        // Predicated region
        $region81: #{tpu_custom_call.1} parent=11 // pred_check
          %p773 = pneg %p441
        $region82: #{tpu_custom_call.1} parent=11 // pred_check_branch
          %775 = sbr.rel (%p773) target = $region84
        $region83: #{tpu_custom_call.1} parent=11 // pred_region
          %s777 = ssub.s32 16, 16
          %778 = vsyncadd [#allocation25], %s777
          %s780 = sshll.u32 [#allocation26], 4
          %s781 = int_to_ptr.vmem [resolvable:$true] %s780
          %783 = dma.hbm_to_vmem [thread:$0]  %s17, 16, %s781, [#allocation25]
        $region84: #{tpu_custom_call.1} parent=11 // pred_fallthru
          _
        // Predicated region
        $region85: #{tpu_custom_call.1} parent=11 // pred_check
          %p784 = pneg %p462
        $region86: #{tpu_custom_call.1} parent=11 // pred_check_branch
          %786 = sbr.rel (%p784) target = $region88
        $region87: #{tpu_custom_call.1} parent=11 // pred_region
          _
        $region88: #{tpu_custom_call.1} parent=11 // pred_fallthru
          _
        // Predicated region
        $region89: #{tpu_custom_call.1} parent=11 // pred_check
          %p787 = pneg %p483
        $region90: #{tpu_custom_call.1} parent=11 // pred_check_branch
          %789 = sbr.rel (%p787) target = $region92
        $region91: #{tpu_custom_call.1} parent=11 // pred_region
          _
        $region92: #{tpu_custom_call.1} parent=11 // pred_fallthru
          _
        // Predicated region
        $region93: #{tpu_custom_call.1} parent=11 // pred_check
          %p790 = pneg %p504
        $region94: #{tpu_custom_call.1} parent=11 // pred_check_branch
          %792 = sbr.rel (%p790) target = $region96
        $region95: #{tpu_custom_call.1} parent=11 // pred_region
          %s794 = ssub.s32 512, 512
          %795 = vsyncadd [#allocation28], %s794
          %s796 = sshll.u32 [#allocation27], 4
          %s797 = int_to_ptr.vmem [resolvable:$true] %s796
          %802 = dma.hbm_to_vmem [thread:$0]  %s20, 512, %s797, [#allocation28], 128, 128, 8
        $region96: #{tpu_custom_call.1} parent=11 // pred_fallthru
          _
        // Predicated region
        $region97: #{tpu_custom_call.1} parent=11 // pred_check
          %p803 = pneg %p525
        $region98: #{tpu_custom_call.1} parent=11 // pred_check_branch
          %805 = sbr.rel (%p803) target = $region100
        $region99: #{tpu_custom_call.1} parent=11 // pred_region
          _
        $region100: #{tpu_custom_call.1} parent=11 // pred_fallthru
          _
        // Predicated region
        $region101: #{tpu_custom_call.1} parent=11 // pred_check
          %p806 = pneg %p546
        $region102: #{tpu_custom_call.1} parent=11 // pred_check_branch
          %808 = sbr.rel (%p806) target = $region104
        $region103: #{tpu_custom_call.1} parent=11 // pred_region
          _
        $region104: #{tpu_custom_call.1} parent=11 // pred_fallthru
          _
        // Predicated region
        $region105: #{tpu_custom_call.1} parent=11 // pred_check
          %p809 = pneg %p567
        $region106: #{tpu_custom_call.1} parent=11 // pred_check_branch
          %811 = sbr.rel (%p809) target = $region108
        $region107: #{tpu_custom_call.1} parent=11 // pred_region
          _
        $region108: #{tpu_custom_call.1} parent=11 // pred_fallthru
          _
      $region12: #{tpu_custom_call.1} parent=5 // pred_fallthru
        _
      %p812 = scmp.lt.s32.totalorder %s41, 2
      // Predicated region
      $region109: #{tpu_custom_call.1} parent=5 // pred_check
        %p813 = pneg %p812
      $region110: #{tpu_custom_call.1} parent=5 // pred_check_branch
        %815 = sbr.rel (%p813) target = $region112
      $region111: #{tpu_custom_call.1} parent=5 // pred_region
        _
      $region112: #{tpu_custom_call.1} parent=5 // pred_fallthru
        _
      %p816 = scmp.le.s32.totalorder 1, %s41
      %p817 = scmp.lt.s32.totalorder %s41, 3
      %p818 = pnand %p816, %p817
      %p819 = pneg %p818
      // Predicated region
      $region113: #{tpu_custom_call.1} parent=5 // pred_check
        _
      $region114: #{tpu_custom_call.1} parent=5 // pred_check_branch
        %821 = sbr.rel (%p818) target = $region116
      $region115: #{tpu_custom_call.1} parent=5 // pred_region
        %s822 = ssub.s32 %s41, 1
        // Predicated region
        $region117: #{tpu_custom_call.1} parent=115 // pred_check
          %p823 = pneg %p147
        $region118: #{tpu_custom_call.1} parent=115 // pred_check_branch
          %825 = sbr.rel (%p823) target = $region120
        $region119: #{tpu_custom_call.1} parent=115 // pred_region
          %826 = dma.done [#allocation7], 16
        $region120: #{tpu_custom_call.1} parent=115 // pred_fallthru
          _
        // Predicated region
        $region121: #{tpu_custom_call.1} parent=115 // pred_check
          %p827 = pneg %p189
        $region122: #{tpu_custom_call.1} parent=115 // pred_check_branch
          %829 = sbr.rel (%p827) target = $region124
        $region123: #{tpu_custom_call.1} parent=115 // pred_region
          %830 = dma.done [#allocation10], 16
        $region124: #{tpu_custom_call.1} parent=115 // pred_fallthru
          _
        // Predicated region
        $region125: #{tpu_custom_call.1} parent=115 // pred_check
          %p831 = pneg %p210
        $region126: #{tpu_custom_call.1} parent=115 // pred_check_branch
          %833 = sbr.rel (%p831) target = $region128
        $region127: #{tpu_custom_call.1} parent=115 // pred_region
          %834 = dma.done [#allocation10], 512
        $region128: #{tpu_custom_call.1} parent=115 // pred_fallthru
          _
        // Predicated region
        $region129: #{tpu_custom_call.1} parent=115 // pred_check
          %p835 = pneg %p231
        $region130: #{tpu_custom_call.1} parent=115 // pred_check_branch
          %837 = sbr.rel (%p835) target = $region132
        $region131: #{tpu_custom_call.1} parent=115 // pred_region
          %838 = dma.done [#allocation13], 16
        $region132: #{tpu_custom_call.1} parent=115 // pred_fallthru
          _
        // Predicated region
        $region133: #{tpu_custom_call.1} parent=115 // pred_check
          %p839 = pneg %p252
        $region134: #{tpu_custom_call.1} parent=115 // pred_check_branch
          %841 = sbr.rel (%p839) target = $region136
        $region135: #{tpu_custom_call.1} parent=115 // pred_region
          %842 = dma.done [#allocation13], 512
        $region136: #{tpu_custom_call.1} parent=115 // pred_fallthru
          _
        // Predicated region
        $region137: #{tpu_custom_call.1} parent=115 // pred_check
          %p843 = pneg %p273
        $region138: #{tpu_custom_call.1} parent=115 // pred_check_branch
          %845 = sbr.rel (%p843) target = $region140
        $region139: #{tpu_custom_call.1} parent=115 // pred_region
          %846 = dma.done [#allocation16], 16
        $region140: #{tpu_custom_call.1} parent=115 // pred_fallthru
          _
        // Predicated region
        $region141: #{tpu_custom_call.1} parent=115 // pred_check
          %p847 = pneg %p315
        $region142: #{tpu_custom_call.1} parent=115 // pred_check_branch
          %849 = sbr.rel (%p847) target = $region144
        $region143: #{tpu_custom_call.1} parent=115 // pred_region
          %850 = dma.done [#allocation16], 16
        $region144: #{tpu_custom_call.1} parent=115 // pred_fallthru
          _
        // Predicated region
        $region145: #{tpu_custom_call.1} parent=115 // pred_check
          %p851 = pneg %p336
        $region146: #{tpu_custom_call.1} parent=115 // pred_check_branch
          %853 = sbr.rel (%p851) target = $region148
        $region147: #{tpu_custom_call.1} parent=115 // pred_region
          %854 = dma.done [#allocation19], 512
        $region148: #{tpu_custom_call.1} parent=115 // pred_fallthru
          _
        // Predicated region
        $region149: #{tpu_custom_call.1} parent=115 // pred_check
          %p855 = pneg %p357
        $region150: #{tpu_custom_call.1} parent=115 // pred_check_branch
          %857 = sbr.rel (%p855) target = $region152
        $region151: #{tpu_custom_call.1} parent=115 // pred_region
          %858 = dma.done [#allocation19], 16
        $region152: #{tpu_custom_call.1} parent=115 // pred_fallthru
          _
        // Predicated region
        $region153: #{tpu_custom_call.1} parent=115 // pred_check
          %p859 = pneg %p378
        $region154: #{tpu_custom_call.1} parent=115 // pred_check_branch
          %861 = sbr.rel (%p859) target = $region156
        $region155: #{tpu_custom_call.1} parent=115 // pred_region
          %862 = dma.done [#allocation22], 16
        $region156: #{tpu_custom_call.1} parent=115 // pred_fallthru
          _
        // Predicated region
        $region157: #{tpu_custom_call.1} parent=115 // pred_check
          %p863 = pneg %p399
        $region158: #{tpu_custom_call.1} parent=115 // pred_check_branch
          %865 = sbr.rel (%p863) target = $region160
        $region159: #{tpu_custom_call.1} parent=115 // pred_region
          %866 = dma.done [#allocation22], 16
        $region160: #{tpu_custom_call.1} parent=115 // pred_fallthru
          _
        // Predicated region
        $region161: #{tpu_custom_call.1} parent=115 // pred_check
          %p867 = pneg %p420
        $region162: #{tpu_custom_call.1} parent=115 // pred_check_branch
          %869 = sbr.rel (%p867) target = $region164
        $region163: #{tpu_custom_call.1} parent=115 // pred_region
          %870 = dma.done [#allocation25], 16
        $region164: #{tpu_custom_call.1} parent=115 // pred_fallthru
          _
        // Predicated region
        $region165: #{tpu_custom_call.1} parent=115 // pred_check
          %p871 = pneg %p441
        $region166: #{tpu_custom_call.1} parent=115 // pred_check_branch
          %873 = sbr.rel (%p871) target = $region168
        $region167: #{tpu_custom_call.1} parent=115 // pred_region
          %874 = dma.done [#allocation25], 16
        $region168: #{tpu_custom_call.1} parent=115 // pred_fallthru
          _
        // Predicated region
        $region169: #{tpu_custom_call.1} parent=115 // pred_check
          %p875 = pneg %p504
        $region170: #{tpu_custom_call.1} parent=115 // pred_check_branch
          %877 = sbr.rel (%p875) target = $region172
        $region171: #{tpu_custom_call.1} parent=115 // pred_region
          %878 = dma.done [#allocation28], 512
        $region172: #{tpu_custom_call.1} parent=115 // pred_fallthru
          _
        %p879 = scmp.lt.s32.totalorder %s50, 1
        %s880 = scalar_select %p879, %s50, 1
        %s881 = smul.addr %s880, 2
        %s882 = smul.addr %s881, 8
        %s883 = scalar_lea.vmem %s0, %s882
        %p884 = pneg %p79
        %p885 = pneg %p76
        %p886 = scmp.lt.s32.totalorder %s50, 1
        %s887 = scalar_select %p886, %s50, 1
        %s888 = smul.addr %s887, 4
        %s889 = smul.addr %s888, 8
        %s890 = scalar_lea.vmem %s1, %s889
        %p891 = pneg %p105
        %p892 = pneg %p102
        %p893 = pneg %p126
        %p894 = pneg %p123
        %p895 = pneg %p147
        %p896 = pneg %p144
        %p897 = pneg %p168
        %p898 = pneg %p165
        %p899 = pneg %p189
        %p900 = pneg %p186
        %p901 = pneg %p210
        %p902 = pneg %p207
        %p903 = pneg %p231
        %p904 = pneg %p228
        %p905 = pneg %p252
        %p906 = pneg %p249
        %p907 = pneg %p273
        %p908 = pneg %p270
        %p909 = pneg %p294
        %p910 = pneg %p291
        %p911 = pneg %p315
        %p912 = pneg %p312
        %p913 = pneg %p336
        %p914 = pneg %p333
        %p915 = pneg %p357
        %p916 = pneg %p354
        %p917 = pneg %p378
        %p918 = pneg %p375
        %p919 = pneg %p399
        %p920 = pneg %p396
        %p921 = pneg %p420
        %p922 = pneg %p417
        %p923 = pneg %p441
        %p924 = pneg %p438
        %p925 = pneg %p462
        %p926 = pneg %p459
        %p927 = pneg %p483
        %p928 = pneg %p480
        %p929 = pneg %p504
        %p930 = pneg %p501
        %p931 = pneg %p525
        %p932 = pneg %p522
        %p933 = pneg %p546
        %p934 = pneg %p543
        %p935 = pneg %p567
        %p936 = pneg %p564
        %p937 = pneg %p595
        %p938 = pneg %p592
        %s939 = sand.u32 %s582, 1
        %s940 = scalar_lea.sflag [#allocation8], %s939
        %s941 = sand.u32 %s582, 1
        %s942 = smul.addr %s941, 16
        %s943 = scalar_lea.vmem [#allocation29], %s942
        %p944 = scmp.lt.s32.totalorder %s50, 1
        %s945 = scalar_select %p944, %s50, 1
        %s946 = smul.addr %s945, 2
        %s947 = smul.addr %s946, 8
        %s948 = scalar_lea.vmem %s0, %s947
        %p949 = scmp.lt.s32.totalorder %s50, 1
        %s950 = scalar_select %p949, %s50, 1
        %s951 = smul.addr %s950, 4
        %s952 = smul.addr %s951, 8
        %s953 = scalar_lea.vmem %s1, %s952
        %s954 = smul.u32 2, %s51
        %s955 = smul.u32 %s51, 16
        %p956 = scmp.eq.s32.totalorder %s51, 0
        // Predicated region
        $region173: #{tpu_custom_call.1} parent=115 // pred_check
          %p957 = pneg %p956
        $region174: #{tpu_custom_call.1} parent=115 // pred_check_branch
          %959 = sbr.rel (%p957) target = $region176
        $region175: #{tpu_custom_call.1} parent=115 // pred_region
          %v960 = vld [vmem:[%s948] sm:$0xff]
          %v961 = vld [vmem:[%s948 + $0x8] sm:$0xff]
          %v962 = vld [vmem:[%s4] sm:$0xff]
          %v963 = vld [vmem:[%s4 + $0x8] sm:$0xff]
          %v964 = vld [vmem:[%s4 + $0x10] sm:$0xff]
          %v965 = vld [vmem:[%s4 + $0x18] sm:$0xff]
          %v966 = vld [vmem:[#allocation9] sm:$0x1]
          %v968 = vlaneseq
          %v969 = vshrl.u32 %v968, 7
          %v970 = vsub.s32 0, %v969
          %v971 = vrot.slane %v966, %v970
          %vm973 = vcmask 261120
          %v975 = vsel %vm973, %v960, 0
          %v978 = vsel %vm973, %v961, 0
          %980 = vmatprep.subr.mxu0 0.0
          %981 = vmatpush1.msra.mxu0 %v962
          %982 = vmatprep.subr.mxu0 0.0
          %983 = vmatpush1.msra.mxu0 %v963
          %984 = vmatprep.subr.mxu0 0.0
          %985 = vmatpush1.msra.mxu0 %v964
          %986 = vmatprep.subr.mxu0 0.0
          %987 = vmatpush1.msra.mxu0 %v965
          %988 = vmatprep.subr.mxu0 0.0
          %989 = vmatpush1.msra.mxu0 0.0
          %990 = vmatprep.subr.mxu0 0.0
          %991 = vmatpush1.msra.mxu0 0.0
          %992 = vmatprep.subr.mxu0 0.0
          %993 = vmatpush1.msra.mxu0 0.0
          %994 = vmatprep.subr.mxu0 0.0
          %995 = vmatpush1.msra.mxu0 0.0
          %996 = vmatprep.subr.mxu0 0.0
          %997 = vmatpush1.msra.mxu0 0.0
          %998 = vmatprep.subr.mxu0 0.0
          %999 = vmatpush1.msra.mxu0 0.0
          %1000 = vmatprep.subr.mxu0 0.0
          %1001 = vmatpush1.msra.mxu0 0.0
          %1002 = vmatprep.subr.mxu0 0.0
          %1003 = vmatpush1.msra.mxu0 0.0
          %1004 = vmatprep.subr.mxu0 0.0
          %1005 = vmatpush1.msra.mxu0 0.0
          %1006 = vmatprep.subr.mxu0 0.0
          %1007 = vmatpush1.msra.mxu0 0.0
          %1008 = vmatprep.subr.mxu0 0.0
          %1009 = vmatpush1.msra.mxu0 0.0
          %1010 = vmatprep.subr.mxu0 0.0
          %1011 = vmatpush1.msra.mxu0 0.0
          %1012 = vmatprep.subr.mxu0 0.0
          %1013 = vmatpush1.msra.mxu0 0.0
          %1014 = vmatprep.subr.mxu0 0.0
          %1015 = vmatpush1.msra.mxu0 0.0
          %1016 = vmatprep.subr.mxu0 0.0
          %1017 = vmatpush1.msra.mxu0 0.0
          %1018 = vmatprep.subr.mxu0 0.0
          %1019 = vmatpush1.msra.mxu0 0.0
          %1020 = vmatprep.subr.mxu0 0.0
          %1021 = vmatpush1.msra.mxu0 0.0
          %1022 = vmatprep.subr.mxu0 0.0
          %1023 = vmatpush1.msra.mxu0 0.0
          %1024 = vmatprep.subr.mxu0 0.0
          %1025 = vmatpush1.msra.mxu0 0.0
          %1026 = vmatprep.subr.mxu0 0.0
          %1027 = vmatpush1.msra.mxu0 0.0
          %1028 = vmatprep.subr.mxu0 0.0
          %1029 = vmatpush1.msra.mxu0 0.0
          %1030 = vmatprep.subr.mxu0 0.0
          %1031 = vmatpush1.msra.mxu0 0.0
          %1032 = vmatprep.subr.mxu0 0.0
          %1033 = vmatpush1.msra.mxu0 0.0
          %1034 = vmatprep.subr.mxu0 0.0
          %1035 = vmatpush1.msra.mxu0 0.0
          %1036 = vmatprep.subr.mxu0 0.0
          %1037 = vmatpush1.msra.mxu0 0.0
          %1038 = vmatprep.subr.mxu0 0.0
          %1039 = vmatpush1.msra.mxu0 0.0
          %1040 = vmatprep.subr.mxu0 0.0
          %1041 = vmatpush1.msra.mxu0 0.0
          %1042 = vmatprep.subr.mxu0 0.0
          %1043 = vmatpush1.msra.mxu0 0.0
          %1044 = vmatprep.mubr.f32.mxu0 0.0
          %1045 = vmatmul.mubr.f32.gmra.mrb[0].mxu0 %v975
          %v1046 = vpop.f32.mrb[0].mxu0
          %v1047 = vadd.f32 %v971, %v1046
          %v1048 = vpop.f32.mrb[0].mxu0
          %1049 = vmatprep.mubr.f32.mxu0 0.0
          %1050 = vmatmul.mubr.f32.gmra.mrb[0].mxu0 %v978
          %v1051 = vpop.f32.mrb[0].mxu0
          %v1052 = vadd.f32 %v971, %v1051
          %v1053 = vpop.f32.mrb[0].mxu0
          %1054 = vdwg.mxu0
          %vm1055 = vcmask 64512
          %1056 = vst.msk [vmem:[#allocation2] sm:$0xff] %vm1055, %v1047
          %1057 = vst.msk [vmem:[#allocation2 + $0x8] sm:$0xff] %vm1055, %v1052
          %1060 = vrot.lane.b32.xlu0 %v1047, 96
          %v1061 = vpop.permute.xlu0 %1060
          %1062 = vrot.lane.b32.xlu0 %v1052, 96
          %v1063 = vpop.permute.xlu0 %1062
          %1066 = vst.msk [vmem:[#allocation3] sm:$0xff] %vm1055, %v1061
          %1067 = vst.msk [vmem:[#allocation3 + $0x8] sm:$0xff] %vm1055, %v1063
          %1068 = vrot.lane.b32.xlu0 %v1047, 120
          %v1069 = vpop.permute.xlu0 %1068
          %1070 = vrot.lane.b32.xlu0 %v1052, 120
          %v1071 = vpop.permute.xlu0 %1070
          %s1074 = scalar_lea.vmem [#allocation2], 16
          %1075 = vst.msk [vmem:[%s1074] sm:$0xff] %vm1055, %v1069
          %1076 = vst.msk [vmem:[%s1074 + $0x8] sm:$0xff] %vm1055, %v1071
          %1077 = vrot.lane.b32.xlu0 %v1047, 88
          %v1078 = vpop.permute.xlu0 %1077
          %1079 = vrot.lane.b32.xlu0 %v1052, 88
          %v1080 = vpop.permute.xlu0 %1079
          %s1083 = scalar_lea.vmem [#allocation3], 16
          %1084 = vst.msk [vmem:[%s1083] sm:$0xff] %vm1055, %v1078
          %1085 = vst.msk [vmem:[%s1083 + $0x8] sm:$0xff] %vm1055, %v1080
          %1086 = vrot.lane.b32.xlu0 %v1047, 112
          %v1087 = vpop.permute.xlu0 %1086
          %1088 = vrot.lane.b32.xlu0 %v1052, 112
          %v1089 = vpop.permute.xlu0 %1088
          %s1092 = scalar_lea.vmem [#allocation2], 32
          %1093 = vst.msk [vmem:[%s1092] sm:$0xff] %vm1055, %v1087
          %1094 = vst.msk [vmem:[%s1092 + $0x8] sm:$0xff] %vm1055, %v1089
          %1095 = vrot.lane.b32.xlu0 %v1047, 80
          %v1096 = vpop.permute.xlu0 %1095
          %1097 = vrot.lane.b32.xlu0 %v1052, 80
          %v1098 = vpop.permute.xlu0 %1097
          %s1101 = scalar_lea.vmem [#allocation3], 32
          %1102 = vst.msk [vmem:[%s1101] sm:$0xff] %vm1055, %v1096
          %1103 = vst.msk [vmem:[%s1101 + $0x8] sm:$0xff] %vm1055, %v1098
          %1104 = vrot.lane.b32.xlu0 %v1047, 104
          %v1105 = vpop.permute.xlu0 %1104
          %1106 = vrot.lane.b32.xlu0 %v1052, 104
          %v1107 = vpop.permute.xlu0 %1106
          %s1110 = scalar_lea.vmem [#allocation2], 48
          %1111 = vst.msk [vmem:[%s1110] sm:$0xff] %vm1055, %v1105
          %1112 = vst.msk [vmem:[%s1110 + $0x8] sm:$0xff] %vm1055, %v1107
          %1113 = vrot.lane.b32.xlu0 %v1047, 72
          %v1114 = vpop.permute.xlu0 %1113
          %1115 = vrot.lane.b32.xlu0 %v1052, 72
          %v1116 = vpop.permute.xlu0 %1115
          %s1119 = scalar_lea.vmem [#allocation3], 48
          %1120 = vst.msk [vmem:[%s1119] sm:$0xff] %vm1055, %v1114
          %1121 = vst.msk [vmem:[%s1119 + $0x8] sm:$0xff] %vm1055, %v1116
          %v1122 = vld [vmem:[%s953] sm:$0xff]
          %v1123 = vld [vmem:[%s953 + $0x8] sm:$0xff]
          %v1124 = vld [vmem:[%s953 + $0x10] sm:$0xff]
          %v1125 = vld [vmem:[%s953 + $0x18] sm:$0xff]
          %v1126 = vld [vmem:[%s10] sm:$0xff]
          %v1127 = vld [vmem:[%s10 + $0x8] sm:$0xff]
          %v1128 = vld [vmem:[%s10 + $0x10] sm:$0xff]
          %v1129 = vld [vmem:[%s10 + $0x18] sm:$0xff]
          %v1130 = vld [vmem:[#allocation17] sm:$0x1]
          %v1132 = vlaneseq
          %v1133 = vshrl.u32 %v1132, 7
          %v1134 = vsub.s32 0, %v1133
          %v1135 = vrot.slane %v1130, %v1134
          %v1138 = vsel %vm973, %v1122, 0
          %v1141 = vsel %vm973, %v1123, 0
          %v1144 = vsel %vm973, %v1124, 0
          %v1147 = vsel %vm973, %v1125, 0
          %1149 = vmatprep.subr.mxu0 0.0
          %1150 = vmatpush1.msra.mxu0 %v1126
          %1151 = vmatprep.subr.mxu0 0.0
          %1152 = vmatpush1.msra.mxu0 %v1127
          %1153 = vmatprep.subr.mxu0 0.0
          %1154 = vmatpush1.msra.mxu0 %v1128
          %1155 = vmatprep.subr.mxu0 0.0
          %1156 = vmatpush1.msra.mxu0 %v1129
          %1157 = vmatprep.subr.mxu0 0.0
          %1158 = vmatpush1.msra.mxu0 0.0
          %1159 = vmatprep.subr.mxu0 0.0
          %1160 = vmatpush1.msra.mxu0 0.0
          %1161 = vmatprep.subr.mxu0 0.0
          %1162 = vmatpush1.msra.mxu0 0.0
          %1163 = vmatprep.subr.mxu0 0.0
          %1164 = vmatpush1.msra.mxu0 0.0
          %1165 = vmatprep.subr.mxu0 0.0
          %1166 = vmatpush1.msra.mxu0 0.0
          %1167 = vmatprep.subr.mxu0 0.0
          %1168 = vmatpush1.msra.mxu0 0.0
          %1169 = vmatprep.subr.mxu0 0.0
          %1170 = vmatpush1.msra.mxu0 0.0
          %1171 = vmatprep.subr.mxu0 0.0
          %1172 = vmatpush1.msra.mxu0 0.0
          %1173 = vmatprep.subr.mxu0 0.0
          %1174 = vmatpush1.msra.mxu0 0.0
          %1175 = vmatprep.subr.mxu0 0.0
          %1176 = vmatpush1.msra.mxu0 0.0
          %1177 = vmatprep.subr.mxu0 0.0
          %1178 = vmatpush1.msra.mxu0 0.0
          %1179 = vmatprep.subr.mxu0 0.0
          %1180 = vmatpush1.msra.mxu0 0.0
          %1181 = vmatprep.subr.mxu0 0.0
          %1182 = vmatpush1.msra.mxu0 0.0
          %1183 = vmatprep.subr.mxu0 0.0
          %1184 = vmatpush1.msra.mxu0 0.0
          %1185 = vmatprep.subr.mxu0 0.0
          %1186 = vmatpush1.msra.mxu0 0.0
          %1187 = vmatprep.subr.mxu0 0.0
          %1188 = vmatpush1.msra.mxu0 0.0
          %1189 = vmatprep.subr.mxu0 0.0
          %1190 = vmatpush1.msra.mxu0 0.0
          %1191 = vmatprep.subr.mxu0 0.0
          %1192 = vmatpush1.msra.mxu0 0.0
          %1193 = vmatprep.subr.mxu0 0.0
          %1194 = vmatpush1.msra.mxu0 0.0
          %1195 = vmatprep.subr.mxu0 0.0
          %1196 = vmatpush1.msra.mxu0 0.0
          %1197 = vmatprep.subr.mxu0 0.0
          %1198 = vmatpush1.msra.mxu0 0.0
          %1199 = vmatprep.subr.mxu0 0.0
          %1200 = vmatpush1.msra.mxu0 0.0
          %1201 = vmatprep.subr.mxu0 0.0
          %1202 = vmatpush1.msra.mxu0 0.0
          %1203 = vmatprep.subr.mxu0 0.0
          %1204 = vmatpush1.msra.mxu0 0.0
          %1205 = vmatprep.subr.mxu0 0.0
          %1206 = vmatpush1.msra.mxu0 0.0
          %1207 = vmatprep.subr.mxu0 0.0
          %1208 = vmatpush1.msra.mxu0 0.0
          %1209 = vmatprep.subr.mxu0 0.0
          %1210 = vmatpush1.msra.mxu0 0.0
          %1211 = vmatprep.subr.mxu0 0.0
          %1212 = vmatpush1.msra.mxu0 0.0
          %1213 = vmatprep.mubr.f32.mxu0 0.0
          %1214 = vmatmul.mubr.f32.gmra.mrb[0].mxu0 %v1138
          %v1215 = vpop.f32.mrb[0].mxu0
          %v1216 = vadd.f32 %v1135, %v1215
          %v1217 = vpop.f32.mrb[0].mxu0
          %1218 = vmatprep.mubr.f32.mxu0 0.0
          %1219 = vmatmul.mubr.f32.gmra.mrb[0].mxu0 %v1141
          %v1220 = vpop.f32.mrb[0].mxu0
          %v1221 = vadd.f32 %v1135, %v1220
          %v1222 = vpop.f32.mrb[0].mxu0
          %1223 = vmatprep.mubr.f32.mxu0 0.0
          %1224 = vmatmul.mubr.f32.gmra.mrb[0].mxu0 %v1144
          %v1225 = vpop.f32.mrb[0].mxu0
          %v1226 = vadd.f32 %v1135, %v1225
          %v1227 = vpop.f32.mrb[0].mxu0
          %1228 = vmatprep.mubr.f32.mxu0 0.0
          %1229 = vmatmul.mubr.f32.gmra.mrb[0].mxu0 %v1147
          %v1230 = vpop.f32.mrb[0].mxu0
          %v1231 = vadd.f32 %v1135, %v1230
          %v1232 = vpop.f32.mrb[0].mxu0
          %1233 = vdwg.mxu0
          %1234 = vst.msk [vmem:[#allocation4] sm:$0xff] %vm1055, %v1216
          %1235 = vst.msk [vmem:[#allocation4 + $0x8] sm:$0xff] %vm1055, %v1221
          %1236 = vst.msk [vmem:[#allocation4 + $0x10] sm:$0xff] %vm1055, %v1226
          %1237 = vst.msk [vmem:[#allocation4 + $0x18] sm:$0xff] %vm1055, %v1231
          %1242 = vrot.lane.b32.xlu0 %v1216, 96
          %v1243 = vpop.permute.xlu0 %1242
          %1244 = vrot.lane.b32.xlu0 %v1221, 96
          %v1245 = vpop.permute.xlu0 %1244
          %1246 = vrot.lane.b32.xlu0 %v1226, 96
          %v1247 = vpop.permute.xlu0 %1246
          %1248 = vrot.lane.b32.xlu0 %v1231, 96
          %v1249 = vpop.permute.xlu0 %1248
          %1254 = vst.msk [vmem:[#allocation5] sm:$0xff] %vm1055, %v1243
          %1255 = vst.msk [vmem:[#allocation5 + $0x8] sm:$0xff] %vm1055, %v1245
          %1256 = vst.msk [vmem:[#allocation5 + $0x10] sm:$0xff] %vm1055, %v1247
          %1257 = vst.msk [vmem:[#allocation5 + $0x18] sm:$0xff] %vm1055, %v1249
          %1258 = vrot.lane.b32.xlu0 %v1216, 120
          %v1259 = vpop.permute.xlu0 %1258
          %1260 = vrot.lane.b32.xlu0 %v1221, 120
          %v1261 = vpop.permute.xlu0 %1260
          %1262 = vrot.lane.b32.xlu0 %v1226, 120
          %v1263 = vpop.permute.xlu0 %1262
          %1264 = vrot.lane.b32.xlu0 %v1231, 120
          %v1265 = vpop.permute.xlu0 %1264
          %s1270 = scalar_lea.vmem [#allocation4], 32
          %1271 = vst.msk [vmem:[%s1270] sm:$0xff] %vm1055, %v1259
          %1272 = vst.msk [vmem:[%s1270 + $0x8] sm:$0xff] %vm1055, %v1261
          %1273 = vst.msk [vmem:[%s1270 + $0x10] sm:$0xff] %vm1055, %v1263
          %1274 = vst.msk [vmem:[%s1270 + $0x18] sm:$0xff] %vm1055, %v1265
          %1275 = vrot.lane.b32.xlu0 %v1216, 88
          %v1276 = vpop.permute.xlu0 %1275
          %1277 = vrot.lane.b32.xlu0 %v1221, 88
          %v1278 = vpop.permute.xlu0 %1277
          %1279 = vrot.lane.b32.xlu0 %v1226, 88
          %v1280 = vpop.permute.xlu0 %1279
          %1281 = vrot.lane.b32.xlu0 %v1231, 88
          %v1282 = vpop.permute.xlu0 %1281
          %s1287 = scalar_lea.vmem [#allocation5], 32
          %1288 = vst.msk [vmem:[%s1287] sm:$0xff] %vm1055, %v1276
          %1289 = vst.msk [vmem:[%s1287 + $0x8] sm:$0xff] %vm1055, %v1278
          %1290 = vst.msk [vmem:[%s1287 + $0x10] sm:$0xff] %vm1055, %v1280
          %1291 = vst.msk [vmem:[%s1287 + $0x18] sm:$0xff] %vm1055, %v1282
          %1292 = vrot.lane.b32.xlu0 %v1216, 112
          %v1293 = vpop.permute.xlu0 %1292
          %1294 = vrot.lane.b32.xlu0 %v1221, 112
          %v1295 = vpop.permute.xlu0 %1294
          %1296 = vrot.lane.b32.xlu0 %v1226, 112
          %v1297 = vpop.permute.xlu0 %1296
          %1298 = vrot.lane.b32.xlu0 %v1231, 112
          %v1299 = vpop.permute.xlu0 %1298
          %s1304 = scalar_lea.vmem [#allocation4], 64
          %1305 = vst.msk [vmem:[%s1304] sm:$0xff] %vm1055, %v1293
          %1306 = vst.msk [vmem:[%s1304 + $0x8] sm:$0xff] %vm1055, %v1295
          %1307 = vst.msk [vmem:[%s1304 + $0x10] sm:$0xff] %vm1055, %v1297
          %1308 = vst.msk [vmem:[%s1304 + $0x18] sm:$0xff] %vm1055, %v1299
          %1309 = vrot.lane.b32.xlu0 %v1216, 80
          %v1310 = vpop.permute.xlu0 %1309
          %1311 = vrot.lane.b32.xlu0 %v1221, 80
          %v1312 = vpop.permute.xlu0 %1311
          %1313 = vrot.lane.b32.xlu0 %v1226, 80
          %v1314 = vpop.permute.xlu0 %1313
          %1315 = vrot.lane.b32.xlu0 %v1231, 80
          %v1316 = vpop.permute.xlu0 %1315
          %s1321 = scalar_lea.vmem [#allocation5], 64
          %1322 = vst.msk [vmem:[%s1321] sm:$0xff] %vm1055, %v1310
          %1323 = vst.msk [vmem:[%s1321 + $0x8] sm:$0xff] %vm1055, %v1312
          %1324 = vst.msk [vmem:[%s1321 + $0x10] sm:$0xff] %vm1055, %v1314
          %1325 = vst.msk [vmem:[%s1321 + $0x18] sm:$0xff] %vm1055, %v1316
          %1326 = vrot.lane.b32.xlu0 %v1216, 104
          %v1327 = vpop.permute.xlu0 %1326
          %1328 = vrot.lane.b32.xlu0 %v1221, 104
          %v1329 = vpop.permute.xlu0 %1328
          %1330 = vrot.lane.b32.xlu0 %v1226, 104
          %v1331 = vpop.permute.xlu0 %1330
          %1332 = vrot.lane.b32.xlu0 %v1231, 104
          %v1333 = vpop.permute.xlu0 %1332
          %s1338 = scalar_lea.vmem [#allocation4], 96
          %1339 = vst.msk [vmem:[%s1338] sm:$0xff] %vm1055, %v1327
          %1340 = vst.msk [vmem:[%s1338 + $0x8] sm:$0xff] %vm1055, %v1329
          %1341 = vst.msk [vmem:[%s1338 + $0x10] sm:$0xff] %vm1055, %v1331
          %1342 = vst.msk [vmem:[%s1338 + $0x18] sm:$0xff] %vm1055, %v1333
          %1343 = vrot.lane.b32.xlu0 %v1216, 72
          %v1344 = vpop.permute.xlu0 %1343
          %1345 = vrot.lane.b32.xlu0 %v1221, 72
          %v1346 = vpop.permute.xlu0 %1345
          %1347 = vrot.lane.b32.xlu0 %v1226, 72
          %v1348 = vpop.permute.xlu0 %1347
          %1349 = vrot.lane.b32.xlu0 %v1231, 72
          %v1350 = vpop.permute.xlu0 %1349
          %s1355 = scalar_lea.vmem [#allocation5], 96
          %1356 = vst.msk [vmem:[%s1355] sm:$0xff] %vm1055, %v1344
          %1357 = vst.msk [vmem:[%s1355 + $0x8] sm:$0xff] %vm1055, %v1346
          %1358 = vst.msk [vmem:[%s1355 + $0x10] sm:$0xff] %vm1055, %v1348
          %1359 = vst.msk [vmem:[%s1355 + $0x18] sm:$0xff] %vm1055, %v1350
        $region176: #{tpu_custom_call.1} parent=115 // pred_fallthru
          _
        %s1360 = scalar_lea.vmem %s948, %s955
        %v1361 = vld [vmem:[%s1360] sm:$0xff]
        %v1362 = vld [vmem:[%s1360 + $0x8] sm:$0xff]
        %v1363 = vld [vmem:[%s2] sm:$0xff]
        %v1364 = vld [vmem:[%s2 + $0x8] sm:$0xff]
        %v1365 = vld [vmem:[%s2 + $0x10] sm:$0xff]
        %v1366 = vld [vmem:[%s2 + $0x18] sm:$0xff]
        %v1367 = vld [vmem:[#allocation6] sm:$0x1]
        %v1369 = vlaneseq
        %v1370 = vshrl.u32 %v1369, 7
        %v1371 = vsub.s32 0, %v1370
        %v1372 = vrot.slane %v1367, %v1371
        %vm1374 = vcmask 261120
        %v1376 = vsel %vm1374, %v1361, 0
        %v1379 = vsel %vm1374, %v1362, 0
        %1381 = vmatprep.subr.mxu0 0.0
        %1382 = vmatpush1.msra.mxu0 %v1363
        %1383 = vmatprep.subr.mxu0 0.0
        %1384 = vmatpush1.msra.mxu0 %v1364
        %1385 = vmatprep.subr.mxu0 0.0
        %1386 = vmatpush1.msra.mxu0 %v1365
        %1387 = vmatprep.subr.mxu0 0.0
        %1388 = vmatpush1.msra.mxu0 %v1366
        %1389 = vmatprep.subr.mxu0 0.0
        %1390 = vmatpush1.msra.mxu0 0.0
        %1391 = vmatprep.subr.mxu0 0.0
        %1392 = vmatpush1.msra.mxu0 0.0
        %1393 = vmatprep.subr.mxu0 0.0
        %1394 = vmatpush1.msra.mxu0 0.0
        %1395 = vmatprep.subr.mxu0 0.0
        %1396 = vmatpush1.msra.mxu0 0.0
        %1397 = vmatprep.subr.mxu0 0.0
        %1398 = vmatpush1.msra.mxu0 0.0
        %1399 = vmatprep.subr.mxu0 0.0
        %1400 = vmatpush1.msra.mxu0 0.0
        %1401 = vmatprep.subr.mxu0 0.0
        %1402 = vmatpush1.msra.mxu0 0.0
        %1403 = vmatprep.subr.mxu0 0.0
        %1404 = vmatpush1.msra.mxu0 0.0
        %1405 = vmatprep.subr.mxu0 0.0
        %1406 = vmatpush1.msra.mxu0 0.0
        %1407 = vmatprep.subr.mxu0 0.0
        %1408 = vmatpush1.msra.mxu0 0.0
        %1409 = vmatprep.subr.mxu0 0.0
        %1410 = vmatpush1.msra.mxu0 0.0
        %1411 = vmatprep.subr.mxu0 0.0
        %1412 = vmatpush1.msra.mxu0 0.0
        %1413 = vmatprep.subr.mxu0 0.0
        %1414 = vmatpush1.msra.mxu0 0.0
        %1415 = vmatprep.subr.mxu0 0.0
        %1416 = vmatpush1.msra.mxu0 0.0
        %1417 = vmatprep.subr.mxu0 0.0
        %1418 = vmatpush1.msra.mxu0 0.0
        %1419 = vmatprep.subr.mxu0 0.0
        %1420 = vmatpush1.msra.mxu0 0.0
        %1421 = vmatprep.subr.mxu0 0.0
        %1422 = vmatpush1.msra.mxu0 0.0
        %1423 = vmatprep.subr.mxu0 0.0
        %1424 = vmatpush1.msra.mxu0 0.0
        %1425 = vmatprep.subr.mxu0 0.0
        %1426 = vmatpush1.msra.mxu0 0.0
        %1427 = vmatprep.subr.mxu0 0.0
        %1428 = vmatpush1.msra.mxu0 0.0
        %1429 = vmatprep.subr.mxu0 0.0
        %1430 = vmatpush1.msra.mxu0 0.0
        %1431 = vmatprep.subr.mxu0 0.0
        %1432 = vmatpush1.msra.mxu0 0.0
        %1433 = vmatprep.subr.mxu0 0.0
        %1434 = vmatpush1.msra.mxu0 0.0
        %1435 = vmatprep.subr.mxu0 0.0
        %1436 = vmatpush1.msra.mxu0 0.0
        %1437 = vmatprep.subr.mxu0 0.0
        %1438 = vmatpush1.msra.mxu0 0.0
        %1439 = vmatprep.subr.mxu0 0.0
        %1440 = vmatpush1.msra.mxu0 0.0
        %1441 = vmatprep.subr.mxu0 0.0
        %1442 = vmatpush1.msra.mxu0 0.0
        %1443 = vmatprep.subr.mxu0 0.0
        %1444 = vmatpush1.msra.mxu0 0.0
        %1445 = vmatprep.mubr.f32.mxu0 0.0
        %1446 = vmatmul.mubr.f32.gmra.mrb[0].mxu0 %v1376
        %v1447 = vpop.f32.mrb[0].mxu0
        %v1448 = vadd.f32 %v1372, %v1447
        %v1449 = vpop.f32.mrb[0].mxu0
        %1450 = vmatprep.mubr.f32.mxu0 0.0
        %1451 = vmatmul.mubr.f32.gmra.mrb[0].mxu0 %v1379
        %v1452 = vpop.f32.mrb[0].mxu0
        %v1453 = vadd.f32 %v1372, %v1452
        %v1454 = vpop.f32.mrb[0].mxu0
        %1455 = vdwg.mxu0
        %v1456 = vmul.f32 %v1448, 0.35355338
        %v1457 = vmul.f32 %v1453, 0.35355338
        %1460 = vrot.lane.b32.xlu0 %v1456, 120
        %v1461 = vpop.permute.xlu0 %1460
        %1462 = vrot.lane.b32.xlu0 %v1457, 120
        %v1463 = vpop.permute.xlu0 %1462
        %1464 = vrot.lane.b32.xlu0 %v1456, 112
        %v1465 = vpop.permute.xlu0 %1464
        %1466 = vrot.lane.b32.xlu0 %v1457, 112
        %v1467 = vpop.permute.xlu0 %1466
        %1468 = vrot.lane.b32.xlu0 %v1456, 104
        %v1469 = vpop.permute.xlu0 %1468
        %1470 = vrot.lane.b32.xlu0 %v1457, 104
        %v1471 = vpop.permute.xlu0 %1470
        %v1472 = vld [vmem:[#allocation2] sm:$0xff]
        %v1473 = vld [vmem:[#allocation2 + $0x8] sm:$0xff]
        %v1474 = vld [vmem:[#allocation2 + $0x10] sm:$0xff]
        %v1475 = vld [vmem:[#allocation2 + $0x18] sm:$0xff]
        %v1476 = vld [vmem:[#allocation2 + $0x20] sm:$0xff]
        %v1477 = vld [vmem:[#allocation2 + $0x28] sm:$0xff]
        %v1478 = vld [vmem:[#allocation2 + $0x30] sm:$0xff]
        %v1479 = vld [vmem:[#allocation2 + $0x38] sm:$0xff]
        %v1480 = vld [vmem:[#allocation3] sm:$0xff]
        %v1481 = vld [vmem:[#allocation3 + $0x8] sm:$0xff]
        %v1482 = vld [vmem:[#allocation3 + $0x10] sm:$0xff]
        %v1483 = vld [vmem:[#allocation3 + $0x18] sm:$0xff]
        %v1484 = vld [vmem:[#allocation3 + $0x20] sm:$0xff]
        %v1485 = vld [vmem:[#allocation3 + $0x28] sm:$0xff]
        %v1486 = vld [vmem:[#allocation3 + $0x30] sm:$0xff]
        %v1487 = vld [vmem:[#allocation3 + $0x38] sm:$0xff]
        %vm1488 = vcmask 64512
        %v1489 = vsel %vm1488, %v1456, 0
        %v1491 = vsel %vm1488, %v1457, 0
        %v1494 = vsel %vm1488, %v1472, 0
        %v1497 = vsel %vm1488, %v1473, 0
        %1499 = vmatprep.subr.mxu0 0.0
        %1500 = vmatpush1.xpose.msra.mxu0 %v1494
        %1501 = vmatprep.subr.mxu0 0.0
        %1502 = vmatpush1.xpose.msra.mxu0 %v1497
        %1503 = vmatprep.subr.mxu0 0.0
        %1504 = vmatpush1.xpose.msra.mxu0 0.0
        %1505 = vmatprep.subr.mxu0 0.0
        %1506 = vmatpush1.xpose.msra.mxu0 0.0
        %1507 = vmatprep.subr.mxu0 0.0
        %1508 = vmatpush1.xpose.msra.mxu0 0.0
        %1509 = vmatprep.subr.mxu0 0.0
        %1510 = vmatpush1.xpose.msra.mxu0 0.0
        %1511 = vmatprep.subr.mxu0 0.0
        %1512 = vmatpush1.xpose.msra.mxu0 0.0
        %1513 = vmatprep.subr.mxu0 0.0
        %1514 = vmatpush1.xpose.msra.mxu0 0.0
        %1515 = vmatprep.subr.mxu0 0.0
        %1516 = vmatpush1.xpose.msra.mxu0 0.0
        %1517 = vmatprep.subr.mxu0 0.0
        %1518 = vmatpush1.xpose.msra.mxu0 0.0
        %1519 = vmatprep.subr.mxu0 0.0
        %1520 = vmatpush1.xpose.msra.mxu0 0.0
        %1521 = vmatprep.subr.mxu0 0.0
        %1522 = vmatpush1.xpose.msra.mxu0 0.0
        %1523 = vmatprep.subr.mxu0 0.0
        %1524 = vmatpush1.xpose.msra.mxu0 0.0
        %1525 = vmatprep.subr.mxu0 0.0
        %1526 = vmatpush1.xpose.msra.mxu0 0.0
        %1527 = vmatprep.subr.mxu0 0.0
        %1528 = vmatpush1.xpose.msra.mxu0 0.0
        %1529 = vmatprep.subr.mxu0 0.0
        %1530 = vmatpush1.xpose.msra.mxu0 0.0
        %1531 = vmatprep.subr.mxu0 0.0
        %1532 = vmatpush1.xpose.msra.mxu0 0.0
        %1533 = vmatprep.subr.mxu0 0.0
        %1534 = vmatpush1.xpose.msra.mxu0 0.0
        %1535 = vmatprep.subr.mxu0 0.0
        %1536 = vmatpush1.xpose.msra.mxu0 0.0
        %1537 = vmatprep.subr.mxu0 0.0
        %1538 = vmatpush1.xpose.msra.mxu0 0.0
        %1539 = vmatprep.subr.mxu0 0.0
        %1540 = vmatpush1.xpose.msra.mxu0 0.0
        %1541 = vmatprep.subr.mxu0 0.0
        %1542 = vmatpush1.xpose.msra.mxu0 0.0
        %1543 = vmatprep.subr.mxu0 0.0
        %1544 = vmatpush1.xpose.msra.mxu0 0.0
        %1545 = vmatprep.subr.mxu0 0.0
        %1546 = vmatpush1.xpose.msra.mxu0 0.0
        %1547 = vmatprep.subr.mxu0 0.0
        %1548 = vmatpush1.xpose.msra.mxu0 0.0
        %1549 = vmatprep.subr.mxu0 0.0
        %1550 = vmatpush1.xpose.msra.mxu0 0.0
        %1551 = vmatprep.subr.mxu0 0.0
        %1552 = vmatpush1.xpose.msra.mxu0 0.0
        %1553 = vmatprep.subr.mxu0 0.0
        %1554 = vmatpush1.xpose.msra.mxu0 0.0
        %1555 = vmatprep.subr.mxu0 0.0
        %1556 = vmatpush1.xpose.msra.mxu0 0.0
        %1557 = vmatprep.subr.mxu0 0.0
        %1558 = vmatpush1.xpose.msra.mxu0 0.0
        %1559 = vmatprep.subr.mxu0 0.0
        %1560 = vmatpush1.xpose.msra.mxu0 0.0
        %1561 = vmatprep.subr.mxu0 0.0
        %1562 = vmatpush1.xpose.msra.mxu0 0.0
        %1563 = vmatprep.mubr.f32.mxu0 0.0
        %1564 = vmatmul.mubr.f32.gmra.mrb[0].mxu0 %v1489
        %v1565 = vpop.f32.mrb[0].mxu0
        %v1566 = vadd.f32 0.0, %v1565
        %v1567 = vpop.f32.mrb[0].mxu0
        %1568 = vmatprep.mubr.f32.mxu0 0.0
        %1569 = vmatmul.mubr.f32.gmra.mrb[0].mxu0 %v1491
        %v1570 = vpop.f32.mrb[0].mxu0
        %v1571 = vadd.f32 0.0, %v1570
        %v1572 = vpop.f32.mrb[0].mxu0
        %1573 = vdwg.mxu0
        %v1574 = vsel %vm1488, %v1461, 0
        %v1576 = vsel %vm1488, %v1463, 0
        %v1579 = vsel %vm1488, %v1474, 0
        %v1582 = vsel %vm1488, %v1475, 0
        %1584 = vmatprep.subr.mxu0 0.0
        %1585 = vmatpush1.xpose.msra.mxu0 %v1579
        %1586 = vmatprep.subr.mxu0 0.0
        %1587 = vmatpush1.xpose.msra.mxu0 %v1582
        %1588 = vmatprep.subr.mxu0 0.0
        %1589 = vmatpush1.xpose.msra.mxu0 0.0
        %1590 = vmatprep.subr.mxu0 0.0
        %1591 = vmatpush1.xpose.msra.mxu0 0.0
        %1592 = vmatprep.subr.mxu0 0.0
        %1593 = vmatpush1.xpose.msra.mxu0 0.0
        %1594 = vmatprep.subr.mxu0 0.0
        %1595 = vmatpush1.xpose.msra.mxu0 0.0
        %1596 = vmatprep.subr.mxu0 0.0
        %1597 = vmatpush1.xpose.msra.mxu0 0.0
        %1598 = vmatprep.subr.mxu0 0.0
        %1599 = vmatpush1.xpose.msra.mxu0 0.0
        %1600 = vmatprep.subr.mxu0 0.0
        %1601 = vmatpush1.xpose.msra.mxu0 0.0
        %1602 = vmatprep.subr.mxu0 0.0
        %1603 = vmatpush1.xpose.msra.mxu0 0.0
        %1604 = vmatprep.subr.mxu0 0.0
        %1605 = vmatpush1.xpose.msra.mxu0 0.0
        %1606 = vmatprep.subr.mxu0 0.0
        %1607 = vmatpush1.xpose.msra.mxu0 0.0
        %1608 = vmatprep.subr.mxu0 0.0
        %1609 = vmatpush1.xpose.msra.mxu0 0.0
        %1610 = vmatprep.subr.mxu0 0.0
        %1611 = vmatpush1.xpose.msra.mxu0 0.0
        %1612 = vmatprep.subr.mxu0 0.0
        %1613 = vmatpush1.xpose.msra.mxu0 0.0
        %1614 = vmatprep.subr.mxu0 0.0
        %1615 = vmatpush1.xpose.msra.mxu0 0.0
        %1616 = vmatprep.subr.mxu0 0.0
        %1617 = vmatpush1.xpose.msra.mxu0 0.0
        %1618 = vmatprep.subr.mxu0 0.0
        %1619 = vmatpush1.xpose.msra.mxu0 0.0
        %1620 = vmatprep.subr.mxu0 0.0
        %1621 = vmatpush1.xpose.msra.mxu0 0.0
        %1622 = vmatprep.subr.mxu0 0.0
        %1623 = vmatpush1.xpose.msra.mxu0 0.0
        %1624 = vmatprep.subr.mxu0 0.0
        %1625 = vmatpush1.xpose.msra.mxu0 0.0
        %1626 = vmatprep.subr.mxu0 0.0
        %1627 = vmatpush1.xpose.msra.mxu0 0.0
        %1628 = vmatprep.subr.mxu0 0.0
        %1629 = vmatpush1.xpose.msra.mxu0 0.0
        %1630 = vmatprep.subr.mxu0 0.0
        %1631 = vmatpush1.xpose.msra.mxu0 0.0
        %1632 = vmatprep.subr.mxu0 0.0
        %1633 = vmatpush1.xpose.msra.mxu0 0.0
        %1634 = vmatprep.subr.mxu0 0.0
        %1635 = vmatpush1.xpose.msra.mxu0 0.0
        %1636 = vmatprep.subr.mxu0 0.0
        %1637 = vmatpush1.xpose.msra.mxu0 0.0
        %1638 = vmatprep.subr.mxu0 0.0
        %1639 = vmatpush1.xpose.msra.mxu0 0.0
        %1640 = vmatprep.subr.mxu0 0.0
        %1641 = vmatpush1.xpose.msra.mxu0 0.0
        %1642 = vmatprep.subr.mxu0 0.0
        %1643 = vmatpush1.xpose.msra.mxu0 0.0
        %1644 = vmatprep.subr.mxu0 0.0
        %1645 = vmatpush1.xpose.msra.mxu0 0.0
        %1646 = vmatprep.subr.mxu0 0.0
        %1647 = vmatpush1.xpose.msra.mxu0 0.0
        %1648 = vmatprep.mubr.f32.mxu0 0.0
        %1649 = vmatmul.mubr.f32.gmra.mrb[0].mxu0 %v1574
        %v1650 = vpop.f32.mrb[0].mxu0
        %v1651 = vadd.f32 0.0, %v1650
        %v1652 = vpop.f32.mrb[0].mxu0
        %1653 = vmatprep.mubr.f32.mxu0 0.0
        %1654 = vmatmul.mubr.f32.gmra.mrb[0].mxu0 %v1576
        %v1655 = vpop.f32.mrb[0].mxu0
        %v1656 = vadd.f32 0.0, %v1655
        %v1657 = vpop.f32.mrb[0].mxu0
        %1658 = vdwg.mxu0
        %v1659 = vsel %vm1488, %v1465, 0
        %v1661 = vsel %vm1488, %v1467, 0
        %v1664 = vsel %vm1488, %v1476, 0
        %v1667 = vsel %vm1488, %v1477, 0
        %1669 = vmatprep.subr.mxu0 0.0
        %1670 = vmatpush1.xpose.msra.mxu0 %v1664
        %1671 = vmatprep.subr.mxu0 0.0
        %1672 = vmatpush1.xpose.msra.mxu0 %v1667
        %1673 = vmatprep.subr.mxu0 0.0
        %1674 = vmatpush1.xpose.msra.mxu0 0.0
        %1675 = vmatprep.subr.mxu0 0.0
        %1676 = vmatpush1.xpose.msra.mxu0 0.0
        %1677 = vmatprep.subr.mxu0 0.0
        %1678 = vmatpush1.xpose.msra.mxu0 0.0
        %1679 = vmatprep.subr.mxu0 0.0
        %1680 = vmatpush1.xpose.msra.mxu0 0.0
        %1681 = vmatprep.subr.mxu0 0.0
        %1682 = vmatpush1.xpose.msra.mxu0 0.0
        %1683 = vmatprep.subr.mxu0 0.0
        %1684 = vmatpush1.xpose.msra.mxu0 0.0
        %1685 = vmatprep.subr.mxu0 0.0
        %1686 = vmatpush1.xpose.msra.mxu0 0.0
        %1687 = vmatprep.subr.mxu0 0.0
        %1688 = vmatpush1.xpose.msra.mxu0 0.0
        %1689 = vmatprep.subr.mxu0 0.0
        %1690 = vmatpush1.xpose.msra.mxu0 0.0
        %1691 = vmatprep.subr.mxu0 0.0
        %1692 = vmatpush1.xpose.msra.mxu0 0.0
        %1693 = vmatprep.subr.mxu0 0.0
        %1694 = vmatpush1.xpose.msra.mxu0 0.0
        %1695 = vmatprep.subr.mxu0 0.0
        %1696 = vmatpush1.xpose.msra.mxu0 0.0
        %1697 = vmatprep.subr.mxu0 0.0
        %1698 = vmatpush1.xpose.msra.mxu0 0.0
        %1699 = vmatprep.subr.mxu0 0.0
        %1700 = vmatpush1.xpose.msra.mxu0 0.0
        %1701 = vmatprep.subr.mxu0 0.0
        %1702 = vmatpush1.xpose.msra.mxu0 0.0
        %1703 = vmatprep.subr.mxu0 0.0
        %1704 = vmatpush1.xpose.msra.mxu0 0.0
        %1705 = vmatprep.subr.mxu0 0.0
        %1706 = vmatpush1.xpose.msra.mxu0 0.0
        %1707 = vmatprep.subr.mxu0 0.0
        %1708 = vmatpush1.xpose.msra.mxu0 0.0
        %1709 = vmatprep.subr.mxu0 0.0
        %1710 = vmatpush1.xpose.msra.mxu0 0.0
        %1711 = vmatprep.subr.mxu0 0.0
        %1712 = vmatpush1.xpose.msra.mxu0 0.0
        %1713 = vmatprep.subr.mxu0 0.0
        %1714 = vmatpush1.xpose.msra.mxu0 0.0
        %1715 = vmatprep.subr.mxu0 0.0
        %1716 = vmatpush1.xpose.msra.mxu0 0.0
        %1717 = vmatprep.subr.mxu0 0.0
        %1718 = vmatpush1.xpose.msra.mxu0 0.0
        %1719 = vmatprep.subr.mxu0 0.0
        %1720 = vmatpush1.xpose.msra.mxu0 0.0
        %1721 = vmatprep.subr.mxu0 0.0
        %1722 = vmatpush1.xpose.msra.mxu0 0.0
        %1723 = vmatprep.subr.mxu0 0.0
        %1724 = vmatpush1.xpose.msra.mxu0 0.0
        %1725 = vmatprep.subr.mxu0 0.0
        %1726 = vmatpush1.xpose.msra.mxu0 0.0
        %1727 = vmatprep.subr.mxu0 0.0
        %1728 = vmatpush1.xpose.msra.mxu0 0.0
        %1729 = vmatprep.subr.mxu0 0.0
        %1730 = vmatpush1.xpose.msra.mxu0 0.0
        %1731 = vmatprep.subr.mxu0 0.0
        %1732 = vmatpush1.xpose.msra.mxu0 0.0
        %1733 = vmatprep.mubr.f32.mxu0 0.0
        %1734 = vmatmul.mubr.f32.gmra.mrb[0].mxu0 %v1659
        %v1735 = vpop.f32.mrb[0].mxu0
        %v1736 = vadd.f32 0.0, %v1735
        %v1737 = vpop.f32.mrb[0].mxu0
        %1738 = vmatprep.mubr.f32.mxu0 0.0
        %1739 = vmatmul.mubr.f32.gmra.mrb[0].mxu0 %v1661
        %v1740 = vpop.f32.mrb[0].mxu0
        %v1741 = vadd.f32 0.0, %v1740
        %v1742 = vpop.f32.mrb[0].mxu0
        %1743 = vdwg.mxu0
        %v1744 = vsel %vm1488, %v1469, 0
        %v1746 = vsel %vm1488, %v1471, 0
        %v1749 = vsel %vm1488, %v1478, 0
        %v1752 = vsel %vm1488, %v1479, 0
        %1754 = vmatprep.subr.mxu0 0.0
        %1755 = vmatpush1.xpose.msra.mxu0 %v1749
        %1756 = vmatprep.subr.mxu0 0.0
        %1757 = vmatpush1.xpose.msra.mxu0 %v1752
        %1758 = vmatprep.subr.mxu0 0.0
        %1759 = vmatpush1.xpose.msra.mxu0 0.0
        %1760 = vmatprep.subr.mxu0 0.0
        %1761 = vmatpush1.xpose.msra.mxu0 0.0
        %1762 = vmatprep.subr.mxu0 0.0
        %1763 = vmatpush1.xpose.msra.mxu0 0.0
        %1764 = vmatprep.subr.mxu0 0.0
        %1765 = vmatpush1.xpose.msra.mxu0 0.0
        %1766 = vmatprep.subr.mxu0 0.0
        %1767 = vmatpush1.xpose.msra.mxu0 0.0
        %1768 = vmatprep.subr.mxu0 0.0
        %1769 = vmatpush1.xpose.msra.mxu0 0.0
        %1770 = vmatprep.subr.mxu0 0.0
        %1771 = vmatpush1.xpose.msra.mxu0 0.0
        %1772 = vmatprep.subr.mxu0 0.0
        %1773 = vmatpush1.xpose.msra.mxu0 0.0
        %1774 = vmatprep.subr.mxu0 0.0
        %1775 = vmatpush1.xpose.msra.mxu0 0.0
        %1776 = vmatprep.subr.mxu0 0.0
        %1777 = vmatpush1.xpose.msra.mxu0 0.0
        %1778 = vmatprep.subr.mxu0 0.0
        %1779 = vmatpush1.xpose.msra.mxu0 0.0
        %1780 = vmatprep.subr.mxu0 0.0
        %1781 = vmatpush1.xpose.msra.mxu0 0.0
        %1782 = vmatprep.subr.mxu0 0.0
        %1783 = vmatpush1.xpose.msra.mxu0 0.0
        %1784 = vmatprep.subr.mxu0 0.0
        %1785 = vmatpush1.xpose.msra.mxu0 0.0
        %1786 = vmatprep.subr.mxu0 0.0
        %1787 = vmatpush1.xpose.msra.mxu0 0.0
        %1788 = vmatprep.subr.mxu0 0.0
        %1789 = vmatpush1.xpose.msra.mxu0 0.0
        %1790 = vmatprep.subr.mxu0 0.0
        %1791 = vmatpush1.xpose.msra.mxu0 0.0
        %1792 = vmatprep.subr.mxu0 0.0
        %1793 = vmatpush1.xpose.msra.mxu0 0.0
        %1794 = vmatprep.subr.mxu0 0.0
        %1795 = vmatpush1.xpose.msra.mxu0 0.0
        %1796 = vmatprep.subr.mxu0 0.0
        %1797 = vmatpush1.xpose.msra.mxu0 0.0
        %1798 = vmatprep.subr.mxu0 0.0
        %1799 = vmatpush1.xpose.msra.mxu0 0.0
        %1800 = vmatprep.subr.mxu0 0.0
        %1801 = vmatpush1.xpose.msra.mxu0 0.0
        %1802 = vmatprep.subr.mxu0 0.0
        %1803 = vmatpush1.xpose.msra.mxu0 0.0
        %1804 = vmatprep.subr.mxu0 0.0
        %1805 = vmatpush1.xpose.msra.mxu0 0.0
        %1806 = vmatprep.subr.mxu0 0.0
        %1807 = vmatpush1.xpose.msra.mxu0 0.0
        %1808 = vmatprep.subr.mxu0 0.0
        %1809 = vmatpush1.xpose.msra.mxu0 0.0
        %1810 = vmatprep.subr.mxu0 0.0
        %1811 = vmatpush1.xpose.msra.mxu0 0.0
        %1812 = vmatprep.subr.mxu0 0.0
        %1813 = vmatpush1.xpose.msra.mxu0 0.0
        %1814 = vmatprep.subr.mxu0 0.0
        %1815 = vmatpush1.xpose.msra.mxu0 0.0
        %1816 = vmatprep.subr.mxu0 0.0
        %1817 = vmatpush1.xpose.msra.mxu0 0.0
        %1818 = vmatprep.mubr.f32.mxu0 0.0
        %1819 = vmatmul.mubr.f32.gmra.mrb[0].mxu0 %v1744
        %v1820 = vpop.f32.mrb[0].mxu0
        %v1821 = vadd.f32 0.0, %v1820
        %v1822 = vpop.f32.mrb[0].mxu0
        %1823 = vmatprep.mubr.f32.mxu0 0.0
        %1824 = vmatmul.mubr.f32.gmra.mrb[0].mxu0 %v1746
        %v1825 = vpop.f32.mrb[0].mxu0
        %v1826 = vadd.f32 0.0, %v1825
        %v1827 = vpop.f32.mrb[0].mxu0
        %1828 = vdwg.mxu0
        %v1829 = vlaneseq
        %v1830 = vshrl.u32 %v1829, 7
        %v1831 = vadd.s32 %v1830, 8
        %v1832 = vstv %s955
        %v1833 = vadd.s32 %v1830, %v1832
        %v1834 = vadd.s32 %v1831, %v1832
        %v1835 = vlaneseq
        %v1836 = vand.u32 %v1835, 127
        %vm1837 = vcmp.le.s32.totalorder %v1836, %v1833
        %vm1838 = vcmp.le.s32.totalorder %v1836, %v1834
        %v1839 = vsel %vm1837, 1, 0
        %v1840 = vsel %vm1838, 1, 0
        %vm1841 = vcmp.eq.s32.totalorder %v1839, 1
        %vm1842 = vcmp.eq.s32.totalorder %v1840, 1
        %v1843 = vsel %vm1841, %v1566, -1e+30
        %v1844 = vsel %vm1842, %v1571, -1e+30
        %v1845 = vsel %vm1841, %v1651, -1e+30
        %v1846 = vsel %vm1842, %v1656, -1e+30
        %v1847 = vsel %vm1841, %v1736, -1e+30
        %v1848 = vsel %vm1842, %v1741, -1e+30
        %v1849 = vsel %vm1841, %v1821, -1e+30
        %v1850 = vsel %vm1842, %v1826, -1e+30
        %vm1851 = vcmask 130048
        %v1852 = vsel %vm1851, %v1843, -inf
        %1853 = vmax.xlane.f32.xlu0 %v1852
        %v1854 = vpop.xlane.xlu0 %1853
        %v1855 = vsel %vm1851, %v1844, -inf
        %1856 = vmax.xlane.f32.xlu0 %v1855
        %v1857 = vpop.xlane.xlu0 %1856
        %v1858 = vsel %vm1851, %v1845, -inf
        %1859 = vmax.xlane.f32.xlu0 %v1858
        %v1860 = vpop.xlane.xlu0 %1859
        %v1861 = vsel %vm1851, %v1846, -inf
        %1862 = vmax.xlane.f32.xlu0 %v1861
        %v1863 = vpop.xlane.xlu0 %1862
        %v1864 = vsel %vm1851, %v1847, -inf
        %1865 = vmax.xlane.f32.xlu0 %v1864
        %v1866 = vpop.xlane.xlu0 %1865
        %v1867 = vsel %vm1851, %v1848, -inf
        %1868 = vmax.xlane.f32.xlu0 %v1867
        %v1869 = vpop.xlane.xlu0 %1868
        %v1870 = vsel %vm1851, %v1849, -inf
        %1871 = vmax.xlane.f32.xlu0 %v1870
        %v1872 = vpop.xlane.xlu0 %1871
        %v1873 = vsel %vm1851, %v1850, -inf
        %1874 = vmax.xlane.f32.xlu0 %v1873
        %v1875 = vpop.xlane.xlu0 %1874
        %v1876 = vsub.f32 %v1843, %v1854
        %v1877 = vsub.f32 %v1844, %v1857
        %v1878 = vsub.f32 %v1845, %v1860
        %v1879 = vsub.f32 %v1846, %v1863
        %v1880 = vsub.f32 %v1847, %v1866
        %v1881 = vsub.f32 %v1848, %v1869
        %v1882 = vsub.f32 %v1849, %v1872
        %v1883 = vsub.f32 %v1850, %v1875
        %v1884 = vmul.f32 %v1876, 1.442695
        %v1885 = vpow.pop %v1884
        %v1886 = vmul.f32 %v1877, 1.442695
        %v1887 = vpow.pop %v1886
        %v1888 = vmul.f32 %v1878, 1.442695
        %v1889 = vpow.pop %v1888
        %v1890 = vmul.f32 %v1879, 1.442695
        %v1891 = vpow.pop %v1890
        %v1892 = vmul.f32 %v1880, 1.442695
        %v1893 = vpow.pop %v1892
        %v1894 = vmul.f32 %v1881, 1.442695
        %v1895 = vpow.pop %v1894
        %v1896 = vmul.f32 %v1882, 1.442695
        %v1897 = vpow.pop %v1896
        %v1898 = vmul.f32 %v1883, 1.442695
        %v1899 = vpow.pop %v1898
        %v1900 = vsel %vm1851, %v1885, 0.0
        %1901 = vadd.xlane.f32.xlu0 %v1900
        %v1902 = vpop.xlane.xlu0 %1901
        %v1903 = vsel %vm1851, %v1887, 0.0
        %1904 = vadd.xlane.f32.xlu0 %v1903
        %v1905 = vpop.xlane.xlu0 %1904
        %v1906 = vsel %vm1851, %v1889, 0.0
        %1907 = vadd.xlane.f32.xlu0 %v1906
        %v1908 = vpop.xlane.xlu0 %1907
        %v1909 = vsel %vm1851, %v1891, 0.0
        %1910 = vadd.xlane.f32.xlu0 %v1909
        %v1911 = vpop.xlane.xlu0 %1910
        %v1912 = vsel %vm1851, %v1893, 0.0
        %1913 = vadd.xlane.f32.xlu0 %v1912
        %v1914 = vpop.xlane.xlu0 %1913
        %v1915 = vsel %vm1851, %v1895, 0.0
        %1916 = vadd.xlane.f32.xlu0 %v1915
        %v1917 = vpop.xlane.xlu0 %1916
        %v1918 = vsel %vm1851, %v1897, 0.0
        %1919 = vadd.xlane.f32.xlu0 %v1918
        %v1920 = vpop.xlane.xlu0 %1919
        %v1921 = vsel %vm1851, %v1899, 0.0
        %1922 = vadd.xlane.f32.xlu0 %v1921
        %v1923 = vpop.xlane.xlu0 %1922
        %v1924 = vrcp.pop %v1902
        %v1925 = vrcp.pop %v1905
        %v1926 = vrcp.pop %v1908
        %v1927 = vrcp.pop %v1911
        %v1928 = vrcp.pop %v1914
        %v1929 = vrcp.pop %v1917
        %v1930 = vrcp.pop %v1920
        %v1931 = vrcp.pop %v1923
        %v1932 = vmul.f32 %v1885, %v1924
        %v1933 = vmul.f32 %v1887, %v1925
        %v1934 = vmul.f32 %v1889, %v1926
        %v1935 = vmul.f32 %v1891, %v1927
        %v1936 = vmul.f32 %v1893, %v1928
        %v1937 = vmul.f32 %v1895, %v1929
        %v1938 = vmul.f32 %v1897, %v1930
        %v1939 = vmul.f32 %v1899, %v1931
        %v1941 = vsel %vm1851, %v1932, 0
        %v1944 = vsel %vm1851, %v1933, 0
        %1946 = vmatprep.subr.mxu0 0.0
        %1947 = vmatpush1.msra.mxu0 %v1480
        %1948 = vmatprep.subr.mxu0 0.0
        %1949 = vmatpush1.msra.mxu0 %v1481
        %1950 = vmatprep.subr.mxu0 0.0
        %1951 = vmatpush1.msra.mxu0 0.0
        %1952 = vmatprep.subr.mxu0 0.0
        %1953 = vmatpush1.msra.mxu0 0.0
        %1954 = vmatprep.subr.mxu0 0.0
        %1955 = vmatpush1.msra.mxu0 0.0
        %1956 = vmatprep.subr.mxu0 0.0
        %1957 = vmatpush1.msra.mxu0 0.0
        %1958 = vmatprep.subr.mxu0 0.0
        %1959 = vmatpush1.msra.mxu0 0.0
        %1960 = vmatprep.subr.mxu0 0.0
        %1961 = vmatpush1.msra.mxu0 0.0
        %1962 = vmatprep.subr.mxu0 0.0
        %1963 = vmatpush1.msra.mxu0 0.0
        %1964 = vmatprep.subr.mxu0 0.0
        %1965 = vmatpush1.msra.mxu0 0.0
        %1966 = vmatprep.subr.mxu0 0.0
        %1967 = vmatpush1.msra.mxu0 0.0
        %1968 = vmatprep.subr.mxu0 0.0
        %1969 = vmatpush1.msra.mxu0 0.0
        %1970 = vmatprep.subr.mxu0 0.0
        %1971 = vmatpush1.msra.mxu0 0.0
        %1972 = vmatprep.subr.mxu0 0.0
        %1973 = vmatpush1.msra.mxu0 0.0
        %1974 = vmatprep.subr.mxu0 0.0
        %1975 = vmatpush1.msra.mxu0 0.0
        %1976 = vmatprep.subr.mxu0 0.0
        %1977 = vmatpush1.msra.mxu0 0.0
        %1978 = vmatprep.subr.mxu0 0.0
        %1979 = vmatpush1.msra.mxu0 0.0
        %1980 = vmatprep.subr.mxu0 0.0
        %1981 = vmatpush1.msra.mxu0 0.0
        %1982 = vmatprep.subr.mxu0 0.0
        %1983 = vmatpush1.msra.mxu0 0.0
        %1984 = vmatprep.subr.mxu0 0.0
        %1985 = vmatpush1.msra.mxu0 0.0
        %1986 = vmatprep.subr.mxu0 0.0
        %1987 = vmatpush1.msra.mxu0 0.0
        %1988 = vmatprep.subr.mxu0 0.0
        %1989 = vmatpush1.msra.mxu0 0.0
        %1990 = vmatprep.subr.mxu0 0.0
        %1991 = vmatpush1.msra.mxu0 0.0
        %1992 = vmatprep.subr.mxu0 0.0
        %1993 = vmatpush1.msra.mxu0 0.0
        %1994 = vmatprep.subr.mxu0 0.0
        %1995 = vmatpush1.msra.mxu0 0.0
        %1996 = vmatprep.subr.mxu0 0.0
        %1997 = vmatpush1.msra.mxu0 0.0
        %1998 = vmatprep.subr.mxu0 0.0
        %1999 = vmatpush1.msra.mxu0 0.0
        %2000 = vmatprep.subr.mxu0 0.0
        %2001 = vmatpush1.msra.mxu0 0.0
        %2002 = vmatprep.subr.mxu0 0.0
        %2003 = vmatpush1.msra.mxu0 0.0
        %2004 = vmatprep.subr.mxu0 0.0
        %2005 = vmatpush1.msra.mxu0 0.0
        %2006 = vmatprep.subr.mxu0 0.0
        %2007 = vmatpush1.msra.mxu0 0.0
        %2008 = vmatprep.subr.mxu0 0.0
        %2009 = vmatpush1.msra.mxu0 0.0
        %2010 = vmatprep.mubr.f32.mxu0 0.0
        %2011 = vmatmul.mubr.f32.gmra.mrb[0].mxu0 %v1941
        %v2012 = vpop.f32.mrb[0].mxu0
        %v2013 = vadd.f32 0.0, %v2012
        %v2014 = vpop.f32.mrb[0].mxu0
        %2015 = vmatprep.mubr.f32.mxu0 0.0
        %2016 = vmatmul.mubr.f32.gmra.mrb[0].mxu0 %v1944
        %v2017 = vpop.f32.mrb[0].mxu0
        %v2018 = vadd.f32 0.0, %v2017
        %v2019 = vpop.f32.mrb[0].mxu0
        %2020 = vdwg.mxu0
        %v2022 = vsel %vm1851, %v1934, 0
        %v2025 = vsel %vm1851, %v1935, 0
        %2027 = vmatprep.subr.mxu0 0.0
        %2028 = vmatpush1.msra.mxu0 %v1482
        %2029 = vmatprep.subr.mxu0 0.0
        %2030 = vmatpush1.msra.mxu0 %v1483
        %2031 = vmatprep.subr.mxu0 0.0
        %2032 = vmatpush1.msra.mxu0 0.0
        %2033 = vmatprep.subr.mxu0 0.0
        %2034 = vmatpush1.msra.mxu0 0.0
        %2035 = vmatprep.subr.mxu0 0.0
        %2036 = vmatpush1.msra.mxu0 0.0
        %2037 = vmatprep.subr.mxu0 0.0
        %2038 = vmatpush1.msra.mxu0 0.0
        %2039 = vmatprep.subr.mxu0 0.0
        %2040 = vmatpush1.msra.mxu0 0.0
        %2041 = vmatprep.subr.mxu0 0.0
        %2042 = vmatpush1.msra.mxu0 0.0
        %2043 = vmatprep.subr.mxu0 0.0
        %2044 = vmatpush1.msra.mxu0 0.0
        %2045 = vmatprep.subr.mxu0 0.0
        %2046 = vmatpush1.msra.mxu0 0.0
        %2047 = vmatprep.subr.mxu0 0.0
        %2048 = vmatpush1.msra.mxu0 0.0
        %2049 = vmatprep.subr.mxu0 0.0
        %2050 = vmatpush1.msra.mxu0 0.0
        %2051 = vmatprep.subr.mxu0 0.0
        %2052 = vmatpush1.msra.mxu0 0.0
        %2053 = vmatprep.subr.mxu0 0.0
        %2054 = vmatpush1.msra.mxu0 0.0
        %2055 = vmatprep.subr.mxu0 0.0
        %2056 = vmatpush1.msra.mxu0 0.0
        %2057 = vmatprep.subr.mxu0 0.0
        %2058 = vmatpush1.msra.mxu0 0.0
        %2059 = vmatprep.subr.mxu0 0.0
        %2060 = vmatpush1.msra.mxu0 0.0
        %2061 = vmatprep.subr.mxu0 0.0
        %2062 = vmatpush1.msra.mxu0 0.0
        %2063 = vmatprep.subr.mxu0 0.0
        %2064 = vmatpush1.msra.mxu0 0.0
        %2065 = vmatprep.subr.mxu0 0.0
        %2066 = vmatpush1.msra.mxu0 0.0
        %2067 = vmatprep.subr.mxu0 0.0
        %2068 = vmatpush1.msra.mxu0 0.0
        %2069 = vmatprep.subr.mxu0 0.0
        %2070 = vmatpush1.msra.mxu0 0.0
        %2071 = vmatprep.subr.mxu0 0.0
        %2072 = vmatpush1.msra.mxu0 0.0
        %2073 = vmatprep.subr.mxu0 0.0
        %2074 = vmatpush1.msra.mxu0 0.0
        %2075 = vmatprep.subr.mxu0 0.0
        %2076 = vmatpush1.msra.mxu0 0.0
        %2077 = vmatprep.subr.mxu0 0.0
        %2078 = vmatpush1.msra.mxu0 0.0
        %2079 = vmatprep.subr.mxu0 0.0
        %2080 = vmatpush1.msra.mxu0 0.0
        %2081 = vmatprep.subr.mxu0 0.0
        %2082 = vmatpush1.msra.mxu0 0.0
        %2083 = vmatprep.subr.mxu0 0.0
        %2084 = vmatpush1.msra.mxu0 0.0
        %2085 = vmatprep.subr.mxu0 0.0
        %2086 = vmatpush1.msra.mxu0 0.0
        %2087 = vmatprep.subr.mxu0 0.0
        %2088 = vmatpush1.msra.mxu0 0.0
        %2089 = vmatprep.subr.mxu0 0.0
        %2090 = vmatpush1.msra.mxu0 0.0
        %2091 = vmatprep.mubr.f32.mxu0 0.0
        %2092 = vmatmul.mubr.f32.gmra.mrb[0].mxu0 %v2022
        %v2093 = vpop.f32.mrb[0].mxu0
        %v2094 = vadd.f32 0.0, %v2093
        %v2095 = vpop.f32.mrb[0].mxu0
        %2096 = vmatprep.mubr.f32.mxu0 0.0
        %2097 = vmatmul.mubr.f32.gmra.mrb[0].mxu0 %v2025
        %v2098 = vpop.f32.mrb[0].mxu0
        %v2099 = vadd.f32 0.0, %v2098
        %v2100 = vpop.f32.mrb[0].mxu0
        %2101 = vdwg.mxu0
        %v2103 = vsel %vm1851, %v1936, 0
        %v2106 = vsel %vm1851, %v1937, 0
        %2108 = vmatprep.subr.mxu0 0.0
        %2109 = vmatpush1.msra.mxu0 %v1484
        %2110 = vmatprep.subr.mxu0 0.0
        %2111 = vmatpush1.msra.mxu0 %v1485
        %2112 = vmatprep.subr.mxu0 0.0
        %2113 = vmatpush1.msra.mxu0 0.0
        %2114 = vmatprep.subr.mxu0 0.0
        %2115 = vmatpush1.msra.mxu0 0.0
        %2116 = vmatprep.subr.mxu0 0.0
        %2117 = vmatpush1.msra.mxu0 0.0
        %2118 = vmatprep.subr.mxu0 0.0
        %2119 = vmatpush1.msra.mxu0 0.0
        %2120 = vmatprep.subr.mxu0 0.0
        %2121 = vmatpush1.msra.mxu0 0.0
        %2122 = vmatprep.subr.mxu0 0.0
        %2123 = vmatpush1.msra.mxu0 0.0
        %2124 = vmatprep.subr.mxu0 0.0
        %2125 = vmatpush1.msra.mxu0 0.0
        %2126 = vmatprep.subr.mxu0 0.0
        %2127 = vmatpush1.msra.mxu0 0.0
        %2128 = vmatprep.subr.mxu0 0.0
        %2129 = vmatpush1.msra.mxu0 0.0
        %2130 = vmatprep.subr.mxu0 0.0
        %2131 = vmatpush1.msra.mxu0 0.0
        %2132 = vmatprep.subr.mxu0 0.0
        %2133 = vmatpush1.msra.mxu0 0.0
        %2134 = vmatprep.subr.mxu0 0.0
        %2135 = vmatpush1.msra.mxu0 0.0
        %2136 = vmatprep.subr.mxu0 0.0
        %2137 = vmatpush1.msra.mxu0 0.0
        %2138 = vmatprep.subr.mxu0 0.0
        %2139 = vmatpush1.msra.mxu0 0.0
        %2140 = vmatprep.subr.mxu0 0.0
        %2141 = vmatpush1.msra.mxu0 0.0
        %2142 = vmatprep.subr.mxu0 0.0
        %2143 = vmatpush1.msra.mxu0 0.0
        %2144 = vmatprep.subr.mxu0 0.0
        %2145 = vmatpush1.msra.mxu0 0.0
        %2146 = vmatprep.subr.mxu0 0.0
        %2147 = vmatpush1.msra.mxu0 0.0
        %2148 = vmatprep.subr.mxu0 0.0
        %2149 = vmatpush1.msra.mxu0 0.0
        %2150 = vmatprep.subr.mxu0 0.0
        %2151 = vmatpush1.msra.mxu0 0.0
        %2152 = vmatprep.subr.mxu0 0.0
        %2153 = vmatpush1.msra.mxu0 0.0
        %2154 = vmatprep.subr.mxu0 0.0
        %2155 = vmatpush1.msra.mxu0 0.0
        %2156 = vmatprep.subr.mxu0 0.0
        %2157 = vmatpush1.msra.mxu0 0.0
        %2158 = vmatprep.subr.mxu0 0.0
        %2159 = vmatpush1.msra.mxu0 0.0
        %2160 = vmatprep.subr.mxu0 0.0
        %2161 = vmatpush1.msra.mxu0 0.0
        %2162 = vmatprep.subr.mxu0 0.0
        %2163 = vmatpush1.msra.mxu0 0.0
        %2164 = vmatprep.subr.mxu0 0.0
        %2165 = vmatpush1.msra.mxu0 0.0
        %2166 = vmatprep.subr.mxu0 0.0
        %2167 = vmatpush1.msra.mxu0 0.0
        %2168 = vmatprep.subr.mxu0 0.0
        %2169 = vmatpush1.msra.mxu0 0.0
        %2170 = vmatprep.subr.mxu0 0.0
        %2171 = vmatpush1.msra.mxu0 0.0
        %2172 = vmatprep.mubr.f32.mxu0 0.0
        %2173 = vmatmul.mubr.f32.gmra.mrb[0].mxu0 %v2103
        %v2174 = vpop.f32.mrb[0].mxu0
        %v2175 = vadd.f32 0.0, %v2174
        %v2176 = vpop.f32.mrb[0].mxu0
        %2177 = vmatprep.mubr.f32.mxu0 0.0
        %2178 = vmatmul.mubr.f32.gmra.mrb[0].mxu0 %v2106
        %v2179 = vpop.f32.mrb[0].mxu0
        %v2180 = vadd.f32 0.0, %v2179
        %v2181 = vpop.f32.mrb[0].mxu0
        %2182 = vdwg.mxu0
        %v2184 = vsel %vm1851, %v1938, 0
        %v2187 = vsel %vm1851, %v1939, 0
        %2189 = vmatprep.subr.mxu0 0.0
        %2190 = vmatpush1.msra.mxu0 %v1486
        %2191 = vmatprep.subr.mxu0 0.0
        %2192 = vmatpush1.msra.mxu0 %v1487
        %2193 = vmatprep.subr.mxu0 0.0
        %2194 = vmatpush1.msra.mxu0 0.0
        %2195 = vmatprep.subr.mxu0 0.0
        %2196 = vmatpush1.msra.mxu0 0.0
        %2197 = vmatprep.subr.mxu0 0.0
        %2198 = vmatpush1.msra.mxu0 0.0
        %2199 = vmatprep.subr.mxu0 0.0
        %2200 = vmatpush1.msra.mxu0 0.0
        %2201 = vmatprep.subr.mxu0 0.0
        %2202 = vmatpush1.msra.mxu0 0.0
        %2203 = vmatprep.subr.mxu0 0.0
        %2204 = vmatpush1.msra.mxu0 0.0
        %2205 = vmatprep.subr.mxu0 0.0
        %2206 = vmatpush1.msra.mxu0 0.0
        %2207 = vmatprep.subr.mxu0 0.0
        %2208 = vmatpush1.msra.mxu0 0.0
        %2209 = vmatprep.subr.mxu0 0.0
        %2210 = vmatpush1.msra.mxu0 0.0
        %2211 = vmatprep.subr.mxu0 0.0
        %2212 = vmatpush1.msra.mxu0 0.0
        %2213 = vmatprep.subr.mxu0 0.0
        %2214 = vmatpush1.msra.mxu0 0.0
        %2215 = vmatprep.subr.mxu0 0.0
        %2216 = vmatpush1.msra.mxu0 0.0
        %2217 = vmatprep.subr.mxu0 0.0
        %2218 = vmatpush1.msra.mxu0 0.0
        %2219 = vmatprep.subr.mxu0 0.0
        %2220 = vmatpush1.msra.mxu0 0.0
        %2221 = vmatprep.subr.mxu0 0.0
        %2222 = vmatpush1.msra.mxu0 0.0
        %2223 = vmatprep.subr.mxu0 0.0
        %2224 = vmatpush1.msra.mxu0 0.0
        %2225 = vmatprep.subr.mxu0 0.0
        %2226 = vmatpush1.msra.mxu0 0.0
        %2227 = vmatprep.subr.mxu0 0.0
        %2228 = vmatpush1.msra.mxu0 0.0
        %2229 = vmatprep.subr.mxu0 0.0
        %2230 = vmatpush1.msra.mxu0 0.0
        %2231 = vmatprep.subr.mxu0 0.0
        %2232 = vmatpush1.msra.mxu0 0.0
        %2233 = vmatprep.subr.mxu0 0.0
        %2234 = vmatpush1.msra.mxu0 0.0
        %2235 = vmatprep.subr.mxu0 0.0
        %2236 = vmatpush1.msra.mxu0 0.0
        %2237 = vmatprep.subr.mxu0 0.0
        %2238 = vmatpush1.msra.mxu0 0.0
        %2239 = vmatprep.subr.mxu0 0.0
        %2240 = vmatpush1.msra.mxu0 0.0
        %2241 = vmatprep.subr.mxu0 0.0
        %2242 = vmatpush1.msra.mxu0 0.0
        %2243 = vmatprep.subr.mxu0 0.0
        %2244 = vmatpush1.msra.mxu0 0.0
        %2245 = vmatprep.subr.mxu0 0.0
        %2246 = vmatpush1.msra.mxu0 0.0
        %2247 = vmatprep.subr.mxu0 0.0
        %2248 = vmatpush1.msra.mxu0 0.0
        %2249 = vmatprep.subr.mxu0 0.0
        %2250 = vmatpush1.msra.mxu0 0.0
        %2251 = vmatprep.subr.mxu0 0.0
        %2252 = vmatpush1.msra.mxu0 0.0
        %2253 = vmatprep.mubr.f32.mxu0 0.0
        %2254 = vmatmul.mubr.f32.gmra.mrb[0].mxu0 %v2184
        %v2255 = vpop.f32.mrb[0].mxu0
        %v2256 = vadd.f32 0.0, %v2255
        %v2257 = vpop.f32.mrb[0].mxu0
        %2258 = vmatprep.mubr.f32.mxu0 0.0
        %2259 = vmatmul.mubr.f32.gmra.mrb[0].mxu0 %v2187
        %v2260 = vpop.f32.mrb[0].mxu0
        %v2261 = vadd.f32 0.0, %v2260
        %v2262 = vpop.f32.mrb[0].mxu0
        %2263 = vdwg.mxu0
        %2266 = vrot.lane.b32.xlu0 %v2094, 8
        %v2267 = vpop.permute.xlu0 %2266
        %2268 = vrot.lane.b32.xlu0 %v2099, 8
        %v2269 = vpop.permute.xlu0 %2268
        %2274 = vrot.lane.b32.xlu0 %v2175, 16
        %v2275 = vpop.permute.xlu0 %2274
        %2276 = vrot.lane.b32.xlu0 %v2180, 16
        %v2277 = vpop.permute.xlu0 %2276
        %2282 = vrot.lane.b32.xlu0 %v2256, 24
        %v2283 = vpop.permute.xlu0 %2282
        %2284 = vrot.lane.b32.xlu0 %v2261, 24
        %v2285 = vpop.permute.xlu0 %2284
        %v2288 = vsel %vm1488, %v2013, %v2267
        %v2289 = vsel %vm1488, %v2018, %v2269
        %v2290 = vsel %vm1851, %v2288, %v2275
        %v2291 = vsel %vm1851, %v2289, %v2277
        %vm2292 = vcmask 195584
        %v2293 = vsel %vm2292, %v2290, %v2283
        %v2294 = vsel %vm2292, %v2291, %v2285
        %v2295 = vld [vmem:[#allocation11] sm:$0xff]
        %v2296 = vld [vmem:[#allocation11 + $0x8] sm:$0xff]
        %v2297 = vld [vmem:[#allocation11 + $0x10] sm:$0xff]
        %v2298 = vld [vmem:[#allocation11 + $0x18] sm:$0xff]
        %v2299 = vld [vmem:[#allocation12] sm:$0x1]
        %v2301 = vlaneseq
        %v2302 = vshrl.u32 %v2301, 7
        %v2303 = vsub.s32 0, %v2302
        %v2304 = vrot.slane %v2299, %v2303
        %v2307 = vsel %vm1374, %v2293, 0
        %v2310 = vsel %vm1374, %v2294, 0
        %2312 = vmatprep.subr.mxu0 0.0
        %2313 = vmatpush1.msra.mxu0 %v2295
        %2314 = vmatprep.subr.mxu0 0.0
        %2315 = vmatpush1.msra.mxu0 %v2296
        %2316 = vmatprep.subr.mxu0 0.0
        %2317 = vmatpush1.msra.mxu0 %v2297
        %2318 = vmatprep.subr.mxu0 0.0
        %2319 = vmatpush1.msra.mxu0 %v2298
        %2320 = vmatprep.subr.mxu0 0.0
        %2321 = vmatpush1.msra.mxu0 0.0
        %2322 = vmatprep.subr.mxu0 0.0
        %2323 = vmatpush1.msra.mxu0 0.0
        %2324 = vmatprep.subr.mxu0 0.0
        %2325 = vmatpush1.msra.mxu0 0.0
        %2326 = vmatprep.subr.mxu0 0.0
        %2327 = vmatpush1.msra.mxu0 0.0
        %2328 = vmatprep.subr.mxu0 0.0
        %2329 = vmatpush1.msra.mxu0 0.0
        %2330 = vmatprep.subr.mxu0 0.0
        %2331 = vmatpush1.msra.mxu0 0.0
        %2332 = vmatprep.subr.mxu0 0.0
        %2333 = vmatpush1.msra.mxu0 0.0
        %2334 = vmatprep.subr.mxu0 0.0
        %2335 = vmatpush1.msra.mxu0 0.0
        %2336 = vmatprep.subr.mxu0 0.0
        %2337 = vmatpush1.msra.mxu0 0.0
        %2338 = vmatprep.subr.mxu0 0.0
        %2339 = vmatpush1.msra.mxu0 0.0
        %2340 = vmatprep.subr.mxu0 0.0
        %2341 = vmatpush1.msra.mxu0 0.0
        %2342 = vmatprep.subr.mxu0 0.0
        %2343 = vmatpush1.msra.mxu0 0.0
        %2344 = vmatprep.subr.mxu0 0.0
        %2345 = vmatpush1.msra.mxu0 0.0
        %2346 = vmatprep.subr.mxu0 0.0
        %2347 = vmatpush1.msra.mxu0 0.0
        %2348 = vmatprep.subr.mxu0 0.0
        %2349 = vmatpush1.msra.mxu0 0.0
        %2350 = vmatprep.subr.mxu0 0.0
        %2351 = vmatpush1.msra.mxu0 0.0
        %2352 = vmatprep.subr.mxu0 0.0
        %2353 = vmatpush1.msra.mxu0 0.0
        %2354 = vmatprep.subr.mxu0 0.0
        %2355 = vmatpush1.msra.mxu0 0.0
        %2356 = vmatprep.subr.mxu0 0.0
        %2357 = vmatpush1.msra.mxu0 0.0
        %2358 = vmatprep.subr.mxu0 0.0
        %2359 = vmatpush1.msra.mxu0 0.0
        %2360 = vmatprep.subr.mxu0 0.0
        %2361 = vmatpush1.msra.mxu0 0.0
        %2362 = vmatprep.subr.mxu0 0.0
        %2363 = vmatpush1.msra.mxu0 0.0
        %2364 = vmatprep.subr.mxu0 0.0
        %2365 = vmatpush1.msra.mxu0 0.0
        %2366 = vmatprep.subr.mxu0 0.0
        %2367 = vmatpush1.msra.mxu0 0.0
        %2368 = vmatprep.subr.mxu0 0.0
        %2369 = vmatpush1.msra.mxu0 0.0
        %2370 = vmatprep.subr.mxu0 0.0
        %2371 = vmatpush1.msra.mxu0 0.0
        %2372 = vmatprep.subr.mxu0 0.0
        %2373 = vmatpush1.msra.mxu0 0.0
        %2374 = vmatprep.subr.mxu0 0.0
        %2375 = vmatpush1.msra.mxu0 0.0
        %2376 = vmatprep.mubr.f32.mxu0 0.0
        %2377 = vmatmul.mubr.f32.gmra.mrb[0].mxu0 %v2307
        %v2378 = vpop.f32.mrb[0].mxu0
        %v2379 = vadd.f32 %v2304, %v2378
        %v2380 = vpop.f32.mrb[0].mxu0
        %2381 = vmatprep.mubr.f32.mxu0 0.0
        %2382 = vmatmul.mubr.f32.gmra.mrb[0].mxu0 %v2310
        %v2383 = vpop.f32.mrb[0].mxu0
        %v2384 = vadd.f32 %v2304, %v2383
        %v2385 = vpop.f32.mrb[0].mxu0
        %2386 = vdwg.mxu0
        %v2387 = vadd.f32 %v1361, %v2379
        %v2388 = vadd.f32 %v1362, %v2384
        %v2389 = vsel %vm1374, %v2387, 0.0
        %2390 = vadd.xlane.f32.xlu0 %v2389
        %v2391 = vpop.xlane.xlu0 %2390
        %v2392 = vsel %vm1374, %v2388, 0.0
        %2393 = vadd.xlane.f32.xlu0 %v2392
        %v2394 = vpop.xlane.xlu0 %2393
        %v2395 = vrcp.pop 32.0
        %v2396 = vmul.f32 %v2391, %v2395
        %v2397 = vmul.f32 %v2394, %v2395
        %v2398 = vsub.f32 %v2387, %v2396
        %v2399 = vsub.f32 %v2388, %v2397
        %v2400 = vmul.f32 %v2398, %v2398
        %v2401 = vmul.f32 %v2399, %v2399
        %v2402 = vsel %vm1374, %v2400, 0.0
        %2403 = vadd.xlane.f32.xlu0 %v2402
        %v2404 = vpop.xlane.xlu0 %2403
        %v2405 = vsel %vm1374, %v2401, 0.0
        %2406 = vadd.xlane.f32.xlu0 %v2405
        %v2407 = vpop.xlane.xlu0 %2406
        %v2408 = vmul.f32 %v2404, %v2395
        %v2409 = vmul.f32 %v2407, %v2395
        %v2410 = vadd.f32 %v2408, 1e-05
        %v2411 = vadd.f32 %v2409, 1e-05
        %v2412 = vrsqrt.pop %v2410
        %v2413 = vrsqrt.pop %v2411
        %v2414 = vmul.f32 %v2398, %v2412
        %v2415 = vmul.f32 %v2399, %v2413
        %v2416 = vld [vmem:[#allocation21] sm:$0x1]
        %v2418 = vlaneseq
        %v2419 = vshrl.u32 %v2418, 7
        %v2420 = vsub.s32 0, %v2419
        %v2421 = vrot.slane %v2416, %v2420
        %v2423 = vmul.f32 %v2414, %v2421
        %v2424 = vmul.f32 %v2415, %v2421
        %v2425 = vld [vmem:[#allocation23] sm:$0x1]
        %v2427 = vlaneseq
        %v2428 = vshrl.u32 %v2427, 7
        %v2429 = vsub.s32 0, %v2428
        %v2430 = vrot.slane %v2425, %v2429
        %v2432 = vadd.f32 %v2423, %v2430
        %v2433 = vadd.f32 %v2424, %v2430
        %v2434 = vld [vmem:[#allocation14] sm:$0xff]
        %v2435 = vld [vmem:[#allocation14 + $0x8] sm:$0xff]
        %v2436 = vld [vmem:[#allocation14 + $0x10] sm:$0xff]
        %v2437 = vld [vmem:[#allocation14 + $0x18] sm:$0xff]
        %v2438 = vld [vmem:[#allocation15] sm:$0x1]
        %v2440 = vlaneseq
        %v2441 = vshrl.u32 %v2440, 7
        %v2442 = vsub.s32 0, %v2441
        %v2443 = vrot.slane %v2438, %v2442
        %v2446 = vsel %vm1374, %v2432, 0
        %v2449 = vsel %vm1374, %v2433, 0
        %2451 = vmatprep.subr.mxu0 0.0
        %2452 = vmatpush1.msra.mxu0 %v2434
        %2453 = vmatprep.subr.mxu0 0.0
        %2454 = vmatpush1.msra.mxu0 %v2435
        %2455 = vmatprep.subr.mxu0 0.0
        %2456 = vmatpush1.msra.mxu0 %v2436
        %2457 = vmatprep.subr.mxu0 0.0
        %2458 = vmatpush1.msra.mxu0 %v2437
        %2459 = vmatprep.subr.mxu0 0.0
        %2460 = vmatpush1.msra.mxu0 0.0
        %2461 = vmatprep.subr.mxu0 0.0
        %2462 = vmatpush1.msra.mxu0 0.0
        %2463 = vmatprep.subr.mxu0 0.0
        %2464 = vmatpush1.msra.mxu0 0.0
        %2465 = vmatprep.subr.mxu0 0.0
        %2466 = vmatpush1.msra.mxu0 0.0
        %2467 = vmatprep.subr.mxu0 0.0
        %2468 = vmatpush1.msra.mxu0 0.0
        %2469 = vmatprep.subr.mxu0 0.0
        %2470 = vmatpush1.msra.mxu0 0.0
        %2471 = vmatprep.subr.mxu0 0.0
        %2472 = vmatpush1.msra.mxu0 0.0
        %2473 = vmatprep.subr.mxu0 0.0
        %2474 = vmatpush1.msra.mxu0 0.0
        %2475 = vmatprep.subr.mxu0 0.0
        %2476 = vmatpush1.msra.mxu0 0.0
        %2477 = vmatprep.subr.mxu0 0.0
        %2478 = vmatpush1.msra.mxu0 0.0
        %2479 = vmatprep.subr.mxu0 0.0
        %2480 = vmatpush1.msra.mxu0 0.0
        %2481 = vmatprep.subr.mxu0 0.0
        %2482 = vmatpush1.msra.mxu0 0.0
        %2483 = vmatprep.subr.mxu0 0.0
        %2484 = vmatpush1.msra.mxu0 0.0
        %2485 = vmatprep.subr.mxu0 0.0
        %2486 = vmatpush1.msra.mxu0 0.0
        %2487 = vmatprep.subr.mxu0 0.0
        %2488 = vmatpush1.msra.mxu0 0.0
        %2489 = vmatprep.subr.mxu0 0.0
        %2490 = vmatpush1.msra.mxu0 0.0
        %2491 = vmatprep.subr.mxu0 0.0
        %2492 = vmatpush1.msra.mxu0 0.0
        %2493 = vmatprep.subr.mxu0 0.0
        %2494 = vmatpush1.msra.mxu0 0.0
        %2495 = vmatprep.subr.mxu0 0.0
        %2496 = vmatpush1.msra.mxu0 0.0
        %2497 = vmatprep.subr.mxu0 0.0
        %2498 = vmatpush1.msra.mxu0 0.0
        %2499 = vmatprep.subr.mxu0 0.0
        %2500 = vmatpush1.msra.mxu0 0.0
        %2501 = vmatprep.subr.mxu0 0.0
        %2502 = vmatpush1.msra.mxu0 0.0
        %2503 = vmatprep.subr.mxu0 0.0
        %2504 = vmatpush1.msra.mxu0 0.0
        %2505 = vmatprep.subr.mxu0 0.0
        %2506 = vmatpush1.msra.mxu0 0.0
        %2507 = vmatprep.subr.mxu0 0.0
        %2508 = vmatpush1.msra.mxu0 0.0
        %2509 = vmatprep.subr.mxu0 0.0
        %2510 = vmatpush1.msra.mxu0 0.0
        %2511 = vmatprep.subr.mxu0 0.0
        %2512 = vmatpush1.msra.mxu0 0.0
        %2513 = vmatprep.subr.mxu0 0.0
        %2514 = vmatpush1.msra.mxu0 0.0
        %2515 = vmatprep.mubr.f32.mxu0 0.0
        %2516 = vmatmul.mubr.f32.gmra.mrb[0].mxu0 %v2446
        %v2517 = vpop.f32.mrb[0].mxu0
        %v2518 = vadd.f32 %v2443, %v2517
        %v2519 = vpop.f32.mrb[0].mxu0
        %2520 = vmatprep.mubr.f32.mxu0 0.0
        %2521 = vmatmul.mubr.f32.gmra.mrb[0].mxu0 %v2449
        %v2522 = vpop.f32.mrb[0].mxu0
        %v2523 = vadd.f32 %v2443, %v2522
        %v2524 = vpop.f32.mrb[0].mxu0
        %2525 = vdwg.mxu0
        %v2526 = vmul.f32 %v2518, 0.35355338
        %v2527 = vmul.f32 %v2523, 0.35355338
        %2530 = vrot.lane.b32.xlu0 %v2526, 120
        %v2531 = vpop.permute.xlu0 %2530
        %2532 = vrot.lane.b32.xlu0 %v2527, 120
        %v2533 = vpop.permute.xlu0 %2532
        %2534 = vrot.lane.b32.xlu0 %v2526, 112
        %v2535 = vpop.permute.xlu0 %2534
        %2536 = vrot.lane.b32.xlu0 %v2527, 112
        %v2537 = vpop.permute.xlu0 %2536
        %2538 = vrot.lane.b32.xlu0 %v2526, 104
        %v2539 = vpop.permute.xlu0 %2538
        %2540 = vrot.lane.b32.xlu0 %v2527, 104
        %v2541 = vpop.permute.xlu0 %2540
        %v2542 = vld [vmem:[#allocation4] sm:$0xff]
        %v2543 = vld [vmem:[#allocation4 + $0x8] sm:$0xff]
        %v2544 = vld [vmem:[#allocation4 + $0x10] sm:$0xff]
        %v2545 = vld [vmem:[#allocation4 + $0x18] sm:$0xff]
        %v2546 = vld [vmem:[#allocation4 + $0x20] sm:$0xff]
        %v2547 = vld [vmem:[#allocation4 + $0x28] sm:$0xff]
        %v2548 = vld [vmem:[#allocation4 + $0x30] sm:$0xff]
        %v2549 = vld [vmem:[#allocation4 + $0x38] sm:$0xff]
        %v2550 = vld [vmem:[#allocation4 + $0x40] sm:$0xff]
        %v2551 = vld [vmem:[#allocation4 + $0x48] sm:$0xff]
        %v2552 = vld [vmem:[#allocation4 + $0x50] sm:$0xff]
        %v2553 = vld [vmem:[#allocation4 + $0x58] sm:$0xff]
        %v2554 = vld [vmem:[#allocation4 + $0x60] sm:$0xff]
        %v2555 = vld [vmem:[#allocation4 + $0x68] sm:$0xff]
        %v2556 = vld [vmem:[#allocation4 + $0x70] sm:$0xff]
        %v2557 = vld [vmem:[#allocation4 + $0x78] sm:$0xff]
        %v2558 = vld [vmem:[#allocation5] sm:$0xff]
        %v2559 = vld [vmem:[#allocation5 + $0x8] sm:$0xff]
        %v2560 = vld [vmem:[#allocation5 + $0x10] sm:$0xff]
        %v2561 = vld [vmem:[#allocation5 + $0x18] sm:$0xff]
        %v2562 = vld [vmem:[#allocation5 + $0x20] sm:$0xff]
        %v2563 = vld [vmem:[#allocation5 + $0x28] sm:$0xff]
        %v2564 = vld [vmem:[#allocation5 + $0x30] sm:$0xff]
        %v2565 = vld [vmem:[#allocation5 + $0x38] sm:$0xff]
        %v2566 = vld [vmem:[#allocation5 + $0x40] sm:$0xff]
        %v2567 = vld [vmem:[#allocation5 + $0x48] sm:$0xff]
        %v2568 = vld [vmem:[#allocation5 + $0x50] sm:$0xff]
        %v2569 = vld [vmem:[#allocation5 + $0x58] sm:$0xff]
        %v2570 = vld [vmem:[#allocation5 + $0x60] sm:$0xff]
        %v2571 = vld [vmem:[#allocation5 + $0x68] sm:$0xff]
        %v2572 = vld [vmem:[#allocation5 + $0x70] sm:$0xff]
        %v2573 = vld [vmem:[#allocation5 + $0x78] sm:$0xff]
        %v2574 = vsel %vm1488, %v2526, 0
        %v2576 = vsel %vm1488, %v2527, 0
        %v2579 = vsel %vm1488, %v2542, 0
        %v2582 = vsel %vm1488, %v2543, 0
        %v2585 = vsel %vm1488, %v2544, 0
        %v2588 = vsel %vm1488, %v2545, 0
        %2590 = vmatprep.subr.mxu0 0.0
        %2591 = vmatpush1.xpose.msra.mxu0 %v2579
        %2592 = vmatprep.subr.mxu0 0.0
        %2593 = vmatpush1.xpose.msra.mxu0 %v2582
        %2594 = vmatprep.subr.mxu0 0.0
        %2595 = vmatpush1.xpose.msra.mxu0 %v2585
        %2596 = vmatprep.subr.mxu0 0.0
        %2597 = vmatpush1.xpose.msra.mxu0 %v2588
        %2598 = vmatprep.subr.mxu0 0.0
        %2599 = vmatpush1.xpose.msra.mxu0 0.0
        %2600 = vmatprep.subr.mxu0 0.0
        %2601 = vmatpush1.xpose.msra.mxu0 0.0
        %2602 = vmatprep.subr.mxu0 0.0
        %2603 = vmatpush1.xpose.msra.mxu0 0.0
        %2604 = vmatprep.subr.mxu0 0.0
        %2605 = vmatpush1.xpose.msra.mxu0 0.0
        %2606 = vmatprep.subr.mxu0 0.0
        %2607 = vmatpush1.xpose.msra.mxu0 0.0
        %2608 = vmatprep.subr.mxu0 0.0
        %2609 = vmatpush1.xpose.msra.mxu0 0.0
        %2610 = vmatprep.subr.mxu0 0.0
        %2611 = vmatpush1.xpose.msra.mxu0 0.0
        %2612 = vmatprep.subr.mxu0 0.0
        %2613 = vmatpush1.xpose.msra.mxu0 0.0
        %2614 = vmatprep.subr.mxu0 0.0
        %2615 = vmatpush1.xpose.msra.mxu0 0.0
        %2616 = vmatprep.subr.mxu0 0.0
        %2617 = vmatpush1.xpose.msra.mxu0 0.0
        %2618 = vmatprep.subr.mxu0 0.0
        %2619 = vmatpush1.xpose.msra.mxu0 0.0
        %2620 = vmatprep.subr.mxu0 0.0
        %2621 = vmatpush1.xpose.msra.mxu0 0.0
        %2622 = vmatprep.subr.mxu0 0.0
        %2623 = vmatpush1.xpose.msra.mxu0 0.0
        %2624 = vmatprep.subr.mxu0 0.0
        %2625 = vmatpush1.xpose.msra.mxu0 0.0
        %2626 = vmatprep.subr.mxu0 0.0
        %2627 = vmatpush1.xpose.msra.mxu0 0.0
        %2628 = vmatprep.subr.mxu0 0.0
        %2629 = vmatpush1.xpose.msra.mxu0 0.0
        %2630 = vmatprep.subr.mxu0 0.0
        %2631 = vmatpush1.xpose.msra.mxu0 0.0
        %2632 = vmatprep.subr.mxu0 0.0
        %2633 = vmatpush1.xpose.msra.mxu0 0.0
        %2634 = vmatprep.subr.mxu0 0.0
        %2635 = vmatpush1.xpose.msra.mxu0 0.0
        %2636 = vmatprep.subr.mxu0 0.0
        %2637 = vmatpush1.xpose.msra.mxu0 0.0
        %2638 = vmatprep.subr.mxu0 0.0
        %2639 = vmatpush1.xpose.msra.mxu0 0.0
        %2640 = vmatprep.subr.mxu0 0.0
        %2641 = vmatpush1.xpose.msra.mxu0 0.0
        %2642 = vmatprep.subr.mxu0 0.0
        %2643 = vmatpush1.xpose.msra.mxu0 0.0
        %2644 = vmatprep.subr.mxu0 0.0
        %2645 = vmatpush1.xpose.msra.mxu0 0.0
        %2646 = vmatprep.subr.mxu0 0.0
        %2647 = vmatpush1.xpose.msra.mxu0 0.0
        %2648 = vmatprep.subr.mxu0 0.0
        %2649 = vmatpush1.xpose.msra.mxu0 0.0
        %2650 = vmatprep.subr.mxu0 0.0
        %2651 = vmatpush1.xpose.msra.mxu0 0.0
        %2652 = vmatprep.subr.mxu0 0.0
        %2653 = vmatpush1.xpose.msra.mxu0 0.0
        %2654 = vmatprep.mubr.f32.mxu0 0.0
        %2655 = vmatmul.mubr.f32.gmra.mrb[0].mxu0 %v2574
        %v2656 = vpop.f32.mrb[0].mxu0
        %v2657 = vadd.f32 0.0, %v2656
        %v2658 = vpop.f32.mrb[0].mxu0
        %2659 = vmatprep.mubr.f32.mxu0 0.0
        %2660 = vmatmul.mubr.f32.gmra.mrb[0].mxu0 %v2576
        %v2661 = vpop.f32.mrb[0].mxu0
        %v2662 = vadd.f32 0.0, %v2661
        %v2663 = vpop.f32.mrb[0].mxu0
        %2664 = vdwg.mxu0
        %v2665 = vsel %vm1488, %v2531, 0
        %v2667 = vsel %vm1488, %v2533, 0
        %v2670 = vsel %vm1488, %v2546, 0
        %v2673 = vsel %vm1488, %v2547, 0
        %v2676 = vsel %vm1488, %v2548, 0
        %v2679 = vsel %vm1488, %v2549, 0
        %2681 = vmatprep.subr.mxu0 0.0
        %2682 = vmatpush1.xpose.msra.mxu0 %v2670
        %2683 = vmatprep.subr.mxu0 0.0
        %2684 = vmatpush1.xpose.msra.mxu0 %v2673
        %2685 = vmatprep.subr.mxu0 0.0
        %2686 = vmatpush1.xpose.msra.mxu0 %v2676
        %2687 = vmatprep.subr.mxu0 0.0
        %2688 = vmatpush1.xpose.msra.mxu0 %v2679
        %2689 = vmatprep.subr.mxu0 0.0
        %2690 = vmatpush1.xpose.msra.mxu0 0.0
        %2691 = vmatprep.subr.mxu0 0.0
        %2692 = vmatpush1.xpose.msra.mxu0 0.0
        %2693 = vmatprep.subr.mxu0 0.0
        %2694 = vmatpush1.xpose.msra.mxu0 0.0
        %2695 = vmatprep.subr.mxu0 0.0
        %2696 = vmatpush1.xpose.msra.mxu0 0.0
        %2697 = vmatprep.subr.mxu0 0.0
        %2698 = vmatpush1.xpose.msra.mxu0 0.0
        %2699 = vmatprep.subr.mxu0 0.0
        %2700 = vmatpush1.xpose.msra.mxu0 0.0
        %2701 = vmatprep.subr.mxu0 0.0
        %2702 = vmatpush1.xpose.msra.mxu0 0.0
        %2703 = vmatprep.subr.mxu0 0.0
        %2704 = vmatpush1.xpose.msra.mxu0 0.0
        %2705 = vmatprep.subr.mxu0 0.0
        %2706 = vmatpush1.xpose.msra.mxu0 0.0
        %2707 = vmatprep.subr.mxu0 0.0
        %2708 = vmatpush1.xpose.msra.mxu0 0.0
        %2709 = vmatprep.subr.mxu0 0.0
        %2710 = vmatpush1.xpose.msra.mxu0 0.0
        %2711 = vmatprep.subr.mxu0 0.0
        %2712 = vmatpush1.xpose.msra.mxu0 0.0
        %2713 = vmatprep.subr.mxu0 0.0
        %2714 = vmatpush1.xpose.msra.mxu0 0.0
        %2715 = vmatprep.subr.mxu0 0.0
        %2716 = vmatpush1.xpose.msra.mxu0 0.0
        %2717 = vmatprep.subr.mxu0 0.0
        %2718 = vmatpush1.xpose.msra.mxu0 0.0
        %2719 = vmatprep.subr.mxu0 0.0
        %2720 = vmatpush1.xpose.msra.mxu0 0.0
        %2721 = vmatprep.subr.mxu0 0.0
        %2722 = vmatpush1.xpose.msra.mxu0 0.0
        %2723 = vmatprep.subr.mxu0 0.0
        %2724 = vmatpush1.xpose.msra.mxu0 0.0
        %2725 = vmatprep.subr.mxu0 0.0
        %2726 = vmatpush1.xpose.msra.mxu0 0.0
        %2727 = vmatprep.subr.mxu0 0.0
        %2728 = vmatpush1.xpose.msra.mxu0 0.0
        %2729 = vmatprep.subr.mxu0 0.0
        %2730 = vmatpush1.xpose.msra.mxu0 0.0
        %2731 = vmatprep.subr.mxu0 0.0
        %2732 = vmatpush1.xpose.msra.mxu0 0.0
        %2733 = vmatprep.subr.mxu0 0.0
        %2734 = vmatpush1.xpose.msra.mxu0 0.0
        %2735 = vmatprep.subr.mxu0 0.0
        %2736 = vmatpush1.xpose.msra.mxu0 0.0
        %2737 = vmatprep.subr.mxu0 0.0
        %2738 = vmatpush1.xpose.msra.mxu0 0.0
        %2739 = vmatprep.subr.mxu0 0.0
        %2740 = vmatpush1.xpose.msra.mxu0 0.0
        %2741 = vmatprep.subr.mxu0 0.0
        %2742 = vmatpush1.xpose.msra.mxu0 0.0
        %2743 = vmatprep.subr.mxu0 0.0
        %2744 = vmatpush1.xpose.msra.mxu0 0.0
        %2745 = vmatprep.mubr.f32.mxu0 0.0
        %2746 = vmatmul.mubr.f32.gmra.mrb[0].mxu0 %v2665
        %v2747 = vpop.f32.mrb[0].mxu0
        %v2748 = vadd.f32 0.0, %v2747
        %v2749 = vpop.f32.mrb[0].mxu0
        %2750 = vmatprep.mubr.f32.mxu0 0.0
        %2751 = vmatmul.mubr.f32.gmra.mrb[0].mxu0 %v2667
        %v2752 = vpop.f32.mrb[0].mxu0
        %v2753 = vadd.f32 0.0, %v2752
        %v2754 = vpop.f32.mrb[0].mxu0
        %2755 = vdwg.mxu0
        %v2756 = vsel %vm1488, %v2535, 0
        %v2758 = vsel %vm1488, %v2537, 0
        %v2761 = vsel %vm1488, %v2550, 0
        %v2764 = vsel %vm1488, %v2551, 0
        %v2767 = vsel %vm1488, %v2552, 0
        %v2770 = vsel %vm1488, %v2553, 0
        %2772 = vmatprep.subr.mxu0 0.0
        %2773 = vmatpush1.xpose.msra.mxu0 %v2761
        %2774 = vmatprep.subr.mxu0 0.0
        %2775 = vmatpush1.xpose.msra.mxu0 %v2764
        %2776 = vmatprep.subr.mxu0 0.0
        %2777 = vmatpush1.xpose.msra.mxu0 %v2767
        %2778 = vmatprep.subr.mxu0 0.0
        %2779 = vmatpush1.xpose.msra.mxu0 %v2770
        %2780 = vmatprep.subr.mxu0 0.0
        %2781 = vmatpush1.xpose.msra.mxu0 0.0
        %2782 = vmatprep.subr.mxu0 0.0
        %2783 = vmatpush1.xpose.msra.mxu0 0.0
        %2784 = vmatprep.subr.mxu0 0.0
        %2785 = vmatpush1.xpose.msra.mxu0 0.0
        %2786 = vmatprep.subr.mxu0 0.0
        %2787 = vmatpush1.xpose.msra.mxu0 0.0
        %2788 = vmatprep.subr.mxu0 0.0
        %2789 = vmatpush1.xpose.msra.mxu0 0.0
        %2790 = vmatprep.subr.mxu0 0.0
        %2791 = vmatpush1.xpose.msra.mxu0 0.0
        %2792 = vmatprep.subr.mxu0 0.0
        %2793 = vmatpush1.xpose.msra.mxu0 0.0
        %2794 = vmatprep.subr.mxu0 0.0
        %2795 = vmatpush1.xpose.msra.mxu0 0.0
        %2796 = vmatprep.subr.mxu0 0.0
        %2797 = vmatpush1.xpose.msra.mxu0 0.0
        %2798 = vmatprep.subr.mxu0 0.0
        %2799 = vmatpush1.xpose.msra.mxu0 0.0
        %2800 = vmatprep.subr.mxu0 0.0
        %2801 = vmatpush1.xpose.msra.mxu0 0.0
        %2802 = vmatprep.subr.mxu0 0.0
        %2803 = vmatpush1.xpose.msra.mxu0 0.0
        %2804 = vmatprep.subr.mxu0 0.0
        %2805 = vmatpush1.xpose.msra.mxu0 0.0
        %2806 = vmatprep.subr.mxu0 0.0
        %2807 = vmatpush1.xpose.msra.mxu0 0.0
        %2808 = vmatprep.subr.mxu0 0.0
        %2809 = vmatpush1.xpose.msra.mxu0 0.0
        %2810 = vmatprep.subr.mxu0 0.0
        %2811 = vmatpush1.xpose.msra.mxu0 0.0
        %2812 = vmatprep.subr.mxu0 0.0
        %2813 = vmatpush1.xpose.msra.mxu0 0.0
        %2814 = vmatprep.subr.mxu0 0.0
        %2815 = vmatpush1.xpose.msra.mxu0 0.0
        %2816 = vmatprep.subr.mxu0 0.0
        %2817 = vmatpush1.xpose.msra.mxu0 0.0
        %2818 = vmatprep.subr.mxu0 0.0
        %2819 = vmatpush1.xpose.msra.mxu0 0.0
        %2820 = vmatprep.subr.mxu0 0.0
        %2821 = vmatpush1.xpose.msra.mxu0 0.0
        %2822 = vmatprep.subr.mxu0 0.0
        %2823 = vmatpush1.xpose.msra.mxu0 0.0
        %2824 = vmatprep.subr.mxu0 0.0
        %2825 = vmatpush1.xpose.msra.mxu0 0.0
        %2826 = vmatprep.subr.mxu0 0.0
        %2827 = vmatpush1.xpose.msra.mxu0 0.0
        %2828 = vmatprep.subr.mxu0 0.0
        %2829 = vmatpush1.xpose.msra.mxu0 0.0
        %2830 = vmatprep.subr.mxu0 0.0
        %2831 = vmatpush1.xpose.msra.mxu0 0.0
        %2832 = vmatprep.subr.mxu0 0.0
        %2833 = vmatpush1.xpose.msra.mxu0 0.0
        %2834 = vmatprep.subr.mxu0 0.0
        %2835 = vmatpush1.xpose.msra.mxu0 0.0
        %2836 = vmatprep.mubr.f32.mxu0 0.0
        %2837 = vmatmul.mubr.f32.gmra.mrb[0].mxu0 %v2756
        %v2838 = vpop.f32.mrb[0].mxu0
        %v2839 = vadd.f32 0.0, %v2838
        %v2840 = vpop.f32.mrb[0].mxu0
        %2841 = vmatprep.mubr.f32.mxu0 0.0
        %2842 = vmatmul.mubr.f32.gmra.mrb[0].mxu0 %v2758
        %v2843 = vpop.f32.mrb[0].mxu0
        %v2844 = vadd.f32 0.0, %v2843
        %v2845 = vpop.f32.mrb[0].mxu0
        %2846 = vdwg.mxu0
        %v2847 = vsel %vm1488, %v2539, 0
        %v2849 = vsel %vm1488, %v2541, 0
        %v2852 = vsel %vm1488, %v2554, 0
        %v2855 = vsel %vm1488, %v2555, 0
        %v2858 = vsel %vm1488, %v2556, 0
        %v2861 = vsel %vm1488, %v2557, 0
        %2863 = vmatprep.subr.mxu0 0.0
        %2864 = vmatpush1.xpose.msra.mxu0 %v2852
        %2865 = vmatprep.subr.mxu0 0.0
        %2866 = vmatpush1.xpose.msra.mxu0 %v2855
        %2867 = vmatprep.subr.mxu0 0.0
        %2868 = vmatpush1.xpose.msra.mxu0 %v2858
        %2869 = vmatprep.subr.mxu0 0.0
        %2870 = vmatpush1.xpose.msra.mxu0 %v2861
        %2871 = vmatprep.subr.mxu0 0.0
        %2872 = vmatpush1.xpose.msra.mxu0 0.0
        %2873 = vmatprep.subr.mxu0 0.0
        %2874 = vmatpush1.xpose.msra.mxu0 0.0
        %2875 = vmatprep.subr.mxu0 0.0
        %2876 = vmatpush1.xpose.msra.mxu0 0.0
        %2877 = vmatprep.subr.mxu0 0.0
        %2878 = vmatpush1.xpose.msra.mxu0 0.0
        %2879 = vmatprep.subr.mxu0 0.0
        %2880 = vmatpush1.xpose.msra.mxu0 0.0
        %2881 = vmatprep.subr.mxu0 0.0
        %2882 = vmatpush1.xpose.msra.mxu0 0.0
        %2883 = vmatprep.subr.mxu0 0.0
        %2884 = vmatpush1.xpose.msra.mxu0 0.0
        %2885 = vmatprep.subr.mxu0 0.0
        %2886 = vmatpush1.xpose.msra.mxu0 0.0
        %2887 = vmatprep.subr.mxu0 0.0
        %2888 = vmatpush1.xpose.msra.mxu0 0.0
        %2889 = vmatprep.subr.mxu0 0.0
        %2890 = vmatpush1.xpose.msra.mxu0 0.0
        %2891 = vmatprep.subr.mxu0 0.0
        %2892 = vmatpush1.xpose.msra.mxu0 0.0
        %2893 = vmatprep.subr.mxu0 0.0
        %2894 = vmatpush1.xpose.msra.mxu0 0.0
        %2895 = vmatprep.subr.mxu0 0.0
        %2896 = vmatpush1.xpose.msra.mxu0 0.0
        %2897 = vmatprep.subr.mxu0 0.0
        %2898 = vmatpush1.xpose.msra.mxu0 0.0
        %2899 = vmatprep.subr.mxu0 0.0
        %2900 = vmatpush1.xpose.msra.mxu0 0.0
        %2901 = vmatprep.subr.mxu0 0.0
        %2902 = vmatpush1.xpose.msra.mxu0 0.0
        %2903 = vmatprep.subr.mxu0 0.0
        %2904 = vmatpush1.xpose.msra.mxu0 0.0
        %2905 = vmatprep.subr.mxu0 0.0
        %2906 = vmatpush1.xpose.msra.mxu0 0.0
        %2907 = vmatprep.subr.mxu0 0.0
        %2908 = vmatpush1.xpose.msra.mxu0 0.0
        %2909 = vmatprep.subr.mxu0 0.0
        %2910 = vmatpush1.xpose.msra.mxu0 0.0
        %2911 = vmatprep.subr.mxu0 0.0
        %2912 = vmatpush1.xpose.msra.mxu0 0.0
        %2913 = vmatprep.subr.mxu0 0.0
        %2914 = vmatpush1.xpose.msra.mxu0 0.0
        %2915 = vmatprep.subr.mxu0 0.0
        %2916 = vmatpush1.xpose.msra.mxu0 0.0
        %2917 = vmatprep.subr.mxu0 0.0
        %2918 = vmatpush1.xpose.msra.mxu0 0.0
        %2919 = vmatprep.subr.mxu0 0.0
        %2920 = vmatpush1.xpose.msra.mxu0 0.0
        %2921 = vmatprep.subr.mxu0 0.0
        %2922 = vmatpush1.xpose.msra.mxu0 0.0
        %2923 = vmatprep.subr.mxu0 0.0
        %2924 = vmatpush1.xpose.msra.mxu0 0.0
        %2925 = vmatprep.subr.mxu0 0.0
        %2926 = vmatpush1.xpose.msra.mxu0 0.0
        %2927 = vmatprep.mubr.f32.mxu0 0.0
        %2928 = vmatmul.mubr.f32.gmra.mrb[0].mxu0 %v2847
        %v2929 = vpop.f32.mrb[0].mxu0
        %v2930 = vadd.f32 0.0, %v2929
        %v2931 = vpop.f32.mrb[0].mxu0
        %2932 = vmatprep.mubr.f32.mxu0 0.0
        %2933 = vmatmul.mubr.f32.gmra.mrb[0].mxu0 %v2849
        %v2934 = vpop.f32.mrb[0].mxu0
        %v2935 = vadd.f32 0.0, %v2934
        %v2936 = vpop.f32.mrb[0].mxu0
        %2937 = vdwg.mxu0
        %v2938 = vsel %vm1374, %v2657, -inf
        %2939 = vmax.xlane.f32.xlu0 %v2938
        %v2940 = vpop.xlane.xlu0 %2939
        %v2941 = vsel %vm1374, %v2662, -inf
        %2942 = vmax.xlane.f32.xlu0 %v2941
        %v2943 = vpop.xlane.xlu0 %2942
        %v2944 = vsel %vm1374, %v2748, -inf
        %2945 = vmax.xlane.f32.xlu0 %v2944
        %v2946 = vpop.xlane.xlu0 %2945
        %v2947 = vsel %vm1374, %v2753, -inf
        %2948 = vmax.xlane.f32.xlu0 %v2947
        %v2949 = vpop.xlane.xlu0 %2948
        %v2950 = vsel %vm1374, %v2839, -inf
        %2951 = vmax.xlane.f32.xlu0 %v2950
        %v2952 = vpop.xlane.xlu0 %2951
        %v2953 = vsel %vm1374, %v2844, -inf
        %2954 = vmax.xlane.f32.xlu0 %v2953
        %v2955 = vpop.xlane.xlu0 %2954
        %v2956 = vsel %vm1374, %v2930, -inf
        %2957 = vmax.xlane.f32.xlu0 %v2956
        %v2958 = vpop.xlane.xlu0 %2957
        %v2959 = vsel %vm1374, %v2935, -inf
        %2960 = vmax.xlane.f32.xlu0 %v2959
        %v2961 = vpop.xlane.xlu0 %2960
        %v2962 = vsub.f32 %v2657, %v2940
        %v2963 = vsub.f32 %v2662, %v2943
        %v2964 = vsub.f32 %v2748, %v2946
        %v2965 = vsub.f32 %v2753, %v2949
        %v2966 = vsub.f32 %v2839, %v2952
        %v2967 = vsub.f32 %v2844, %v2955
        %v2968 = vsub.f32 %v2930, %v2958
        %v2969 = vsub.f32 %v2935, %v2961
        %v2970 = vmul.f32 %v2962, 1.442695
        %v2971 = vpow.pop %v2970
        %v2972 = vmul.f32 %v2963, 1.442695
        %v2973 = vpow.pop %v2972
        %v2974 = vmul.f32 %v2964, 1.442695
        %v2975 = vpow.pop %v2974
        %v2976 = vmul.f32 %v2965, 1.442695
        %v2977 = vpow.pop %v2976
        %v2978 = vmul.f32 %v2966, 1.442695
        %v2979 = vpow.pop %v2978
        %v2980 = vmul.f32 %v2967, 1.442695
        %v2981 = vpow.pop %v2980
        %v2982 = vmul.f32 %v2968, 1.442695
        %v2983 = vpow.pop %v2982
        %v2984 = vmul.f32 %v2969, 1.442695
        %v2985 = vpow.pop %v2984
        %v2986 = vsel %vm1374, %v2971, 0.0
        %2987 = vadd.xlane.f32.xlu0 %v2986
        %v2988 = vpop.xlane.xlu0 %2987
        %v2989 = vsel %vm1374, %v2973, 0.0
        %2990 = vadd.xlane.f32.xlu0 %v2989
        %v2991 = vpop.xlane.xlu0 %2990
        %v2992 = vsel %vm1374, %v2975, 0.0
        %2993 = vadd.xlane.f32.xlu0 %v2992
        %v2994 = vpop.xlane.xlu0 %2993
        %v2995 = vsel %vm1374, %v2977, 0.0
        %2996 = vadd.xlane.f32.xlu0 %v2995
        %v2997 = vpop.xlane.xlu0 %2996
        %v2998 = vsel %vm1374, %v2979, 0.0
        %2999 = vadd.xlane.f32.xlu0 %v2998
        %v3000 = vpop.xlane.xlu0 %2999
        %v3001 = vsel %vm1374, %v2981, 0.0
        %3002 = vadd.xlane.f32.xlu0 %v3001
        %v3003 = vpop.xlane.xlu0 %3002
        %v3004 = vsel %vm1374, %v2983, 0.0
        %3005 = vadd.xlane.f32.xlu0 %v3004
        %v3006 = vpop.xlane.xlu0 %3005
        %v3007 = vsel %vm1374, %v2985, 0.0
        %3008 = vadd.xlane.f32.xlu0 %v3007
        %v3009 = vpop.xlane.xlu0 %3008
        %v3010 = vrcp.pop %v2988
        %v3011 = vrcp.pop %v2991
        %v3012 = vrcp.pop %v2994
        %v3013 = vrcp.pop %v2997
        %v3014 = vrcp.pop %v3000
        %v3015 = vrcp.pop %v3003
        %v3016 = vrcp.pop %v3006
        %v3017 = vrcp.pop %v3009
        %v3018 = vmul.f32 %v2971, %v3010
        %v3019 = vmul.f32 %v2973, %v3011
        %v3020 = vmul.f32 %v2975, %v3012
        %v3021 = vmul.f32 %v2977, %v3013
        %v3022 = vmul.f32 %v2979, %v3014
        %v3023 = vmul.f32 %v2981, %v3015
        %v3024 = vmul.f32 %v2983, %v3016
        %v3025 = vmul.f32 %v2985, %v3017
        %v3027 = vsel %vm1374, %v3018, 0
        %v3030 = vsel %vm1374, %v3019, 0
        %3032 = vmatprep.subr.mxu0 0.0
        %3033 = vmatpush1.msra.mxu0 %v2558
        %3034 = vmatprep.subr.mxu0 0.0
        %3035 = vmatpush1.msra.mxu0 %v2559
        %3036 = vmatprep.subr.mxu0 0.0
        %3037 = vmatpush1.msra.mxu0 %v2560
        %3038 = vmatprep.subr.mxu0 0.0
        %3039 = vmatpush1.msra.mxu0 %v2561
        %3040 = vmatprep.subr.mxu0 0.0
        %3041 = vmatpush1.msra.mxu0 0.0
        %3042 = vmatprep.subr.mxu0 0.0
        %3043 = vmatpush1.msra.mxu0 0.0
        %3044 = vmatprep.subr.mxu0 0.0
        %3045 = vmatpush1.msra.mxu0 0.0
        %3046 = vmatprep.subr.mxu0 0.0
        %3047 = vmatpush1.msra.mxu0 0.0
        %3048 = vmatprep.subr.mxu0 0.0
        %3049 = vmatpush1.msra.mxu0 0.0
        %3050 = vmatprep.subr.mxu0 0.0
        %3051 = vmatpush1.msra.mxu0 0.0
        %3052 = vmatprep.subr.mxu0 0.0
        %3053 = vmatpush1.msra.mxu0 0.0
        %3054 = vmatprep.subr.mxu0 0.0
        %3055 = vmatpush1.msra.mxu0 0.0
        %3056 = vmatprep.subr.mxu0 0.0
        %3057 = vmatpush1.msra.mxu0 0.0
        %3058 = vmatprep.subr.mxu0 0.0
        %3059 = vmatpush1.msra.mxu0 0.0
        %3060 = vmatprep.subr.mxu0 0.0
        %3061 = vmatpush1.msra.mxu0 0.0
        %3062 = vmatprep.subr.mxu0 0.0
        %3063 = vmatpush1.msra.mxu0 0.0
        %3064 = vmatprep.subr.mxu0 0.0
        %3065 = vmatpush1.msra.mxu0 0.0
        %3066 = vmatprep.subr.mxu0 0.0
        %3067 = vmatpush1.msra.mxu0 0.0
        %3068 = vmatprep.subr.mxu0 0.0
        %3069 = vmatpush1.msra.mxu0 0.0
        %3070 = vmatprep.subr.mxu0 0.0
        %3071 = vmatpush1.msra.mxu0 0.0
        %3072 = vmatprep.subr.mxu0 0.0
        %3073 = vmatpush1.msra.mxu0 0.0
        %3074 = vmatprep.subr.mxu0 0.0
        %3075 = vmatpush1.msra.mxu0 0.0
        %3076 = vmatprep.subr.mxu0 0.0
        %3077 = vmatpush1.msra.mxu0 0.0
        %3078 = vmatprep.subr.mxu0 0.0
        %3079 = vmatpush1.msra.mxu0 0.0
        %3080 = vmatprep.subr.mxu0 0.0
        %3081 = vmatpush1.msra.mxu0 0.0
        %3082 = vmatprep.subr.mxu0 0.0
        %3083 = vmatpush1.msra.mxu0 0.0
        %3084 = vmatprep.subr.mxu0 0.0
        %3085 = vmatpush1.msra.mxu0 0.0
        %3086 = vmatprep.subr.mxu0 0.0
        %3087 = vmatpush1.msra.mxu0 0.0
        %3088 = vmatprep.subr.mxu0 0.0
        %3089 = vmatpush1.msra.mxu0 0.0
        %3090 = vmatprep.subr.mxu0 0.0
        %3091 = vmatpush1.msra.mxu0 0.0
        %3092 = vmatprep.subr.mxu0 0.0
        %3093 = vmatpush1.msra.mxu0 0.0
        %3094 = vmatprep.subr.mxu0 0.0
        %3095 = vmatpush1.msra.mxu0 0.0
        %3096 = vmatprep.mubr.f32.mxu0 0.0
        %3097 = vmatmul.mubr.f32.gmra.mrb[0].mxu0 %v3027
        %v3098 = vpop.f32.mrb[0].mxu0
        %v3099 = vadd.f32 0.0, %v3098
        %v3100 = vpop.f32.mrb[0].mxu0
        %3101 = vmatprep.mubr.f32.mxu0 0.0
        %3102 = vmatmul.mubr.f32.gmra.mrb[0].mxu0 %v3030
        %v3103 = vpop.f32.mrb[0].mxu0
        %v3104 = vadd.f32 0.0, %v3103
        %v3105 = vpop.f32.mrb[0].mxu0
        %3106 = vdwg.mxu0
        %v3108 = vsel %vm1374, %v3020, 0
        %v3111 = vsel %vm1374, %v3021, 0
        %3113 = vmatprep.subr.mxu0 0.0
        %3114 = vmatpush1.msra.mxu0 %v2562
        %3115 = vmatprep.subr.mxu0 0.0
        %3116 = vmatpush1.msra.mxu0 %v2563
        %3117 = vmatprep.subr.mxu0 0.0
        %3118 = vmatpush1.msra.mxu0 %v2564
        %3119 = vmatprep.subr.mxu0 0.0
        %3120 = vmatpush1.msra.mxu0 %v2565
        %3121 = vmatprep.subr.mxu0 0.0
        %3122 = vmatpush1.msra.mxu0 0.0
        %3123 = vmatprep.subr.mxu0 0.0
        %3124 = vmatpush1.msra.mxu0 0.0
        %3125 = vmatprep.subr.mxu0 0.0
        %3126 = vmatpush1.msra.mxu0 0.0
        %3127 = vmatprep.subr.mxu0 0.0
        %3128 = vmatpush1.msra.mxu0 0.0
        %3129 = vmatprep.subr.mxu0 0.0
        %3130 = vmatpush1.msra.mxu0 0.0
        %3131 = vmatprep.subr.mxu0 0.0
        %3132 = vmatpush1.msra.mxu0 0.0
        %3133 = vmatprep.subr.mxu0 0.0
        %3134 = vmatpush1.msra.mxu0 0.0
        %3135 = vmatprep.subr.mxu0 0.0
        %3136 = vmatpush1.msra.mxu0 0.0
        %3137 = vmatprep.subr.mxu0 0.0
        %3138 = vmatpush1.msra.mxu0 0.0
        %3139 = vmatprep.subr.mxu0 0.0
        %3140 = vmatpush1.msra.mxu0 0.0
        %3141 = vmatprep.subr.mxu0 0.0
        %3142 = vmatpush1.msra.mxu0 0.0
        %3143 = vmatprep.subr.mxu0 0.0
        %3144 = vmatpush1.msra.mxu0 0.0
        %3145 = vmatprep.subr.mxu0 0.0
        %3146 = vmatpush1.msra.mxu0 0.0
        %3147 = vmatprep.subr.mxu0 0.0
        %3148 = vmatpush1.msra.mxu0 0.0
        %3149 = vmatprep.subr.mxu0 0.0
        %3150 = vmatpush1.msra.mxu0 0.0
        %3151 = vmatprep.subr.mxu0 0.0
        %3152 = vmatpush1.msra.mxu0 0.0
        %3153 = vmatprep.subr.mxu0 0.0
        %3154 = vmatpush1.msra.mxu0 0.0
        %3155 = vmatprep.subr.mxu0 0.0
        %3156 = vmatpush1.msra.mxu0 0.0
        %3157 = vmatprep.subr.mxu0 0.0
        %3158 = vmatpush1.msra.mxu0 0.0
        %3159 = vmatprep.subr.mxu0 0.0
        %3160 = vmatpush1.msra.mxu0 0.0
        %3161 = vmatprep.subr.mxu0 0.0
        %3162 = vmatpush1.msra.mxu0 0.0
        %3163 = vmatprep.subr.mxu0 0.0
        %3164 = vmatpush1.msra.mxu0 0.0
        %3165 = vmatprep.subr.mxu0 0.0
        %3166 = vmatpush1.msra.mxu0 0.0
        %3167 = vmatprep.subr.mxu0 0.0
        %3168 = vmatpush1.msra.mxu0 0.0
        %3169 = vmatprep.subr.mxu0 0.0
        %3170 = vmatpush1.msra.mxu0 0.0
        %3171 = vmatprep.subr.mxu0 0.0
        %3172 = vmatpush1.msra.mxu0 0.0
        %3173 = vmatprep.subr.mxu0 0.0
        %3174 = vmatpush1.msra.mxu0 0.0
        %3175 = vmatprep.subr.mxu0 0.0
        %3176 = vmatpush1.msra.mxu0 0.0
        %3177 = vmatprep.mubr.f32.mxu0 0.0
        %3178 = vmatmul.mubr.f32.gmra.mrb[0].mxu0 %v3108
        %v3179 = vpop.f32.mrb[0].mxu0
        %v3180 = vadd.f32 0.0, %v3179
        %v3181 = vpop.f32.mrb[0].mxu0
        %3182 = vmatprep.mubr.f32.mxu0 0.0
        %3183 = vmatmul.mubr.f32.gmra.mrb[0].mxu0 %v3111
        %v3184 = vpop.f32.mrb[0].mxu0
        %v3185 = vadd.f32 0.0, %v3184
        %v3186 = vpop.f32.mrb[0].mxu0
        %3187 = vdwg.mxu0
        %v3189 = vsel %vm1374, %v3022, 0
        %v3192 = vsel %vm1374, %v3023, 0
        %3194 = vmatprep.subr.mxu0 0.0
        %3195 = vmatpush1.msra.mxu0 %v2566
        %3196 = vmatprep.subr.mxu0 0.0
        %3197 = vmatpush1.msra.mxu0 %v2567
        %3198 = vmatprep.subr.mxu0 0.0
        %3199 = vmatpush1.msra.mxu0 %v2568
        %3200 = vmatprep.subr.mxu0 0.0
        %3201 = vmatpush1.msra.mxu0 %v2569
        %3202 = vmatprep.subr.mxu0 0.0
        %3203 = vmatpush1.msra.mxu0 0.0
        %3204 = vmatprep.subr.mxu0 0.0
        %3205 = vmatpush1.msra.mxu0 0.0
        %3206 = vmatprep.subr.mxu0 0.0
        %3207 = vmatpush1.msra.mxu0 0.0
        %3208 = vmatprep.subr.mxu0 0.0
        %3209 = vmatpush1.msra.mxu0 0.0
        %3210 = vmatprep.subr.mxu0 0.0
        %3211 = vmatpush1.msra.mxu0 0.0
        %3212 = vmatprep.subr.mxu0 0.0
        %3213 = vmatpush1.msra.mxu0 0.0
        %3214 = vmatprep.subr.mxu0 0.0
        %3215 = vmatpush1.msra.mxu0 0.0
        %3216 = vmatprep.subr.mxu0 0.0
        %3217 = vmatpush1.msra.mxu0 0.0
        %3218 = vmatprep.subr.mxu0 0.0
        %3219 = vmatpush1.msra.mxu0 0.0
        %3220 = vmatprep.subr.mxu0 0.0
        %3221 = vmatpush1.msra.mxu0 0.0
        %3222 = vmatprep.subr.mxu0 0.0
        %3223 = vmatpush1.msra.mxu0 0.0
        %3224 = vmatprep.subr.mxu0 0.0
        %3225 = vmatpush1.msra.mxu0 0.0
        %3226 = vmatprep.subr.mxu0 0.0
        %3227 = vmatpush1.msra.mxu0 0.0
        %3228 = vmatprep.subr.mxu0 0.0
        %3229 = vmatpush1.msra.mxu0 0.0
        %3230 = vmatprep.subr.mxu0 0.0
        %3231 = vmatpush1.msra.mxu0 0.0
        %3232 = vmatprep.subr.mxu0 0.0
        %3233 = vmatpush1.msra.mxu0 0.0
        %3234 = vmatprep.subr.mxu0 0.0
        %3235 = vmatpush1.msra.mxu0 0.0
        %3236 = vmatprep.subr.mxu0 0.0
        %3237 = vmatpush1.msra.mxu0 0.0
        %3238 = vmatprep.subr.mxu0 0.0
        %3239 = vmatpush1.msra.mxu0 0.0
        %3240 = vmatprep.subr.mxu0 0.0
        %3241 = vmatpush1.msra.mxu0 0.0
        %3242 = vmatprep.subr.mxu0 0.0
        %3243 = vmatpush1.msra.mxu0 0.0
        %3244 = vmatprep.subr.mxu0 0.0
        %3245 = vmatpush1.msra.mxu0 0.0
        %3246 = vmatprep.subr.mxu0 0.0
        %3247 = vmatpush1.msra.mxu0 0.0
        %3248 = vmatprep.subr.mxu0 0.0
        %3249 = vmatpush1.msra.mxu0 0.0
        %3250 = vmatprep.subr.mxu0 0.0
        %3251 = vmatpush1.msra.mxu0 0.0
        %3252 = vmatprep.subr.mxu0 0.0
        %3253 = vmatpush1.msra.mxu0 0.0
        %3254 = vmatprep.subr.mxu0 0.0
        %3255 = vmatpush1.msra.mxu0 0.0
        %3256 = vmatprep.subr.mxu0 0.0
        %3257 = vmatpush1.msra.mxu0 0.0
        %3258 = vmatprep.mubr.f32.mxu0 0.0
        %3259 = vmatmul.mubr.f32.gmra.mrb[0].mxu0 %v3189
        %v3260 = vpop.f32.mrb[0].mxu0
        %v3261 = vadd.f32 0.0, %v3260
        %v3262 = vpop.f32.mrb[0].mxu0
        %3263 = vmatprep.mubr.f32.mxu0 0.0
        %3264 = vmatmul.mubr.f32.gmra.mrb[0].mxu0 %v3192
        %v3265 = vpop.f32.mrb[0].mxu0
        %v3266 = vadd.f32 0.0, %v3265
        %v3267 = vpop.f32.mrb[0].mxu0
        %3268 = vdwg.mxu0
        %v3270 = vsel %vm1374, %v3024, 0
        %v3273 = vsel %vm1374, %v3025, 0
        %3275 = vmatprep.subr.mxu0 0.0
        %3276 = vmatpush1.msra.mxu0 %v2570
        %3277 = vmatprep.subr.mxu0 0.0
        %3278 = vmatpush1.msra.mxu0 %v2571
        %3279 = vmatprep.subr.mxu0 0.0
        %3280 = vmatpush1.msra.mxu0 %v2572
        %3281 = vmatprep.subr.mxu0 0.0
        %3282 = vmatpush1.msra.mxu0 %v2573
        %3283 = vmatprep.subr.mxu0 0.0
        %3284 = vmatpush1.msra.mxu0 0.0
        %3285 = vmatprep.subr.mxu0 0.0
        %3286 = vmatpush1.msra.mxu0 0.0
        %3287 = vmatprep.subr.mxu0 0.0
        %3288 = vmatpush1.msra.mxu0 0.0
        %3289 = vmatprep.subr.mxu0 0.0
        %3290 = vmatpush1.msra.mxu0 0.0
        %3291 = vmatprep.subr.mxu0 0.0
        %3292 = vmatpush1.msra.mxu0 0.0
        %3293 = vmatprep.subr.mxu0 0.0
        %3294 = vmatpush1.msra.mxu0 0.0
        %3295 = vmatprep.subr.mxu0 0.0
        %3296 = vmatpush1.msra.mxu0 0.0
        %3297 = vmatprep.subr.mxu0 0.0
        %3298 = vmatpush1.msra.mxu0 0.0
        %3299 = vmatprep.subr.mxu0 0.0
        %3300 = vmatpush1.msra.mxu0 0.0
        %3301 = vmatprep.subr.mxu0 0.0
        %3302 = vmatpush1.msra.mxu0 0.0
        %3303 = vmatprep.subr.mxu0 0.0
        %3304 = vmatpush1.msra.mxu0 0.0
        %3305 = vmatprep.subr.mxu0 0.0
        %3306 = vmatpush1.msra.mxu0 0.0
        %3307 = vmatprep.subr.mxu0 0.0
        %3308 = vmatpush1.msra.mxu0 0.0
        %3309 = vmatprep.subr.mxu0 0.0
        %3310 = vmatpush1.msra.mxu0 0.0
        %3311 = vmatprep.subr.mxu0 0.0
        %3312 = vmatpush1.msra.mxu0 0.0
        %3313 = vmatprep.subr.mxu0 0.0
        %3314 = vmatpush1.msra.mxu0 0.0
        %3315 = vmatprep.subr.mxu0 0.0
        %3316 = vmatpush1.msra.mxu0 0.0
        %3317 = vmatprep.subr.mxu0 0.0
        %3318 = vmatpush1.msra.mxu0 0.0
        %3319 = vmatprep.subr.mxu0 0.0
        %3320 = vmatpush1.msra.mxu0 0.0
        %3321 = vmatprep.subr.mxu0 0.0
        %3322 = vmatpush1.msra.mxu0 0.0
        %3323 = vmatprep.subr.mxu0 0.0
        %3324 = vmatpush1.msra.mxu0 0.0
        %3325 = vmatprep.subr.mxu0 0.0
        %3326 = vmatpush1.msra.mxu0 0.0
        %3327 = vmatprep.subr.mxu0 0.0
        %3328 = vmatpush1.msra.mxu0 0.0
        %3329 = vmatprep.subr.mxu0 0.0
        %3330 = vmatpush1.msra.mxu0 0.0
        %3331 = vmatprep.subr.mxu0 0.0
        %3332 = vmatpush1.msra.mxu0 0.0
        %3333 = vmatprep.subr.mxu0 0.0
        %3334 = vmatpush1.msra.mxu0 0.0
        %3335 = vmatprep.subr.mxu0 0.0
        %3336 = vmatpush1.msra.mxu0 0.0
        %3337 = vmatprep.subr.mxu0 0.0
        %3338 = vmatpush1.msra.mxu0 0.0
        %3339 = vmatprep.mubr.f32.mxu0 0.0
        %3340 = vmatmul.mubr.f32.gmra.mrb[0].mxu0 %v3270
        %v3341 = vpop.f32.mrb[0].mxu0
        %v3342 = vadd.f32 0.0, %v3341
        %v3343 = vpop.f32.mrb[0].mxu0
        %3344 = vmatprep.mubr.f32.mxu0 0.0
        %3345 = vmatmul.mubr.f32.gmra.mrb[0].mxu0 %v3273
        %v3346 = vpop.f32.mrb[0].mxu0
        %v3347 = vadd.f32 0.0, %v3346
        %v3348 = vpop.f32.mrb[0].mxu0
        %3349 = vdwg.mxu0
        %3352 = vrot.lane.b32.xlu0 %v3180, 8
        %v3353 = vpop.permute.xlu0 %3352
        %3354 = vrot.lane.b32.xlu0 %v3185, 8
        %v3355 = vpop.permute.xlu0 %3354
        %3360 = vrot.lane.b32.xlu0 %v3261, 16
        %v3361 = vpop.permute.xlu0 %3360
        %3362 = vrot.lane.b32.xlu0 %v3266, 16
        %v3363 = vpop.permute.xlu0 %3362
        %3368 = vrot.lane.b32.xlu0 %v3342, 24
        %v3369 = vpop.permute.xlu0 %3368
        %3370 = vrot.lane.b32.xlu0 %v3347, 24
        %v3371 = vpop.permute.xlu0 %3370
        %v3374 = vsel %vm1488, %v3099, %v3353
        %v3375 = vsel %vm1488, %v3104, %v3355
        %v3376 = vsel %vm1851, %v3374, %v3361
        %v3377 = vsel %vm1851, %v3375, %v3363
        %v3378 = vsel %vm2292, %v3376, %v3369
        %v3379 = vsel %vm2292, %v3377, %v3371
        %v3380 = vld [vmem:[#allocation18] sm:$0xff]
        %v3381 = vld [vmem:[#allocation18 + $0x8] sm:$0xff]
        %v3382 = vld [vmem:[#allocation18 + $0x10] sm:$0xff]
        %v3383 = vld [vmem:[#allocation18 + $0x18] sm:$0xff]
        %v3384 = vld [vmem:[#allocation20] sm:$0x1]
        %v3386 = vlaneseq
        %v3387 = vshrl.u32 %v3386, 7
        %v3388 = vsub.s32 0, %v3387
        %v3389 = vrot.slane %v3384, %v3388
        %v3392 = vsel %vm1374, %v3378, 0
        %v3395 = vsel %vm1374, %v3379, 0
        %3397 = vmatprep.subr.mxu0 0.0
        %3398 = vmatpush1.msra.mxu0 %v3380
        %3399 = vmatprep.subr.mxu0 0.0
        %3400 = vmatpush1.msra.mxu0 %v3381
        %3401 = vmatprep.subr.mxu0 0.0
        %3402 = vmatpush1.msra.mxu0 %v3382
        %3403 = vmatprep.subr.mxu0 0.0
        %3404 = vmatpush1.msra.mxu0 %v3383
        %3405 = vmatprep.subr.mxu0 0.0
        %3406 = vmatpush1.msra.mxu0 0.0
        %3407 = vmatprep.subr.mxu0 0.0
        %3408 = vmatpush1.msra.mxu0 0.0
        %3409 = vmatprep.subr.mxu0 0.0
        %3410 = vmatpush1.msra.mxu0 0.0
        %3411 = vmatprep.subr.mxu0 0.0
        %3412 = vmatpush1.msra.mxu0 0.0
        %3413 = vmatprep.subr.mxu0 0.0
        %3414 = vmatpush1.msra.mxu0 0.0
        %3415 = vmatprep.subr.mxu0 0.0
        %3416 = vmatpush1.msra.mxu0 0.0
        %3417 = vmatprep.subr.mxu0 0.0
        %3418 = vmatpush1.msra.mxu0 0.0
        %3419 = vmatprep.subr.mxu0 0.0
        %3420 = vmatpush1.msra.mxu0 0.0
        %3421 = vmatprep.subr.mxu0 0.0
        %3422 = vmatpush1.msra.mxu0 0.0
        %3423 = vmatprep.subr.mxu0 0.0
        %3424 = vmatpush1.msra.mxu0 0.0
        %3425 = vmatprep.subr.mxu0 0.0
        %3426 = vmatpush1.msra.mxu0 0.0
        %3427 = vmatprep.subr.mxu0 0.0
        %3428 = vmatpush1.msra.mxu0 0.0
        %3429 = vmatprep.subr.mxu0 0.0
        %3430 = vmatpush1.msra.mxu0 0.0
        %3431 = vmatprep.subr.mxu0 0.0
        %3432 = vmatpush1.msra.mxu0 0.0
        %3433 = vmatprep.subr.mxu0 0.0
        %3434 = vmatpush1.msra.mxu0 0.0
        %3435 = vmatprep.subr.mxu0 0.0
        %3436 = vmatpush1.msra.mxu0 0.0
        %3437 = vmatprep.subr.mxu0 0.0
        %3438 = vmatpush1.msra.mxu0 0.0
        %3439 = vmatprep.subr.mxu0 0.0
        %3440 = vmatpush1.msra.mxu0 0.0
        %3441 = vmatprep.subr.mxu0 0.0
        %3442 = vmatpush1.msra.mxu0 0.0
        %3443 = vmatprep.subr.mxu0 0.0
        %3444 = vmatpush1.msra.mxu0 0.0
        %3445 = vmatprep.subr.mxu0 0.0
        %3446 = vmatpush1.msra.mxu0 0.0
        %3447 = vmatprep.subr.mxu0 0.0
        %3448 = vmatpush1.msra.mxu0 0.0
        %3449 = vmatprep.subr.mxu0 0.0
        %3450 = vmatpush1.msra.mxu0 0.0
        %3451 = vmatprep.subr.mxu0 0.0
        %3452 = vmatpush1.msra.mxu0 0.0
        %3453 = vmatprep.subr.mxu0 0.0
        %3454 = vmatpush1.msra.mxu0 0.0
        %3455 = vmatprep.subr.mxu0 0.0
        %3456 = vmatpush1.msra.mxu0 0.0
        %3457 = vmatprep.subr.mxu0 0.0
        %3458 = vmatpush1.msra.mxu0 0.0
        %3459 = vmatprep.subr.mxu0 0.0
        %3460 = vmatpush1.msra.mxu0 0.0
        %3461 = vmatprep.mubr.f32.mxu0 0.0
        %3462 = vmatmul.mubr.f32.gmra.mrb[0].mxu0 %v3392
        %v3463 = vpop.f32.mrb[0].mxu0
        %v3464 = vadd.f32 %v3389, %v3463
        %v3465 = vpop.f32.mrb[0].mxu0
        %3466 = vmatprep.mubr.f32.mxu0 0.0
        %3467 = vmatmul.mubr.f32.gmra.mrb[0].mxu0 %v3395
        %v3468 = vpop.f32.mrb[0].mxu0
        %v3469 = vadd.f32 %v3389, %v3468
        %v3470 = vpop.f32.mrb[0].mxu0
        %3471 = vdwg.mxu0
        %v3472 = vadd.f32 %v2432, %v3464
        %v3473 = vadd.f32 %v2433, %v3469
        %v3474 = vsel %vm1374, %v3472, 0.0
        %3475 = vadd.xlane.f32.xlu0 %v3474
        %v3476 = vpop.xlane.xlu0 %3475
        %v3477 = vsel %vm1374, %v3473, 0.0
        %3478 = vadd.xlane.f32.xlu0 %v3477
        %v3479 = vpop.xlane.xlu0 %3478
        %v3480 = vmul.f32 %v3476, %v2395
        %v3481 = vmul.f32 %v3479, %v2395
        %v3482 = vsub.f32 %v3472, %v3480
        %v3483 = vsub.f32 %v3473, %v3481
        %v3484 = vmul.f32 %v3482, %v3482
        %v3485 = vmul.f32 %v3483, %v3483
        %v3486 = vsel %vm1374, %v3484, 0.0
        %3487 = vadd.xlane.f32.xlu0 %v3486
        %v3488 = vpop.xlane.xlu0 %3487
        %v3489 = vsel %vm1374, %v3485, 0.0
        %3490 = vadd.xlane.f32.xlu0 %v3489
        %v3491 = vpop.xlane.xlu0 %3490
        %v3492 = vmul.f32 %v3488, %v2395
        %v3493 = vmul.f32 %v3491, %v2395
        %v3494 = vadd.f32 %v3492, 1e-05
        %v3495 = vadd.f32 %v3493, 1e-05
        %v3496 = vrsqrt.pop %v3494
        %v3497 = vrsqrt.pop %v3495
        %v3498 = vmul.f32 %v3482, %v3496
        %v3499 = vmul.f32 %v3483, %v3497
        %v3500 = vld [vmem:[#allocation24] sm:$0x1]
        %v3502 = vlaneseq
        %v3503 = vshrl.u32 %v3502, 7
        %v3504 = vsub.s32 0, %v3503
        %v3505 = vrot.slane %v3500, %v3504
        %v3507 = vmul.f32 %v3498, %v3505
        %v3508 = vmul.f32 %v3499, %v3505
        %v3509 = vld [vmem:[#allocation26] sm:$0x1]
        %v3511 = vlaneseq
        %v3512 = vshrl.u32 %v3511, 7
        %v3513 = vsub.s32 0, %v3512
        %v3514 = vrot.slane %v3509, %v3513
        %v3516 = vadd.f32 %v3507, %v3514
        %v3517 = vadd.f32 %v3508, %v3514
        %v3518 = vld [vmem:[%s23] sm:$0x1]
        %v3520 = vlaneseq
        %v3521 = vshrl.u32 %v3520, 7
        %v3522 = vsub.s32 0, %v3521
        %v3523 = vrot.slane %v3518, %v3522
        %v3525 = vadd.f32 %v3523, 0.0
        %v3526 = vld [vmem:[#allocation27] sm:$0xff]
        %v3527 = vld [vmem:[#allocation27 + $0x8] sm:$0xff]
        %v3528 = vld [vmem:[#allocation27 + $0x10] sm:$0xff]
        %v3529 = vld [vmem:[#allocation27 + $0x18] sm:$0xff]
        %v3530 = vld [vmem:[%s21] sm:$0x1]
        %v3532 = vlaneseq
        %v3533 = vshrl.u32 %v3532, 7
        %v3534 = vsub.s32 0, %v3533
        %v3535 = vrot.slane %v3530, %v3534
        %v3538 = vsel %vm1374, %v3516, 0
        %v3541 = vsel %vm1374, %v3517, 0
        %3543 = vmatprep.subr.mxu0 0.0
        %3544 = vmatpush1.msra.mxu0 %v3526
        %3545 = vmatprep.subr.mxu0 0.0
        %3546 = vmatpush1.msra.mxu0 %v3527
        %3547 = vmatprep.subr.mxu0 0.0
        %3548 = vmatpush1.msra.mxu0 %v3528
        %3549 = vmatprep.subr.mxu0 0.0
        %3550 = vmatpush1.msra.mxu0 %v3529
        %3551 = vmatprep.subr.mxu0 0.0
        %3552 = vmatpush1.msra.mxu0 0.0
        %3553 = vmatprep.subr.mxu0 0.0
        %3554 = vmatpush1.msra.mxu0 0.0
        %3555 = vmatprep.subr.mxu0 0.0
        %3556 = vmatpush1.msra.mxu0 0.0
        %3557 = vmatprep.subr.mxu0 0.0
        %3558 = vmatpush1.msra.mxu0 0.0
        %3559 = vmatprep.subr.mxu0 0.0
        %3560 = vmatpush1.msra.mxu0 0.0
        %3561 = vmatprep.subr.mxu0 0.0
        %3562 = vmatpush1.msra.mxu0 0.0
        %3563 = vmatprep.subr.mxu0 0.0
        %3564 = vmatpush1.msra.mxu0 0.0
        %3565 = vmatprep.subr.mxu0 0.0
        %3566 = vmatpush1.msra.mxu0 0.0
        %3567 = vmatprep.subr.mxu0 0.0
        %3568 = vmatpush1.msra.mxu0 0.0
        %3569 = vmatprep.subr.mxu0 0.0
        %3570 = vmatpush1.msra.mxu0 0.0
        %3571 = vmatprep.subr.mxu0 0.0
        %3572 = vmatpush1.msra.mxu0 0.0
        %3573 = vmatprep.subr.mxu0 0.0
        %3574 = vmatpush1.msra.mxu0 0.0
        %3575 = vmatprep.subr.mxu0 0.0
        %3576 = vmatpush1.msra.mxu0 0.0
        %3577 = vmatprep.subr.mxu0 0.0
        %3578 = vmatpush1.msra.mxu0 0.0
        %3579 = vmatprep.subr.mxu0 0.0
        %3580 = vmatpush1.msra.mxu0 0.0
        %3581 = vmatprep.subr.mxu0 0.0
        %3582 = vmatpush1.msra.mxu0 0.0
        %3583 = vmatprep.subr.mxu0 0.0
        %3584 = vmatpush1.msra.mxu0 0.0
        %3585 = vmatprep.subr.mxu0 0.0
        %3586 = vmatpush1.msra.mxu0 0.0
        %3587 = vmatprep.subr.mxu0 0.0
        %3588 = vmatpush1.msra.mxu0 0.0
        %3589 = vmatprep.subr.mxu0 0.0
        %3590 = vmatpush1.msra.mxu0 0.0
        %3591 = vmatprep.subr.mxu0 0.0
        %3592 = vmatpush1.msra.mxu0 0.0
        %3593 = vmatprep.subr.mxu0 0.0
        %3594 = vmatpush1.msra.mxu0 0.0
        %3595 = vmatprep.subr.mxu0 0.0
        %3596 = vmatpush1.msra.mxu0 0.0
        %3597 = vmatprep.subr.mxu0 0.0
        %3598 = vmatpush1.msra.mxu0 0.0
        %3599 = vmatprep.subr.mxu0 0.0
        %3600 = vmatpush1.msra.mxu0 0.0
        %3601 = vmatprep.subr.mxu0 0.0
        %3602 = vmatpush1.msra.mxu0 0.0
        %3603 = vmatprep.subr.mxu0 0.0
        %3604 = vmatpush1.msra.mxu0 0.0
        %3605 = vmatprep.subr.mxu0 0.0
        %3606 = vmatpush1.msra.mxu0 0.0
        %3607 = vmatprep.mubr.f32.mxu0 0.0
        %3608 = vmatmul.mubr.f32.gmra.mrb[0].mxu0 %v3538
        %v3609 = vpop.f32.mrb[0].mxu0
        %v3610 = vadd.f32 %v3535, %v3609
        %v3611 = vpop.f32.mrb[0].mxu0
        %3612 = vmatprep.mubr.f32.mxu0 0.0
        %3613 = vmatmul.mubr.f32.gmra.mrb[0].mxu0 %v3541
        %v3614 = vpop.f32.mrb[0].mxu0
        %v3615 = vadd.f32 %v3535, %v3614
        %v3616 = vpop.f32.mrb[0].mxu0
        %3617 = vdwg.mxu0
        %v3618 = vmax.f32 %v3610, 0.0
        %v3619 = vmax.f32 %v3615, 0.0
        %v3620 = vld [vmem:[%s22] sm:$0xff]
        %v3621 = vld [vmem:[%s22 + $0x8] sm:$0xff]
        %v3622 = vld [vmem:[%s22 + $0x10] sm:$0xff]
        %v3623 = vld [vmem:[%s22 + $0x18] sm:$0xff]
        %v3624 = vld [vmem:[%s22 + $0x20] sm:$0xff]
        %v3625 = vld [vmem:[%s22 + $0x28] sm:$0xff]
        %v3626 = vld [vmem:[%s22 + $0x30] sm:$0xff]
        %v3627 = vld [vmem:[%s22 + $0x38] sm:$0xff]
        %v3628 = vld [vmem:[%s22 + $0x40] sm:$0xff]
        %v3629 = vld [vmem:[%s22 + $0x48] sm:$0xff]
        %v3630 = vld [vmem:[%s22 + $0x50] sm:$0xff]
        %v3631 = vld [vmem:[%s22 + $0x58] sm:$0xff]
        %v3632 = vld [vmem:[%s22 + $0x60] sm:$0xff]
        %v3633 = vld [vmem:[%s22 + $0x68] sm:$0xff]
        %v3634 = vld [vmem:[%s22 + $0x70] sm:$0xff]
        %v3635 = vld [vmem:[%s22 + $0x78] sm:$0xff]
        %3636 = vmatprep.subr.mxu0 0.0
        %3637 = vmatpush1.msra.mxu0 %v3620
        %3638 = vmatprep.subr.mxu0 0.0
        %3639 = vmatpush1.msra.mxu0 %v3621
        %3640 = vmatprep.subr.mxu0 0.0
        %3641 = vmatpush1.msra.mxu0 %v3622
        %3642 = vmatprep.subr.mxu0 0.0
        %3643 = vmatpush1.msra.mxu0 %v3623
        %3644 = vmatprep.subr.mxu0 0.0
        %3645 = vmatpush1.msra.mxu0 %v3624
        %3646 = vmatprep.subr.mxu0 0.0
        %3647 = vmatpush1.msra.mxu0 %v3625
        %3648 = vmatprep.subr.mxu0 0.0
        %3649 = vmatpush1.msra.mxu0 %v3626
        %3650 = vmatprep.subr.mxu0 0.0
        %3651 = vmatpush1.msra.mxu0 %v3627
        %3652 = vmatprep.subr.mxu0 0.0
        %3653 = vmatpush1.msra.mxu0 %v3628
        %3654 = vmatprep.subr.mxu0 0.0
        %3655 = vmatpush1.msra.mxu0 %v3629
        %3656 = vmatprep.subr.mxu0 0.0
        %3657 = vmatpush1.msra.mxu0 %v3630
        %3658 = vmatprep.subr.mxu0 0.0
        %3659 = vmatpush1.msra.mxu0 %v3631
        %3660 = vmatprep.subr.mxu0 0.0
        %3661 = vmatpush1.msra.mxu0 %v3632
        %3662 = vmatprep.subr.mxu0 0.0
        %3663 = vmatpush1.msra.mxu0 %v3633
        %3664 = vmatprep.subr.mxu0 0.0
        %3665 = vmatpush1.msra.mxu0 %v3634
        %3666 = vmatprep.subr.mxu0 0.0
        %3667 = vmatpush1.msra.mxu0 %v3635
        %3668 = vmatprep.subr.mxu0 0.0
        %3669 = vmatpush1.msra.mxu0 0.0
        %3670 = vmatprep.subr.mxu0 0.0
        %3671 = vmatpush1.msra.mxu0 0.0
        %3672 = vmatprep.subr.mxu0 0.0
        %3673 = vmatpush1.msra.mxu0 0.0
        %3674 = vmatprep.subr.mxu0 0.0
        %3675 = vmatpush1.msra.mxu0 0.0
        %3676 = vmatprep.subr.mxu0 0.0
        %3677 = vmatpush1.msra.mxu0 0.0
        %3678 = vmatprep.subr.mxu0 0.0
        %3679 = vmatpush1.msra.mxu0 0.0
        %3680 = vmatprep.subr.mxu0 0.0
        %3681 = vmatpush1.msra.mxu0 0.0
        %3682 = vmatprep.subr.mxu0 0.0
        %3683 = vmatpush1.msra.mxu0 0.0
        %3684 = vmatprep.subr.mxu0 0.0
        %3685 = vmatpush1.msra.mxu0 0.0
        %3686 = vmatprep.subr.mxu0 0.0
        %3687 = vmatpush1.msra.mxu0 0.0
        %3688 = vmatprep.subr.mxu0 0.0
        %3689 = vmatpush1.msra.mxu0 0.0
        %3690 = vmatprep.subr.mxu0 0.0
        %3691 = vmatpush1.msra.mxu0 0.0
        %3692 = vmatprep.subr.mxu0 0.0
        %3693 = vmatpush1.msra.mxu0 0.0
        %3694 = vmatprep.subr.mxu0 0.0
        %3695 = vmatpush1.msra.mxu0 0.0
        %3696 = vmatprep.subr.mxu0 0.0
        %3697 = vmatpush1.msra.mxu0 0.0
        %3698 = vmatprep.subr.mxu0 0.0
        %3699 = vmatpush1.msra.mxu0 0.0
        %3700 = vmatprep.mubr.f32.mxu0 0.0
        %3701 = vmatmul.mubr.f32.gmra.mrb[0].mxu0 %v3618
        %v3702 = vpop.f32.mrb[0].mxu0
        %v3703 = vadd.f32 0.0, %v3702
        %v3704 = vpop.f32.mrb[0].mxu0
        %3705 = vmatprep.mubr.f32.mxu0 0.0
        %3706 = vmatmul.mubr.f32.gmra.mrb[0].mxu0 %v3619
        %v3707 = vpop.f32.mrb[0].mxu0
        %v3708 = vadd.f32 0.0, %v3707
        %v3709 = vpop.f32.mrb[0].mxu0
        %3710 = vdwg.mxu0
        %v3711 = vadd.f32 %v3525, %v3703
        %v3712 = vadd.f32 %v3525, %v3708
        %v3713 = vadd.f32 %v3516, %v3711
        %v3714 = vadd.f32 %v3517, %v3712
        %v3715 = vsel %vm1374, %v3713, 0.0
        %3716 = vadd.xlane.f32.xlu0 %v3715
        %v3717 = vpop.xlane.xlu0 %3716
        %v3718 = vsel %vm1374, %v3714, 0.0
        %3719 = vadd.xlane.f32.xlu0 %v3718
        %v3720 = vpop.xlane.xlu0 %3719
        %v3721 = vmul.f32 %v3717, %v2395
        %v3722 = vmul.f32 %v3720, %v2395
        %v3723 = vsub.f32 %v3713, %v3721
        %v3724 = vsub.f32 %v3714, %v3722
        %v3725 = vmul.f32 %v3723, %v3723
        %v3726 = vmul.f32 %v3724, %v3724
        %v3727 = vsel %vm1374, %v3725, 0.0
        %3728 = vadd.xlane.f32.xlu0 %v3727
        %v3729 = vpop.xlane.xlu0 %3728
        %v3730 = vsel %vm1374, %v3726, 0.0
        %3731 = vadd.xlane.f32.xlu0 %v3730
        %v3732 = vpop.xlane.xlu0 %3731
        %v3733 = vmul.f32 %v3729, %v2395
        %v3734 = vmul.f32 %v3732, %v2395
        %v3735 = vadd.f32 %v3733, 1e-05
        %v3736 = vadd.f32 %v3734, 1e-05
        %v3737 = vrsqrt.pop %v3735
        %v3738 = vrsqrt.pop %v3736
        %v3739 = vmul.f32 %v3723, %v3737
        %v3740 = vmul.f32 %v3724, %v3738
        %v3741 = vld [vmem:[%s18] sm:$0x1]
        %v3743 = vlaneseq
        %v3744 = vshrl.u32 %v3743, 7
        %v3745 = vsub.s32 0, %v3744
        %v3746 = vrot.slane %v3741, %v3745
        %v3748 = vmul.f32 %v3739, %v3746
        %v3749 = vmul.f32 %v3740, %v3746
        %v3750 = vld [vmem:[%s19] sm:$0x1]
        %v3752 = vlaneseq
        %v3753 = vshrl.u32 %v3752, 7
        %v3754 = vsub.s32 0, %v3753
        %v3755 = vrot.slane %v3750, %v3754
        %v3757 = vadd.f32 %v3748, %v3755
        %v3758 = vadd.f32 %v3749, %v3755
        %3759 = vst.msk [vmem:[%s943] sm:$0xff] %vm1374, %v3757
        %3760 = vst.msk [vmem:[%s943 + $0x8] sm:$0xff] %vm1374, %v3758
        %s3761 = sand.u32 %s582, 1
        %s3762 = scalar_lea.sflag [#allocation8], %s3761
        %s3763 = sand.u32 %s582, 1
        %s3764 = smul.addr %s3763, 16
        %s3765 = scalar_lea.vmem [#allocation29], %s3764
        // Predicated region
        $region177: #{tpu_custom_call.1} parent=115 // pred_check
          %p3766 = pneg %p592
        $region178: #{tpu_custom_call.1} parent=115 // pred_check_branch
          %3768 = sbr.rel (%p3766) target = $region180
        $region179: #{tpu_custom_call.1} parent=115 // pred_region
          %s3769 = smul.u32 2, %s51
          %s3771 = ssub.s32 256, 256
          %3772 = vsyncadd %s3762, %s3771
          %s3773 = smul.addr %s50, 2
          %s3774 = sadd.s32 %s3769, %s3773
          %s3775 = smul.addr %s3774, 128
          %s3776 = scalar_lea.hbm %s24, %s3775
          %s3777 = sshll.u32 %s3765, 4
          %s3778 = int_to_ptr.vmem [resolvable:$true] %s3777
          %3783 = dma.vmem_to_hbm [thread:$0]  %s3778, 256, %s3776, %s3762, 128, 128, 8
        $region180: #{tpu_custom_call.1} parent=115 // pred_fallthru
          _
      $region116: #{tpu_custom_call.1} parent=5 // pred_fallthru
        _
      %p3784 = scmp.le.s32.totalorder 2, %s41
      // Predicated region
      $region181: #{tpu_custom_call.1} parent=5 // pred_check
        %p3785 = pneg %p3784
      $region182: #{tpu_custom_call.1} parent=5 // pred_check_branch
        %3787 = sbr.rel (%p3785) target = $region184
      $region183: #{tpu_custom_call.1} parent=5 // pred_region
        %s3788 = ssub.s32 %s41, 2
        // Predicated region
        $region185: #{tpu_custom_call.1} parent=183 // pred_check
          %p3789 = pneg %p598
        $region186: #{tpu_custom_call.1} parent=183 // pred_check_branch
          %3791 = sbr.rel (%p3789) target = $region188
        $region187: #{tpu_custom_call.1} parent=183 // pred_region
          %s3792 = sand.u32 %s583, 1
          %s3793 = scalar_lea.sflag [#allocation8], %s3792
          %s3794 = sand.u32 %s583, 1
          %s3795 = smul.addr %s3794, 16
          %s3796 = scalar_lea.vmem [#allocation29], %s3795
          %3797 = dma.done %s3793, 256
        $region188: #{tpu_custom_call.1} parent=183 // pred_fallthru
          _
      $region184: #{tpu_custom_call.1} parent=5 // pred_fallthru
        _
    $region6: #{tpu_custom_call.1} parent=1 // loop_footer
      %s45 = sadd.s32 1, %s41
    $region7: #{tpu_custom_call.1} parent=1 // loop_footer_branch
      %40 = sbr.rel target = $region3
    $region8: #{tpu_custom_call.1} parent=1 // loop_exit
      _
    %3798 = vsyncpa [#allocation7], 1
    %s3799 = scalar_lea.sflag [#allocation7], 1
    %3800 = vsyncpa %s3799, 1
    %3801 = vsyncpa [#allocation10], 1
    %3802 = vsyncpa [#allocation13], 1
    %3803 = vsyncpa [#allocation16], 1
    %3804 = vsyncpa [#allocation19], 1
    %3805 = vsyncpa [#allocation22], 1
    %3806 = vsyncpa [#allocation25], 1
    %3807 = vsyncpa [#allocation28], 1
    %3808 = vsyncpa [#allocation8], 1
    %s3809 = scalar_lea.sflag [#allocation8], 1
    %3810 = vsyncpa %s3809, 1

</llo_original>
